<compile_context>
chip_gen: v7x
topology: tpu7x:2x2x1
jax: 0.10.0
libtpu: 0.0.40
codegen_flags: <defaults>
</compile_context>

<pallas_src>
import functools
import math

import jax
import jax.numpy as jnp
import numpy as np
from jax.experimental import pallas as pl
from jax.experimental.pallas import tpu as pltpu

_LN_EPS = 1e-6


# ----------------------------- hardware-aware config ------------------------------

@functools.lru_cache(maxsize=1)
def _vmem_limit_bytes():
    # ~75% of physical VMEM: 96 MiB on v5e/v6e (128 MiB), 48 MiB on v7x (64 MiB).
    try:
        cap = int(pltpu.get_tpu_info().vmem_capacity_bytes)
    except Exception:  # pragma: no cover - conservative fallback
        cap = 128 * 1024 * 1024
    return max(32 * 1024 * 1024, (cap * 3) // 4)


def _mosaic_params(dimension_semantics):
    return pltpu.CompilerParams(
        dimension_semantics=dimension_semantics,
        vmem_limit_bytes=_vmem_limit_bytes())


def choose_tile_m(m, cap=1024):
    """Largest multiple-of-8 divisor of m <= cap, preferring multiples of 256
    (keeps the 256-wide MXU of v6e/v7x full).  Falls back to m itself."""
    best, best256 = None, None
    t = 8
    while t <= min(cap, m):
        if m % t == 0:
            best = t
            if t % 256 == 0:
                best256 = t
        t += 8
    if best256 is not None:
        return best256
    return best if best is not None else m


def choose_ffn_tile(m, d_ff):
    """Row tile for the FFN kernel: keep the [tile, d_ff] f32 ReLU intermediate
    around ~2 MiB so it does not spill and steal vld/vst slots from the MXU."""
    cap = max(64, min(512, (2 * 1024 * 1024) // (4 * max(d_ff, 1))))
    cap = max(8, (cap // 8) * 8)
    return choose_tile_m(m, cap=cap)


# ----------------------------- in-kernel helpers ------------------------------

def _layernorm_f32(x, g, b, *, exact=False):
    """Annotated-Transformer LayerNorm: a_2*(x-mean)/(std+eps)+b_2, unbiased std."""
    d = x.shape[-1]
    mean = jnp.mean(x, axis=-1, keepdims=True)
    var_unbiased = jnp.sum((x - mean) ** 2, axis=-1, keepdims=True) * (1.0 / (d - 1))
    denom = jnp.sqrt(var_unbiased) + _LN_EPS
    if exact:
        return g * (x - mean) / denom + b
    return g * (x - mean) * pl.reciprocal(denom, approx=True) + b


# ----------------------------- attention kernel ------------------------------
# Fused: LN1 + QKV projection + multi-head attention + Wo + residual, per batch,
# tiled over query rows.  1/sqrt(d_k) is pre-folded into wq/bq; mask is additive.

def _attn_kernel(x_ref, bias_ref, g1_ref, b1_ref, wq_ref, bq_ref,
                 wkv_ref, bkv_ref, wo_ref, bo_ref, o_ref,
                 kv_ref, attn_ref, *, n_heads, tile_q):
    d_model = x_ref.shape[-1]
    d_k = d_model // n_heads
    qi = pl.program_id(1)

    # K/V for the whole sequence: computed once per batch, cached in bf16 VMEM.
    @pl.when(qi == 0)
    def _():
        xn = _layernorm_f32(x_ref[...], g1_ref[...], b1_ref[...])
        kv = jnp.dot(xn.astype(jnp.bfloat16), wkv_ref[...],
                     preferred_element_type=jnp.float32) + bkv_ref[...]
        kv_ref[...] = kv.astype(jnp.bfloat16)

    # Q for this query tile only (scale folded into wq/bq at prep time).
    row0 = pl.multiple_of(qi * tile_q, tile_q)
    x_q = x_ref[pl.ds(row0, tile_q), :]                      # [tq, D] residual rows
    xn_q = _layernorm_f32(x_q, g1_ref[...], b1_ref[...])
    q = (jnp.dot(xn_q.astype(jnp.bfloat16), wq_ref[...],
                 preferred_element_type=jnp.float32) + bq_ref[...]).astype(jnp.bfloat16)

    bias = bias_ref[...]                                     # [1, S] additive mask bias

    # Per-head attention; head outputs land in the VMEM slab (no concat, bounded live set).
    for h in range(n_heads):                                 # static unroll
        sl = slice(h * d_k, (h + 1) * d_k)
        k_h = kv_ref[:, sl]                                  # [S, d_k] bf16
        v_h = kv_ref[:, d_model + h * d_k:d_model + (h + 1) * d_k]
        s = jax.lax.dot_general(                             # q @ k.T, no explicit transpose
            q[:, sl], k_h,
            dimension_numbers=(((1,), (1,)), ((), ())),
            preferred_element_type=jnp.float32) + bias
        s = s - jnp.max(s, axis=-1, keepdims=True)
        p = jnp.exp(s)
        p = p * pl.reciprocal(jnp.sum(p, axis=-1, keepdims=True), approx=True)
        attn_ref[:, sl] = jnp.dot(p.astype(jnp.bfloat16), v_h,
                                  preferred_element_type=jnp.float32)

    proj = jnp.dot(attn_ref[...].astype(jnp.bfloat16), wo_ref[...],
                   preferred_element_type=jnp.float32) + bo_ref[...]
    o_ref[...] = x_q + proj                                  # residual fused


def _resident_spec(arr):
    # Weight / bias / LN-param blocks stay resident in VMEM (constant index_map);
    # Pallas skips re-DMA when the block index does not change across the grid.
    return pl.BlockSpec(arr.shape, lambda *_: (0,) * arr.ndim)


def attention_block(x3, mask_bias, lp, *, n_heads, tile_q):
    bsz, seq, d_model = x3.shape
    kern = functools.partial(_attn_kernel, n_heads=n_heads, tile_q=tile_q)
    return pl.pallas_call(
        kern,
        out_shape=jax.ShapeDtypeStruct((bsz, seq, d_model), jnp.float32),
        grid=(bsz, seq // tile_q),
        in_specs=[
            pl.BlockSpec((None, seq, d_model), lambda b, qi: (b, 0, 0)),   # residual x
            pl.BlockSpec((None, 1, seq), lambda b, qi: (b, 0, 0)),         # additive mask bias
            _resident_spec(lp["ln1_g"]), _resident_spec(lp["ln1_b"]),
            _resident_spec(lp["wq"]), _resident_spec(lp["bq"]),
            _resident_spec(lp["wkv"]), _resident_spec(lp["bkv"]),
            _resident_spec(lp["wo"]), _resident_spec(lp["bo"]),
        ],
        out_specs=pl.BlockSpec((None, tile_q, d_model), lambda b, qi: (b, qi, 0)),
        scratch_shapes=[
            pltpu.VMEM((seq, 2 * d_model), jnp.bfloat16),    # cached K|V (per batch)
            pltpu.VMEM((tile_q, d_model), jnp.float32),      # per-tile head-output slab
        ],
        compiler_params=_mosaic_params(("parallel", "arbitrary")),
    )(x3, mask_bias, lp["ln1_g"], lp["ln1_b"], lp["wq"], lp["bq"],
      lp["wkv"], lp["bkv"], lp["wo"], lp["bo"])


# ----------------------------- FFN kernels ------------------------------

def _ffn_body(x, g_ref, b_ref, w1_ref, b1_ref, w2_ref, b2_ref):
    xn = _layernorm_f32(x, g_ref[...], b_ref[...])
    h = jnp.dot(xn.astype(jnp.bfloat16), w1_ref[...],
                preferred_element_type=jnp.float32) + b1_ref[...]
    h = jnp.maximum(h, 0.0)
    return jnp.dot(h.astype(jnp.bfloat16), w2_ref[...],
                   preferred_element_type=jnp.float32) + b2_ref[...]


def _ln_ffn_kernel(x_ref, g_ref, b_ref, w1_ref, b1_ref, w2_ref, b2_ref, o_ref):
    x = x_ref[...]
    o_ref[...] = x + _ffn_body(x, g_ref, b_ref, w1_ref, b1_ref, w2_ref, b2_ref)


def _ln_ffn_final_kernel(x_ref, g_ref, b_ref, w1_ref, b1_ref, w2_ref, b2_ref,
                         gf_ref, bf_ref, o_ref):
    # Last layer: fuse the Encoder's final LayerNorm (exact reciprocal for parity).
    x = x_ref[...]
    y = x + _ffn_body(x, g_ref, b_ref, w1_ref, b1_ref, w2_ref, b2_ref)
    o_ref[...] = _layernorm_f32(y, gf_ref[...], bf_ref[...], exact=True)


def ln_ffn(x2, lp, *, tile_m, final_g=None, final_b=None):
    m, d = x2.shape
    row = pl.BlockSpec((tile_m, d), lambda i: (i, 0))
    args = [x2, lp["ln2_g"], lp["ln2_b"], lp["w1"], lp["b1"], lp["w2"], lp["b2"]]
    in_specs = [row] + [_resident_spec(a) for a in args[1:]]
    if final_g is None:
        kern = _ln_ffn_kernel
    else:
        kern = _ln_ffn_final_kernel
        args += [final_g, final_b]
        in_specs += [_resident_spec(final_g), _resident_spec(final_b)]
    return pl.pallas_call(
        kern,
        out_shape=jax.ShapeDtypeStruct((m, d), jnp.float32),
        grid=(m // tile_m,),
        in_specs=in_specs,
        out_specs=row,
        compiler_params=_mosaic_params(("parallel",)),
    )(*args)


# ----------------------------- Encoder forward ------------------------------

@functools.partial(jax.jit, static_argnames=("n_heads", "tile_m_ffn", "tile_q"))
def encoder_forward(x, mask, params, *, n_heads, tile_m_ffn, tile_q):
    """x: [B, S, D], mask: [B, 1, S] float32 (1 = keep, 0 = pad)."""
    bsz, seq, d_model = x.shape
    m = bsz * seq
    mask_bias = (mask - 1.0) * 1e9          # additive bias, computed once per forward
    n_layers = len(params["layers"])
    for li, lp in enumerate(params["layers"]):
        # sublayer 0: x = x + Wo(self_attn(LN1(x)))   (one fused kernel)
        x = attention_block(x, mask_bias, lp, n_heads=n_heads, tile_q=tile_q)
        # sublayer 1: x = x + FFN(LN2(x)); last layer also applies the final LN.
        last = li == n_layers - 1
        x2 = ln_ffn(x.reshape(m, d_model), lp, tile_m=tile_m_ffn,
                    final_g=params["lnf_g"] if last else None,
                    final_b=params["lnf_b"] if last else None)
        x = x2.reshape(bsz, seq, d_model)
    return x


# ----------------------------- pure-JAX reference ------------------------------

def _ref_layernorm(x, g, b):
    d = x.shape[-1]
    mean = jnp.mean(x, axis=-1, keepdims=True)
    std = jnp.sqrt(jnp.sum((x - mean) ** 2, axis=-1, keepdims=True) / (d - 1))
    return g * (x - mean) / (std + _LN_EPS) + b


def encoder_forward_ref(x, mask, params, *, n_heads):
    bsz, seq, d_model = x.shape
    d_k = d_model // n_heads
    for lp in params["layers"]:
        xn = _ref_layernorm(x, lp["ln1_g"], lp["ln1_b"])
        q = xn @ lp["wq"] + lp["bq"]
        k = xn @ lp["wk"] + lp["bk"]
        v = xn @ lp["wv"] + lp["bv"]
        q4 = q.reshape(bsz, seq, n_heads, d_k).transpose(0, 2, 1, 3)
        k4 = k.reshape(bsz, seq, n_heads, d_k).transpose(0, 2, 1, 3)
        v4 = v.reshape(bsz, seq, n_heads, d_k).transpose(0, 2, 1, 3)
        s = jnp.einsum("bhqd,bhkd->bhqk", q4, k4) / math.sqrt(d_k)
        s = jnp.where(mask[:, None, :, :] == 0.0, -1e9, s)
        p = jax.nn.softmax(s, axis=-1)
        a = jnp.einsum("bhqk,bhkd->bhqd", p, v4)
        a = a.transpose(0, 2, 1, 3).reshape(bsz, seq, d_model)
        x = x + (a @ lp["wo"] + lp["bo"])
        xn = _ref_layernorm(x, lp["ln2_g"], lp["ln2_b"])
        h = jnp.maximum(xn @ lp["w1"] + lp["b1"], 0.0)
        x = x + (h @ lp["w2"] + lp["b2"])
    return _ref_layernorm(x, params["lnf_g"], params["lnf_b"])


# ----------------------------- parameters ------------------------------

def init_params(key, n_layers, d_model, d_ff):
    layers = []
    for _ in range(n_layers):
        keys = jax.random.split(key, 13)
        key = keys[0]

        def w(k, shape, scale=0.1):
            return jax.random.normal(k, shape, jnp.float32) * scale

        lp = {
            "wq": w(keys[1], (d_model, d_model)), "bq": w(keys[2], (1, d_model), 0.05),
            "wk": w(keys[3], (d_model, d_model)), "bk": w(keys[4], (1, d_model), 0.05),
            "wv": w(keys[5], (d_model, d_model)), "bv": w(keys[6], (1, d_model), 0.05),
            "wo": w(keys[7], (d_model, d_model)), "bo": w(keys[8], (1, d_model), 0.05),
            "w1": w(keys[9], (d_model, d_ff)),    "b1": w(keys[10], (1, d_ff), 0.05),
            "w2": w(keys[11], (d_ff, d_model)),   "b2": w(keys[12], (1, d_model), 0.05),
            "ln1_g": jnp.ones((1, d_model), jnp.float32),
            "ln1_b": jnp.zeros((1, d_model), jnp.float32),
            "ln2_g": jnp.ones((1, d_model), jnp.float32),
            "ln2_b": jnp.zeros((1, d_model), jnp.float32),
        }
        layers.append(lp)
    return {"layers": layers,
            "lnf_g": jnp.ones((1, d_model), jnp.float32),
            "lnf_b": jnp.zeros((1, d_model), jnp.float32)}


def prepare_kernel_params(params, *, n_heads):
    """Kernel-ready params: 1/sqrt(d_k) folded into Q weights/bias, fused K|V weight,
    bf16 matmul weights, f32 biases / LN parameters."""
    d_model = params["layers"][0]["wq"].shape[0]
    scale = 1.0 / math.sqrt(d_model // n_heads)
    out = {"layers": [], "lnf_g": params["lnf_g"], "lnf_b": params["lnf_b"]}
    for lp in params["layers"]:
        out["layers"].append({
            "ln1_g": lp["ln1_g"], "ln1_b": lp["ln1_b"],
            "wq": (lp["wq"] * scale).astype(jnp.bfloat16),
            "bq": lp["bq"] * scale,
            "wkv": jnp.concatenate([lp["wk"], lp["wv"]], axis=1).astype(jnp.bfloat16),
            "bkv": jnp.concatenate([lp["bk"], lp["bv"]], axis=1),
            "wo": lp["wo"].astype(jnp.bfloat16), "bo": lp["bo"],
            "ln2_g": lp["ln2_g"], "ln2_b": lp["ln2_b"],
            "w1": lp["w1"].astype(jnp.bfloat16), "b1": lp["b1"],
            "w2": lp["w2"].astype(jnp.bfloat16), "b2": lp["b2"],
        })
    return out


# ----------------------------- main ------------------------------

if __name__ == "__main__":
    B, S, D, H, D_FF, N_LAYERS = 2, 8, 32, 4, 64, 2

    key = jax.random.PRNGKey(0)
    kx, kp = jax.random.split(key)
    x = jax.random.normal(kx, (B, S, D), jnp.float32)

    # mask [B, 1, S]: sequence 0 fully valid, sequence 1 has 2 padded positions
    lens = jnp.array([8, 6])
    mask = (jnp.arange(S)[None, :] < lens[:, None]).astype(jnp.float32)[:, None, :]

    params = init_params(kp, N_LAYERS, D, D_FF)
    kparams = prepare_kernel_params(params, n_heads=H)

    tile_q = choose_tile_m(S, cap=256)          # query tile for attention
    tile_m_ffn = choose_ffn_tile(B * S, D_FF)   # row tile for LN+FFN(+final LN)

    out = encoder_forward(x, mask, kparams, n_heads=H,
                          tile_m_ffn=tile_m_ffn, tile_q=tile_q)
    out = jax.block_until_ready(out)

    ref = encoder_forward_ref(x, mask, params, n_heads=H)
    # bf16 MXU operands + approx reciprocals vs an f32 reference -> modest tolerance.
    np.testing.assert_allclose(np.asarray(out), np.asarray(ref), atol=3e-2, rtol=3e-2)

    # TODO(synk): dropout (train mode) is identity here; only eval-mode forward is implemented.
    print("KERNEL_OK")
</pallas_src>

<mosaic_0001>
module attributes {stable_mosaic.version = 11 : i64} {
  func.func @_attn_kernel(%arg0: i32, %arg1: i32, %arg2: memref<1x8x32xf32, #tpu.memory_space<vmem>>, %arg3: memref<1x1x8xf32, #tpu.memory_space<vmem>>, %arg4: memref<1x32xf32, #tpu.memory_space<vmem>>, %arg5: memref<1x32xf32, #tpu.memory_space<vmem>>, %arg6: memref<32x32xbf16, #tpu.memory_space<vmem>>, %arg7: memref<1x32xf32, #tpu.memory_space<vmem>>, %arg8: memref<32x64xbf16, #tpu.memory_space<vmem>>, %arg9: memref<1x64xf32, #tpu.memory_space<vmem>>, %arg10: memref<32x32xbf16, #tpu.memory_space<vmem>>, %arg11: memref<1x32xf32, #tpu.memory_space<vmem>>, %arg12: memref<1x8x32xf32, #tpu.memory_space<vmem>>, %arg13: memref<8x64xbf16, #tpu.memory_space<vmem>>, %arg14: memref<8x32xf32, #tpu.memory_space<vmem>>) attributes {dimension_semantics = [#tpu.dimension_semantics<parallel>, #tpu.dimension_semantics<arbitrary>], iteration_bounds = array<i64: 2, 1>, scalar_prefetch = 0 : i64, scratch_operands = 2 : i64, tpu.core_type = #tpu.core_type<tc>, window_params = [{transform_indices = @transform_0, window_bounds = array<i64: 1, 8, 32>}, {transform_indices = @transform_1, window_bounds = array<i64: 1, 1, 8>}, {pipeline_mode = #tpu.pipeline_mode<synchronous>, transform_indices = @transform_2, window_bounds = array<i64: 1, 32>}, {pipeline_mode = #tpu.pipeline_mode<synchronous>, transform_indices = @transform_3, window_bounds = array<i64: 1, 32>}, {pipeline_mode = #tpu.pipeline_mode<synchronous>, transform_indices = @transform_4, window_bounds = array<i64: 32, 32>}, {pipeline_mode = #tpu.pipeline_mode<synchronous>, transform_indices = @transform_5, window_bounds = array<i64: 1, 32>}, {pipeline_mode = #tpu.pipeline_mode<synchronous>, transform_indices = @transform_6, window_bounds = array<i64: 32, 64>}, {pipeline_mode = #tpu.pipeline_mode<synchronous>, transform_indices = @transform_7, window_bounds = array<i64: 1, 64>}, {pipeline_mode = #tpu.pipeline_mode<synchronous>, transform_indices = @transform_8, window_bounds = array<i64: 32, 32>}, {pipeline_mode = #tpu.pipeline_mode<synchronous>, transform_indices = @transform_9, window_bounds = array<i64: 1, 32>}, {transform_indices = @transform_10, window_bounds = array<i64: 1, 8, 32>}]} {
    %c0_i32 = arith.constant 0 : i32
    %0 = arith.cmpi eq, %arg1, %c0_i32 : i32
    %1 = arith.extui %0 : i1 to i32
    %c0_i32_0 = arith.constant 0 : i32
    %2 = arith.cmpi ne, %1, %c0_i32_0 : i32
    scf.if %2 {
      %c0_61 = arith.constant 0 : index
      %c0_62 = arith.constant 0 : index
      %c0_63 = arith.constant 0 : index
      %129 = vector.load %arg2[%c0_61, %c0_62, %c0_63] : memref<1x8x32xf32, #tpu.memory_space<vmem>>, vector<1x8x32xf32>
      %130 = vector.shape_cast %129 : vector<1x8x32xf32> to vector<8x32xf32>
      %c0_64 = arith.constant 0 : index
      %c0_65 = arith.constant 0 : index
      %131 = vector.load %arg4[%c0_64, %c0_65] : memref<1x32xf32, #tpu.memory_space<vmem>>, vector<1x32xf32>
      %c0_66 = arith.constant 0 : index
      %c0_67 = arith.constant 0 : index
      %132 = vector.load %arg5[%c0_66, %c0_67] : memref<1x32xf32, #tpu.memory_space<vmem>>, vector<1x32xf32>
      %cst_68 = arith.constant dense<0.000000e+00> : vector<8xf32>
      %133 = vector.multi_reduction <add>, %130, %cst_68 [1] : vector<8x32xf32> to vector<8xf32>
      %134 = vector.shape_cast %133 : vector<8xf32> to vector<8x1xf32>
      %cst_69 = arith.constant 3.200000e+01 : f32
      %135 = vector.broadcast %cst_69 : f32 to vector<8x1xf32>
      %136 = arith.divf %134, %135 : vector<8x1xf32>
      %137 = vector.broadcast %136 : vector<8x1xf32> to vector<8x32xf32>
      %138 = arith.subf %130, %137 : vector<8x32xf32>
      %139 = arith.mulf %138, %138 : vector<8x32xf32>
      %cst_70 = arith.constant dense<0.000000e+00> : vector<8xf32>
      %140 = vector.multi_reduction <add>, %139, %cst_70 [1] : vector<8x32xf32> to vector<8xf32>
      %141 = vector.shape_cast %140 : vector<8xf32> to vector<8x1xf32>
      %cst_71 = arith.constant 0.0322580636 : f32
      %142 = vector.broadcast %cst_71 : f32 to vector<8x1xf32>
      %143 = arith.mulf %141, %142 : vector<8x1xf32>
      %144 = math.sqrt %143 : vector<8x1xf32>
      %cst_72 = arith.constant 9.99999997E-7 : f32
      %145 = vector.broadcast %cst_72 : f32 to vector<8x1xf32>
      %146 = arith.addf %144, %145 : vector<8x1xf32>
      %147 = vector.broadcast %136 : vector<8x1xf32> to vector<8x32xf32>
      %148 = arith.subf %130, %147 : vector<8x32xf32>
      %149 = vector.broadcast %131 : vector<1x32xf32> to vector<8x32xf32>
      %150 = arith.mulf %149, %148 : vector<8x32xf32>
      %151 = tpu.reciprocal %146 {approx = true} : vector<8x1xf32> -> vector<8x1xf32>
      %152 = vector.broadcast %151 : vector<8x1xf32> to vector<8x32xf32>
      %153 = arith.mulf %150, %152 : vector<8x32xf32>
      %154 = vector.broadcast %132 : vector<1x32xf32> to vector<8x32xf32>
      %155 = arith.addf %153, %154 : vector<8x32xf32>
      %156 = arith.truncf %155 : vector<8x32xf32> to vector<8x32xbf16>
      %c0_73 = arith.constant 0 : index
      %c0_74 = arith.constant 0 : index
      %157 = vector.load %arg8[%c0_73, %c0_74] : memref<32x64xbf16, #tpu.memory_space<vmem>>, vector<32x64xbf16>
      %cst_75 = arith.constant dense<0.000000e+00> : vector<8x64xf32>
      %158 = tpu.matmul %156, %157, %cst_75 {dimension_numbers = #tpu.dot_dimension_numbers<[1], [0], [0], [1], [0, 0, 1, 1], [], []>} : vector<8x32xbf16>, vector<32x64xbf16>, vector<8x64xf32> -> vector<8x64xf32>
      %c0_76 = arith.constant 0 : index
      %c0_77 = arith.constant 0 : index
      %159 = vector.load %arg9[%c0_76, %c0_77] : memref<1x64xf32, #tpu.memory_space<vmem>>, vector<1x64xf32>
      %160 = vector.broadcast %159 : vector<1x64xf32> to vector<8x64xf32>
      %161 = arith.addf %158, %160 : vector<8x64xf32>
      %162 = arith.truncf %161 : vector<8x64xf32> to vector<8x64xbf16>
      %c0_78 = arith.constant 0 : index
      %c0_79 = arith.constant 0 : index
      %163 = vector.load %arg13[%c0_78, %c0_79] : memref<8x64xbf16, #tpu.memory_space<vmem>>, vector<8x64xbf16>
      tpu.vector_store %arg13[%c0_78, %c0_79], %162 {strides = array<i32>} : memref<8x64xbf16, #tpu.memory_space<vmem>>, vector<8x64xbf16>,
    } else {
    }
    %c8_i32 = arith.constant 8 : i32
    %3 = arith.muli %arg1, %c8_i32 : i32
    %4 = tpu.assume_multiple %3, 8 : i32
    %c0 = arith.constant 0 : index
    %5 = arith.index_cast %4 : i32 to index
    %c0_1 = arith.constant 0 : index
    %6 = vector.load %arg2[%c0, %5, %c0_1] : memref<1x8x32xf32, #tpu.memory_space<vmem>>, vector<1x8x32xf32>
    %7 = vector.shape_cast %6 : vector<1x8x32xf32> to vector<8x32xf32>
    %c0_2 = arith.constant 0 : index
    %c0_3 = arith.constant 0 : index
    %8 = vector.load %arg4[%c0_2, %c0_3] : memref<1x32xf32, #tpu.memory_space<vmem>>, vector<1x32xf32>
    %c0_4 = arith.constant 0 : index
    %c0_5 = arith.constant 0 : index
    %9 = vector.load %arg5[%c0_4, %c0_5] : memref<1x32xf32, #tpu.memory_space<vmem>>, vector<1x32xf32>
    %cst = arith.constant dense<0.000000e+00> : vector<8xf32>
    %10 = vector.multi_reduction <add>, %7, %cst [1] : vector<8x32xf32> to vector<8xf32>
    %11 = vector.shape_cast %10 : vector<8xf32> to vector<8x1xf32>
    %cst_6 = arith.constant 3.200000e+01 : f32
    %12 = vector.broadcast %cst_6 : f32 to vector<8x1xf32>
    %13 = arith.divf %11, %12 : vector<8x1xf32>
    %14 = vector.broadcast %13 : vector<8x1xf32> to vector<8x32xf32>
    %15 = arith.subf %7, %14 : vector<8x32xf32>
    %16 = arith.mulf %15, %15 : vector<8x32xf32>
    %cst_7 = arith.constant dense<0.000000e+00> : vector<8xf32>
    %17 = vector.multi_reduction <add>, %16, %cst_7 [1] : vector<8x32xf32> to vector<8xf32>
    %18 = vector.shape_cast %17 : vector<8xf32> to vector<8x1xf32>
    %cst_8 = arith.constant 0.0322580636 : f32
    %19 = vector.broadcast %cst_8 : f32 to vector<8x1xf32>
    %20 = arith.mulf %18, %19 : vector<8x1xf32>
    %21 = math.sqrt %20 : vector<8x1xf32>
    %cst_9 = arith.constant 9.99999997E-7 : f32
    %22 = vector.broadcast %cst_9 : f32 to vector<8x1xf32>
    %23 = arith.addf %21, %22 : vector<8x1xf32>
    %24 = vector.broadcast %13 : vector<8x1xf32> to vector<8x32xf32>
    %25 = arith.subf %7, %24 : vector<8x32xf32>
    %26 = vector.broadcast %8 : vector<1x32xf32> to vector<8x32xf32>
    %27 = arith.mulf %26, %25 : vector<8x32xf32>
    %28 = tpu.reciprocal %23 {approx = true} : vector<8x1xf32> -> vector<8x1xf32>
    %29 = vector.broadcast %28 : vector<8x1xf32> to vector<8x32xf32>
    %30 = arith.mulf %27, %29 : vector<8x32xf32>
    %31 = vector.broadcast %9 : vector<1x32xf32> to vector<8x32xf32>
    %32 = arith.addf %30, %31 : vector<8x32xf32>
    %33 = arith.truncf %32 : vector<8x32xf32> to vector<8x32xbf16>
    %c0_10 = arith.constant 0 : index
    %c0_11 = arith.constant 0 : index
    %34 = vector.load %arg6[%c0_10, %c0_11] : memref<32x32xbf16, #tpu.memory_space<vmem>>, vector<32x32xbf16>
    %cst_12 = arith.constant dense<0.000000e+00> : vector<8x32xf32>
    %35 = tpu.matmul %33, %34, %cst_12 {dimension_numbers = #tpu.dot_dimension_numbers<[1], [0], [0], [1], [0, 0, 1, 1], [], []>} : vector<8x32xbf16>, vector<32x32xbf16>, vector<8x32xf32> -> vector<8x32xf32>
    %c0_13 = arith.constant 0 : index
    %c0_14 = arith.constant 0 : index
    %36 = vector.load %arg7[%c0_13, %c0_14] : memref<1x32xf32, #tpu.memory_space<vmem>>, vector<1x32xf32>
    %37 = vector.broadcast %36 : vector<1x32xf32> to vector<8x32xf32>
    %38 = arith.addf %35, %37 : vector<8x32xf32>
    %39 = arith.truncf %38 : vector<8x32xf32> to vector<8x32xbf16>
    %c0_15 = arith.constant 0 : index
    %c0_16 = arith.constant 0 : index
    %c0_17 = arith.constant 0 : index
    %40 = vector.load %arg3[%c0_15, %c0_16, %c0_17] : memref<1x1x8xf32, #tpu.memory_space<vmem>>, vector<1x1x8xf32>
    %41 = vector.shape_cast %40 : vector<1x1x8xf32> to vector<1x8xf32>
    %c0_18 = arith.constant 0 : index
    %c0_19 = arith.constant 0 : index
    %42 = vector.load %arg13[%c0_18, %c0_19] : memref<8x64xbf16, #tpu.memory_space<vmem>>, vector<8x8xbf16>
    %c0_20 = arith.constant 0 : index
    %c32 = arith.constant 32 : index
    %43 = vector.load %arg13[%c0_20, %c32] : memref<8x64xbf16, #tpu.memory_space<vmem>>, vector<8x8xbf16>
    %44 = vector.extract_strided_slice %39 {offsets = [0, 0], sizes = [8, 8], strides = [1, 1]} : vector<8x32xbf16> to vector<8x8xbf16>
    %cst_21 = arith.constant dense<0.000000e+00> : vector<8x8xf32>
    %45 = tpu.matmul %44, %42, %cst_21 {dimension_numbers = #tpu.dot_dimension_numbers<[1], [1], [0], [0], [0, 0, 1, 0], [], []>} : vector<8x8xbf16>, vector<8x8xbf16>, vector<8x8xf32> -> vector<8x8xf32>
    %46 = vector.broadcast %41 : vector<1x8xf32> to vector<8x8xf32>
    %47 = arith.addf %45, %46 : vector<8x8xf32>
    %cst_22 = arith.constant dense<0xFF800000> : vector<8xf32>
    %48 = vector.multi_reduction <maximumf>, %47, %cst_22 [1] : vector<8x8xf32> to vector<8xf32>
    %49 = vector.shape_cast %48 : vector<8xf32> to vector<8x1xf32>
    %50 = vector.broadcast %49 : vector<8x1xf32> to vector<8x8xf32>
    %51 = arith.subf %47, %50 : vector<8x8xf32>
    %52 = math.exp %51 : vector<8x8xf32>
    %cst_23 = arith.constant dense<0.000000e+00> : vector<8xf32>
    %53 = vector.multi_reduction <add>, %52, %cst_23 [1] : vector<8x8xf32> to vector<8xf32>
    %54 = vector.shape_cast %53 : vector<8xf32> to vector<8x1xf32>
    %55 = tpu.reciprocal %54 {approx = true} : vector<8x1xf32> -> vector<8x1xf32>
    %56 = vector.broadcast %55 : vector<8x1xf32> to vector<8x8xf32>
    %57 = arith.mulf %52, %56 : vector<8x8xf32>
    %58 = arith.truncf %57 : vector<8x8xf32> to vector<8x8xbf16>
    %cst_24 = arith.constant dense<0.000000e+00> : vector<8x8xf32>
    %59 = tpu.matmul %58, %43, %cst_24 {dimension_numbers = #tpu.dot_dimension_numbers<[1], [0], [0], [1], [0, 0, 1, 1], [], []>} : vector<8x8xbf16>, vector<8x8xbf16>, vector<8x8xf32> -> vector<8x8xf32>
    %c0_25 = arith.constant 0 : index
    %c0_26 = arith.constant 0 : index
    %60 = vector.load %arg14[%c0_25, %c0_26] : memref<8x32xf32, #tpu.memory_space<vmem>>, vector<8x8xf32>
    tpu.vector_store %arg14[%c0_25, %c0_26], %59 {strides = array<i32>} : memref<8x32xf32, #tpu.memory_space<vmem>>, vector<8x8xf32>,
    %c0_27 = arith.constant 0 : index
    %c8 = arith.constant 8 : index
    %61 = vector.load %arg13[%c0_27, %c8] : memref<8x64xbf16, #tpu.memory_space<vmem>>, vector<8x8xbf16>
    %c0_28 = arith.constant 0 : index
    %c40 = arith.constant 40 : index
    %62 = vector.load %arg13[%c0_28, %c40] : memref<8x64xbf16, #tpu.memory_space<vmem>>, vector<8x8xbf16>
    %63 = vector.extract_strided_slice %39 {offsets = [0, 8], sizes = [8, 8], strides = [1, 1]} : vector<8x32xbf16> to vector<8x8xbf16>
    %cst_29 = arith.constant dense<0.000000e+00> : vector<8x8xf32>
    %64 = tpu.matmul %63, %61, %cst_29 {dimension_numbers = #tpu.dot_dimension_numbers<[1], [1], [0], [0], [0, 0, 1, 0], [], []>} : vector<8x8xbf16>, vector<8x8xbf16>, vector<8x8xf32> -> vector<8x8xf32>
    %65 = vector.broadcast %41 : vector<1x8xf32> to vector<8x8xf32>
    %66 = arith.addf %64, %65 : vector<8x8xf32>
    %cst_30 = arith.constant dense<0xFF800000> : vector<8xf32>
    %67 = vector.multi_reduction <maximumf>, %66, %cst_30 [1] : vector<8x8xf32> to vector<8xf32>
    %68 = vector.shape_cast %67 : vector<8xf32> to vector<8x1xf32>
    %69 = vector.broadcast %68 : vector<8x1xf32> to vector<8x8xf32>
    %70 = arith.subf %66, %69 : vector<8x8xf32>
    %71 = math.exp %70 : vector<8x8xf32>
    %cst_31 = arith.constant dense<0.000000e+00> : vector<8xf32>
    %72 = vector.multi_reduction <add>, %71, %cst_31 [1] : vector<8x8xf32> to vector<8xf32>
    %73 = vector.shape_cast %72 : vector<8xf32> to vector<8x1xf32>
    %74 = tpu.reciprocal %73 {approx = true} : vector<8x1xf32> -> vector<8x1xf32>
    %75 = vector.broadcast %74 : vector<8x1xf32> to vector<8x8xf32>
    %76 = arith.mulf %71, %75 : vector<8x8xf32>
    %77 = arith.truncf %76 : vector<8x8xf32> to vector<8x8xbf16>
    %cst_32 = arith.constant dense<0.000000e+00> : vector<8x8xf32>
    %78 = tpu.matmul %77, %62, %cst_32 {dimension_numbers = #tpu.dot_dimension_numbers<[1], [0], [0], [1], [0, 0, 1, 1], [], []>} : vector<8x8xbf16>, vector<8x8xbf16>, vector<8x8xf32> -> vector<8x8xf32>
    %c0_33 = arith.constant 0 : index
    %c8_34 = arith.constant 8 : index
    %79 = vector.load %arg14[%c0_33, %c8_34] : memref<8x32xf32, #tpu.memory_space<vmem>>, vector<8x8xf32>
    tpu.vector_store %arg14[%c0_33, %c8_34], %78 {strides = array<i32>} : memref<8x32xf32, #tpu.memory_space<vmem>>, vector<8x8xf32>,
    %c0_35 = arith.constant 0 : index
    %c16 = arith.constant 16 : index
    %80 = vector.load %arg13[%c0_35, %c16] : memref<8x64xbf16, #tpu.memory_space<vmem>>, vector<8x8xbf16>
    %c0_36 = arith.constant 0 : index
    %c48 = arith.constant 48 : index
    %81 = vector.load %arg13[%c0_36, %c48] : memref<8x64xbf16, #tpu.memory_space<vmem>>, vector<8x8xbf16>
    %82 = vector.extract_strided_slice %39 {offsets = [0, 16], sizes = [8, 8], strides = [1, 1]} : vector<8x32xbf16> to vector<8x8xbf16>
    %cst_37 = arith.constant dense<0.000000e+00> : vector<8x8xf32>
    %83 = tpu.matmul %82, %80, %cst_37 {dimension_numbers = #tpu.dot_dimension_numbers<[1], [1], [0], [0], [0, 0, 1, 0], [], []>} : vector<8x8xbf16>, vector<8x8xbf16>, vector<8x8xf32> -> vector<8x8xf32>
    %84 = vector.broadcast %41 : vector<1x8xf32> to vector<8x8xf32>
    %85 = arith.addf %83, %84 : vector<8x8xf32>
    %cst_38 = arith.constant dense<0xFF800000> : vector<8xf32>
    %86 = vector.multi_reduction <maximumf>, %85, %cst_38 [1] : vector<8x8xf32> to vector<8xf32>
    %87 = vector.shape_cast %86 : vector<8xf32> to vector<8x1xf32>
    %88 = vector.broadcast %87 : vector<8x1xf32> to vector<8x8xf32>
    %89 = arith.subf %85, %88 : vector<8x8xf32>
    %90 = math.exp %89 : vector<8x8xf32>
    %cst_39 = arith.constant dense<0.000000e+00> : vector<8xf32>
    %91 = vector.multi_reduction <add>, %90, %cst_39 [1] : vector<8x8xf32> to vector<8xf32>
    %92 = vector.shape_cast %91 : vector<8xf32> to vector<8x1xf32>
    %93 = tpu.reciprocal %92 {approx = true} : vector<8x1xf32> -> vector<8x1xf32>
    %94 = vector.broadcast %93 : vector<8x1xf32> to vector<8x8xf32>
    %95 = arith.mulf %90, %94 : vector<8x8xf32>
    %96 = arith.truncf %95 : vector<8x8xf32> to vector<8x8xbf16>
    %cst_40 = arith.constant dense<0.000000e+00> : vector<8x8xf32>
    %97 = tpu.matmul %96, %81, %cst_40 {dimension_numbers = #tpu.dot_dimension_numbers<[1], [0], [0], [1], [0, 0, 1, 1], [], []>} : vector<8x8xbf16>, vector<8x8xbf16>, vector<8x8xf32> -> vector<8x8xf32>
    %c0_41 = arith.constant 0 : index
    %c16_42 = arith.constant 16 : index
    %98 = vector.load %arg14[%c0_41, %c16_42] : memref<8x32xf32, #tpu.memory_space<vmem>>, vector<8x8xf32>
    tpu.vector_store %arg14[%c0_41, %c16_42], %97 {strides = array<i32>} : memref<8x32xf32, #tpu.memory_space<vmem>>, vector<8x8xf32>,
    %c0_43 = arith.constant 0 : index
    %c24 = arith.constant 24 : index
    %99 = vector.load %arg13[%c0_43, %c24] : memref<8x64xbf16, #tpu.memory_space<vmem>>, vector<8x8xbf16>
    %c0_44 = arith.constant 0 : index
    %c56 = arith.constant 56 : index
    %100 = vector.load %arg13[%c0_44, %c56] : memref<8x64xbf16, #tpu.memory_space<vmem>>, vector<8x8xbf16>
    %101 = vector.extract_strided_slice %39 {offsets = [0, 24], sizes = [8, 8], strides = [1, 1]} : vector<8x32xbf16> to vector<8x8xbf16>
    %cst_45 = arith.constant dense<0.000000e+00> : vector<8x8xf32>
    %102 = tpu.matmul %101, %99, %cst_45 {dimension_numbers = #tpu.dot_dimension_numbers<[1], [1], [0], [0], [0, 0, 1, 0], [], []>} : vector<8x8xbf16>, vector<8x8xbf16>, vector<8x8xf32> -> vector<8x8xf32>
    %103 = vector.broadcast %41 : vector<1x8xf32> to vector<8x8xf32>
    %104 = arith.addf %102, %103 : vector<8x8xf32>
    %cst_46 = arith.constant dense<0xFF800000> : vector<8xf32>
    %105 = vector.multi_reduction <maximumf>, %104, %cst_46 [1] : vector<8x8xf32> to vector<8xf32>
    %106 = vector.shape_cast %105 : vector<8xf32> to vector<8x1xf32>
    %107 = vector.broadcast %106 : vector<8x1xf32> to vector<8x8xf32>
    %108 = arith.subf %104, %107 : vector<8x8xf32>
    %109 = math.exp %108 : vector<8x8xf32>
    %cst_47 = arith.constant dense<0.000000e+00> : vector<8xf32>
    %110 = vector.multi_reduction <add>, %109, %cst_47 [1] : vector<8x8xf32> to vector<8xf32>
    %111 = vector.shape_cast %110 : vector<8xf32> to vector<8x1xf32>
    %112 = tpu.reciprocal %111 {approx = true} : vector<8x1xf32> -> vector<8x1xf32>
    %113 = vector.broadcast %112 : vector<8x1xf32> to vector<8x8xf32>
    %114 = arith.mulf %109, %113 : vector<8x8xf32>
    %115 = arith.truncf %114 : vector<8x8xf32> to vector<8x8xbf16>
    %cst_48 = arith.constant dense<0.000000e+00> : vector<8x8xf32>
    %116 = tpu.matmul %115, %100, %cst_48 {dimension_numbers = #tpu.dot_dimension_numbers<[1], [0], [0], [1], [0, 0, 1, 1], [], []>} : vector<8x8xbf16>, vector<8x8xbf16>, vector<8x8xf32> -> vector<8x8xf32>
    %c0_49 = arith.constant 0 : index
    %c24_50 = arith.constant 24 : index
    %117 = vector.load %arg14[%c0_49, %c24_50] : memref<8x32xf32, #tpu.memory_space<vmem>>, vector<8x8xf32>
    tpu.vector_store %arg14[%c0_49, %c24_50], %116 {strides = array<i32>} : memref<8x32xf32, #tpu.memory_space<vmem>>, vector<8x8xf32>,
    %c0_51 = arith.constant 0 : index
    %c0_52 = arith.constant 0 : index
    %118 = vector.load %arg14[%c0_51, %c0_52] : memref<8x32xf32, #tpu.memory_space<vmem>>, vector<8x32xf32>
    %119 = arith.truncf %118 : vector<8x32xf32> to vector<8x32xbf16>
    %c0_53 = arith.constant 0 : index
    %c0_54 = arith.constant 0 : index
    %120 = vector.load %arg10[%c0_53, %c0_54] : memref<32x32xbf16, #tpu.memory_space<vmem>>, vector<32x32xbf16>
    %cst_55 = arith.constant dense<0.000000e+00> : vector<8x32xf32>
    %121 = tpu.matmul %119, %120, %cst_55 {dimension_numbers = #tpu.dot_dimension_numbers<[1], [0], [0], [1], [0, 0, 1, 1], [], []>} : vector<8x32xbf16>, vector<32x32xbf16>, vector<8x32xf32> -> vector<8x32xf32>
    %c0_56 = arith.constant 0 : index
    %c0_57 = arith.constant 0 : index
    %122 = vector.load %arg11[%c0_56, %c0_57] : memref<1x32xf32, #tpu.memory_space<vmem>>, vector<1x32xf32>
    %123 = vector.broadcast %122 : vector<1x32xf32> to vector<8x32xf32>
    %124 = arith.addf %121, %123 : vector<8x32xf32>
    %125 = arith.addf %7, %124 : vector<8x32xf32>
    %c0_58 = arith.constant 0 : index
    %c0_59 = arith.constant 0 : index
    %c0_60 = arith.constant 0 : index
    %126 = vector.load %arg12[%c0_58, %c0_59, %c0_60] : memref<1x8x32xf32, #tpu.memory_space<vmem>>, vector<1x8x32xf32>
    %127 = vector.shape_cast %126 : vector<1x8x32xf32> to vector<8x32xf32>
    %128 = vector.shape_cast %125 : vector<8x32xf32> to vector<1x8x32xf32>
    tpu.vector_store %arg12[%c0_58, %c0_59, %c0_60], %128 {strides = array<i32>} : memref<1x8x32xf32, #tpu.memory_space<vmem>>, vector<1x8x32xf32>,
    return
  }
  func.func @transform_0(%arg0: i32, %arg1: i32) -> (i32, i32, i32) {
    %c0_i32 = arith.constant 0 : i32
    %c0_i32_0 = arith.constant 0 : i32
    %c0_i32_1 = arith.constant 0 : i32
    return %arg0, %c0_i32, %c0_i32_0 : i32, i32, i32
  }
  func.func @transform_1(%arg0: i32, %arg1: i32) -> (i32, i32, i32) {
    %c0_i32 = arith.constant 0 : i32
    %c0_i32_0 = arith.constant 0 : i32
    %c0_i32_1 = arith.constant 0 : i32
    return %arg0, %c0_i32, %c0_i32_0 : i32, i32, i32
  }
  func.func @transform_2(%arg0: i32, %arg1: i32) -> (i32, i32) {
    %c0_i32 = arith.constant 0 : i32
    %c0_i32_0 = arith.constant 0 : i32
    %c0_i32_1 = arith.constant 0 : i32
    return %c0_i32, %c0_i32_0 : i32, i32
  }
  func.func @transform_3(%arg0: i32, %arg1: i32) -> (i32, i32) {
    %c0_i32 = arith.constant 0 : i32
    %c0_i32_0 = arith.constant 0 : i32
    %c0_i32_1 = arith.constant 0 : i32
    return %c0_i32, %c0_i32_0 : i32, i32
  }
  func.func @transform_4(%arg0: i32, %arg1: i32) -> (i32, i32) {
    %c0_i32 = arith.constant 0 : i32
    %c0_i32_0 = arith.constant 0 : i32
    %c0_i32_1 = arith.constant 0 : i32
    return %c0_i32, %c0_i32_0 : i32, i32
  }
  func.func @transform_5(%arg0: i32, %arg1: i32) -> (i32, i32) {
    %c0_i32 = arith.constant 0 : i32
    %c0_i32_0 = arith.constant 0 : i32
    %c0_i32_1 = arith.constant 0 : i32
    return %c0_i32, %c0_i32_0 : i32, i32
  }
  func.func @transform_6(%arg0: i32, %arg1: i32) -> (i32, i32) {
    %c0_i32 = arith.constant 0 : i32
    %c0_i32_0 = arith.constant 0 : i32
    %c0_i32_1 = arith.constant 0 : i32
    return %c0_i32, %c0_i32_0 : i32, i32
  }
  func.func @transform_7(%arg0: i32, %arg1: i32) -> (i32, i32) {
    %c0_i32 = arith.constant 0 : i32
    %c0_i32_0 = arith.constant 0 : i32
    %c0_i32_1 = arith.constant 0 : i32
    return %c0_i32, %c0_i32_0 : i32, i32
  }
  func.func @transform_8(%arg0: i32, %arg1: i32) -> (i32, i32) {
    %c0_i32 = arith.constant 0 : i32
    %c0_i32_0 = arith.constant 0 : i32
    %c0_i32_1 = arith.constant 0 : i32
    return %c0_i32, %c0_i32_0 : i32, i32
  }
  func.func @transform_9(%arg0: i32, %arg1: i32) -> (i32, i32) {
    %c0_i32 = arith.constant 0 : i32
    %c0_i32_0 = arith.constant 0 : i32
    %c0_i32_1 = arith.constant 0 : i32
    return %c0_i32, %c0_i32_0 : i32, i32
  }
  func.func @transform_10(%arg0: i32, %arg1: i32) -> (i32, i32, i32) {
    %c0_i32 = arith.constant 0 : i32
    %c0_i32_0 = arith.constant 0 : i32
    return %arg0, %arg1, %c0_i32 : i32, i32, i32
  }
}

module attributes {stable_mosaic.version = 11 : i64} {
  func.func @_ln_ffn_kernel(%arg0: i32, %arg1: memref<16x32xf32, #tpu.memory_space<vmem>>, %arg2: memref<1x32xf32, #tpu.memory_space<vmem>>, %arg3: memref<1x32xf32, #tpu.memory_space<vmem>>, %arg4: memref<32x64xbf16, #tpu.memory_space<vmem>>, %arg5: memref<1x64xf32, #tpu.memory_space<vmem>>, %arg6: memref<64x32xbf16, #tpu.memory_space<vmem>>, %arg7: memref<1x32xf32, #tpu.memory_space<vmem>>, %arg8: memref<16x32xf32, #tpu.memory_space<vmem>>) attributes {dimension_semantics = [#tpu.dimension_semantics<parallel>], iteration_bounds = array<i64: 1>, scalar_prefetch = 0 : i64, scratch_operands = 0 : i64, tpu.core_type = #tpu.core_type<tc>, window_params = [{transform_indices = @transform_0, window_bounds = array<i64: 16, 32>}, {pipeline_mode = #tpu.pipeline_mode<synchronous>, transform_indices = @transform_1, window_bounds = array<i64: 1, 32>}, {pipeline_mode = #tpu.pipeline_mode<synchronous>, transform_indices = @transform_2, window_bounds = array<i64: 1, 32>}, {pipeline_mode = #tpu.pipeline_mode<synchronous>, transform_indices = @transform_3, window_bounds = array<i64: 32, 64>}, {pipeline_mode = #tpu.pipeline_mode<synchronous>, transform_indices = @transform_4, window_bounds = array<i64: 1, 64>}, {pipeline_mode = #tpu.pipeline_mode<synchronous>, transform_indices = @transform_5, window_bounds = array<i64: 64, 32>}, {pipeline_mode = #tpu.pipeline_mode<synchronous>, transform_indices = @transform_6, window_bounds = array<i64: 1, 32>}, {transform_indices = @transform_7, window_bounds = array<i64: 16, 32>}]} {
    %c0 = arith.constant 0 : index
    %c0_0 = arith.constant 0 : index
    %0 = vector.load %arg1[%c0, %c0_0] : memref<16x32xf32, #tpu.memory_space<vmem>>, vector<16x32xf32>
    %c0_1 = arith.constant 0 : index
    %c0_2 = arith.constant 0 : index
    %1 = vector.load %arg2[%c0_1, %c0_2] : memref<1x32xf32, #tpu.memory_space<vmem>>, vector<1x32xf32>
    %c0_3 = arith.constant 0 : index
    %c0_4 = arith.constant 0 : index
    %2 = vector.load %arg3[%c0_3, %c0_4] : memref<1x32xf32, #tpu.memory_space<vmem>>, vector<1x32xf32>
    %cst = arith.constant dense<0.000000e+00> : vector<16xf32>
    %3 = vector.multi_reduction <add>, %0, %cst [1] : vector<16x32xf32> to vector<16xf32>
    %4 = vector.shape_cast %3 : vector<16xf32> to vector<16x1xf32>
    %cst_5 = arith.constant 3.200000e+01 : f32
    %5 = vector.broadcast %cst_5 : f32 to vector<16x1xf32>
    %6 = arith.divf %4, %5 : vector<16x1xf32>
    %7 = vector.broadcast %6 : vector<16x1xf32> to vector<16x32xf32>
    %8 = arith.subf %0, %7 : vector<16x32xf32>
    %9 = arith.mulf %8, %8 : vector<16x32xf32>
    %cst_6 = arith.constant dense<0.000000e+00> : vector<16xf32>
    %10 = vector.multi_reduction <add>, %9, %cst_6 [1] : vector<16x32xf32> to vector<16xf32>
    %11 = vector.shape_cast %10 : vector<16xf32> to vector<16x1xf32>
    %cst_7 = arith.constant 0.0322580636 : f32
    %12 = vector.broadcast %cst_7 : f32 to vector<16x1xf32>
    %13 = arith.mulf %11, %12 : vector<16x1xf32>
    %14 = math.sqrt %13 : vector<16x1xf32>
    %cst_8 = arith.constant 9.99999997E-7 : f32
    %15 = vector.broadcast %cst_8 : f32 to vector<16x1xf32>
    %16 = arith.addf %14, %15 : vector<16x1xf32>
    %17 = vector.broadcast %6 : vector<16x1xf32> to vector<16x32xf32>
    %18 = arith.subf %0, %17 : vector<16x32xf32>
    %19 = vector.broadcast %1 : vector<1x32xf32> to vector<16x32xf32>
    %20 = arith.mulf %19, %18 : vector<16x32xf32>
    %21 = tpu.reciprocal %16 {approx = true} : vector<16x1xf32> -> vector<16x1xf32>
    %22 = vector.broadcast %21 : vector<16x1xf32> to vector<16x32xf32>
    %23 = arith.mulf %20, %22 : vector<16x32xf32>
    %24 = vector.broadcast %2 : vector<1x32xf32> to vector<16x32xf32>
    %25 = arith.addf %23, %24 : vector<16x32xf32>
    %26 = arith.truncf %25 : vector<16x32xf32> to vector<16x32xbf16>
    %c0_9 = arith.constant 0 : index
    %c0_10 = arith.constant 0 : index
    %27 = vector.load %arg4[%c0_9, %c0_10] : memref<32x64xbf16, #tpu.memory_space<vmem>>, vector<32x64xbf16>
    %cst_11 = arith.constant dense<0.000000e+00> : vector<16x64xf32>
    %28 = tpu.matmul %26, %27, %cst_11 {dimension_numbers = #tpu.dot_dimension_numbers<[1], [0], [0], [1], [0, 0, 1, 1], [], []>} : vector<16x32xbf16>, vector<32x64xbf16>, vector<16x64xf32> -> vector<16x64xf32>
    %c0_12 = arith.constant 0 : index
    %c0_13 = arith.constant 0 : index
    %29 = vector.load %arg5[%c0_12, %c0_13] : memref<1x64xf32, #tpu.memory_space<vmem>>, vector<1x64xf32>
    %30 = vector.broadcast %29 : vector<1x64xf32> to vector<16x64xf32>
    %31 = arith.addf %28, %30 : vector<16x64xf32>
    %cst_14 = arith.constant 0.000000e+00 : f32
    %32 = vector.broadcast %cst_14 : f32 to vector<16x64xf32>
    %33 = arith.maximumf %31, %32 : vector<16x64xf32>
    %34 = arith.truncf %33 : vector<16x64xf32> to vector<16x64xbf16>
    %c0_15 = arith.constant 0 : index
    %c0_16 = arith.constant 0 : index
    %35 = vector.load %arg6[%c0_15, %c0_16] : memref<64x32xbf16, #tpu.memory_space<vmem>>, vector<64x32xbf16>
    %cst_17 = arith.constant dense<0.000000e+00> : vector<16x32xf32>
    %36 = tpu.matmul %34, %35, %cst_17 {dimension_numbers = #tpu.dot_dimension_numbers<[1], [0], [0], [1], [0, 0, 1, 1], [], []>} : vector<16x64xbf16>, vector<64x32xbf16>, vector<16x32xf32> -> vector<16x32xf32>
    %c0_18 = arith.constant 0 : index
    %c0_19 = arith.constant 0 : index
    %37 = vector.load %arg7[%c0_18, %c0_19] : memref<1x32xf32, #tpu.memory_space<vmem>>, vector<1x32xf32>
    %38 = vector.broadcast %37 : vector<1x32xf32> to vector<16x32xf32>
    %39 = arith.addf %36, %38 : vector<16x32xf32>
    %40 = arith.addf %0, %39 : vector<16x32xf32>
    %c0_20 = arith.constant 0 : index
    %c0_21 = arith.constant 0 : index
    %41 = vector.load %arg8[%c0_20, %c0_21] : memref<16x32xf32, #tpu.memory_space<vmem>>, vector<16x32xf32>
    tpu.vector_store %arg8[%c0_20, %c0_21], %40 {strides = array<i32>} : memref<16x32xf32, #tpu.memory_space<vmem>>, vector<16x32xf32>,
    return
  }
  func.func @transform_0(%arg0: i32) -> (i32, i32) {
    %c0_i32 = arith.constant 0 : i32
    %c0_i32_0 = arith.constant 0 : i32
    return %arg0, %c0_i32 : i32, i32
  }
  func.func @transform_1(%arg0: i32) -> (i32, i32) {
    %c0_i32 = arith.constant 0 : i32
    %c0_i32_0 = arith.constant 0 : i32
    %c0_i32_1 = arith.constant 0 : i32
    return %c0_i32, %c0_i32_0 : i32, i32
  }
  func.func @transform_2(%arg0: i32) -> (i32, i32) {
    %c0_i32 = arith.constant 0 : i32
    %c0_i32_0 = arith.constant 0 : i32
    %c0_i32_1 = arith.constant 0 : i32
    return %c0_i32, %c0_i32_0 : i32, i32
  }
  func.func @transform_3(%arg0: i32) -> (i32, i32) {
    %c0_i32 = arith.constant 0 : i32
    %c0_i32_0 = arith.constant 0 : i32
    %c0_i32_1 = arith.constant 0 : i32
    return %c0_i32, %c0_i32_0 : i32, i32
  }
  func.func @transform_4(%arg0: i32) -> (i32, i32) {
    %c0_i32 = arith.constant 0 : i32
    %c0_i32_0 = arith.constant 0 : i32
    %c0_i32_1 = arith.constant 0 : i32
    return %c0_i32, %c0_i32_0 : i32, i32
  }
  func.func @transform_5(%arg0: i32) -> (i32, i32) {
    %c0_i32 = arith.constant 0 : i32
    %c0_i32_0 = arith.constant 0 : i32
    %c0_i32_1 = arith.constant 0 : i32
    return %c0_i32, %c0_i32_0 : i32, i32
  }
  func.func @transform_6(%arg0: i32) -> (i32, i32) {
    %c0_i32 = arith.constant 0 : i32
    %c0_i32_0 = arith.constant 0 : i32
    %c0_i32_1 = arith.constant 0 : i32
    return %c0_i32, %c0_i32_0 : i32, i32
  }
  func.func @transform_7(%arg0: i32) -> (i32, i32) {
    %c0_i32 = arith.constant 0 : i32
    %c0_i32_0 = arith.constant 0 : i32
    return %arg0, %c0_i32 : i32, i32
  }
}

module attributes {stable_mosaic.version = 11 : i64} {
  func.func @_ln_ffn_final_kernel(%arg0: i32, %arg1: memref<16x32xf32, #tpu.memory_space<vmem>>, %arg2: memref<1x32xf32, #tpu.memory_space<vmem>>, %arg3: memref<1x32xf32, #tpu.memory_space<vmem>>, %arg4: memref<32x64xbf16, #tpu.memory_space<vmem>>, %arg5: memref<1x64xf32, #tpu.memory_space<vmem>>, %arg6: memref<64x32xbf16, #tpu.memory_space<vmem>>, %arg7: memref<1x32xf32, #tpu.memory_space<vmem>>, %arg8: memref<1x32xf32, #tpu.memory_space<vmem>>, %arg9: memref<1x32xf32, #tpu.memory_space<vmem>>, %arg10: memref<16x32xf32, #tpu.memory_space<vmem>>) attributes {dimension_semantics = [#tpu.dimension_semantics<parallel>], iteration_bounds = array<i64: 1>, scalar_prefetch = 0 : i64, scratch_operands = 0 : i64, tpu.core_type = #tpu.core_type<tc>, window_params = [{transform_indices = @transform_0, window_bounds = array<i64: 16, 32>}, {pipeline_mode = #tpu.pipeline_mode<synchronous>, transform_indices = @transform_1, window_bounds = array<i64: 1, 32>}, {pipeline_mode = #tpu.pipeline_mode<synchronous>, transform_indices = @transform_2, window_bounds = array<i64: 1, 32>}, {pipeline_mode = #tpu.pipeline_mode<synchronous>, transform_indices = @transform_3, window_bounds = array<i64: 32, 64>}, {pipeline_mode = #tpu.pipeline_mode<synchronous>, transform_indices = @transform_4, window_bounds = array<i64: 1, 64>}, {pipeline_mode = #tpu.pipeline_mode<synchronous>, transform_indices = @transform_5, window_bounds = array<i64: 64, 32>}, {pipeline_mode = #tpu.pipeline_mode<synchronous>, transform_indices = @transform_6, window_bounds = array<i64: 1, 32>}, {pipeline_mode = #tpu.pipeline_mode<synchronous>, transform_indices = @transform_7, window_bounds = array<i64: 1, 32>}, {pipeline_mode = #tpu.pipeline_mode<synchronous>, transform_indices = @transform_8, window_bounds = array<i64: 1, 32>}, {transform_indices = @transform_9, window_bounds = array<i64: 16, 32>}]} {
    %c0 = arith.constant 0 : index
    %c0_0 = arith.constant 0 : index
    %0 = vector.load %arg1[%c0, %c0_0] : memref<16x32xf32, #tpu.memory_space<vmem>>, vector<16x32xf32>
    %c0_1 = arith.constant 0 : index
    %c0_2 = arith.constant 0 : index
    %1 = vector.load %arg2[%c0_1, %c0_2] : memref<1x32xf32, #tpu.memory_space<vmem>>, vector<1x32xf32>
    %c0_3 = arith.constant 0 : index
    %c0_4 = arith.constant 0 : index
    %2 = vector.load %arg3[%c0_3, %c0_4] : memref<1x32xf32, #tpu.memory_space<vmem>>, vector<1x32xf32>
    %cst = arith.constant dense<0.000000e+00> : vector<16xf32>
    %3 = vector.multi_reduction <add>, %0, %cst [1] : vector<16x32xf32> to vector<16xf32>
    %4 = vector.shape_cast %3 : vector<16xf32> to vector<16x1xf32>
    %cst_5 = arith.constant 3.200000e+01 : f32
    %5 = vector.broadcast %cst_5 : f32 to vector<16x1xf32>
    %6 = arith.divf %4, %5 : vector<16x1xf32>
    %7 = vector.broadcast %6 : vector<16x1xf32> to vector<16x32xf32>
    %8 = arith.subf %0, %7 : vector<16x32xf32>
    %9 = arith.mulf %8, %8 : vector<16x32xf32>
    %cst_6 = arith.constant dense<0.000000e+00> : vector<16xf32>
    %10 = vector.multi_reduction <add>, %9, %cst_6 [1] : vector<16x32xf32> to vector<16xf32>
    %11 = vector.shape_cast %10 : vector<16xf32> to vector<16x1xf32>
    %cst_7 = arith.constant 0.0322580636 : f32
    %12 = vector.broadcast %cst_7 : f32 to vector<16x1xf32>
    %13 = arith.mulf %11, %12 : vector<16x1xf32>
    %14 = math.sqrt %13 : vector<16x1xf32>
    %cst_8 = arith.constant 9.99999997E-7 : f32
    %15 = vector.broadcast %cst_8 : f32 to vector<16x1xf32>
    %16 = arith.addf %14, %15 : vector<16x1xf32>
    %17 = vector.broadcast %6 : vector<16x1xf32> to vector<16x32xf32>
    %18 = arith.subf %0, %17 : vector<16x32xf32>
    %19 = vector.broadcast %1 : vector<1x32xf32> to vector<16x32xf32>
    %20 = arith.mulf %19, %18 : vector<16x32xf32>
    %21 = tpu.reciprocal %16 {approx = true} : vector<16x1xf32> -> vector<16x1xf32>
    %22 = vector.broadcast %21 : vector<16x1xf32> to vector<16x32xf32>
    %23 = arith.mulf %20, %22 : vector<16x32xf32>
    %24 = vector.broadcast %2 : vector<1x32xf32> to vector<16x32xf32>
    %25 = arith.addf %23, %24 : vector<16x32xf32>
    %26 = arith.truncf %25 : vector<16x32xf32> to vector<16x32xbf16>
    %c0_9 = arith.constant 0 : index
    %c0_10 = arith.constant 0 : index
    %27 = vector.load %arg4[%c0_9, %c0_10] : memref<32x64xbf16, #tpu.memory_space<vmem>>, vector<32x64xbf16>
    %cst_11 = arith.constant dense<0.000000e+00> : vector<16x64xf32>
    %28 = tpu.matmul %26, %27, %cst_11 {dimension_numbers = #tpu.dot_dimension_numbers<[1], [0], [0], [1], [0, 0, 1, 1], [], []>} : vector<16x32xbf16>, vector<32x64xbf16>, vector<16x64xf32> -> vector<16x64xf32>
    %c0_12 = arith.constant 0 : index
    %c0_13 = arith.constant 0 : index
    %29 = vector.load %arg5[%c0_12, %c0_13] : memref<1x64xf32, #tpu.memory_space<vmem>>, vector<1x64xf32>
    %30 = vector.broadcast %29 : vector<1x64xf32> to vector<16x64xf32>
    %31 = arith.addf %28, %30 : vector<16x64xf32>
    %cst_14 = arith.constant 0.000000e+00 : f32
    %32 = vector.broadcast %cst_14 : f32 to vector<16x64xf32>
    %33 = arith.maximumf %31, %32 : vector<16x64xf32>
    %34 = arith.truncf %33 : vector<16x64xf32> to vector<16x64xbf16>
    %c0_15 = arith.constant 0 : index
    %c0_16 = arith.constant 0 : index
    %35 = vector.load %arg6[%c0_15, %c0_16] : memref<64x32xbf16, #tpu.memory_space<vmem>>, vector<64x32xbf16>
    %cst_17 = arith.constant dense<0.000000e+00> : vector<16x32xf32>
    %36 = tpu.matmul %34, %35, %cst_17 {dimension_numbers = #tpu.dot_dimension_numbers<[1], [0], [0], [1], [0, 0, 1, 1], [], []>} : vector<16x64xbf16>, vector<64x32xbf16>, vector<16x32xf32> -> vector<16x32xf32>
    %c0_18 = arith.constant 0 : index
    %c0_19 = arith.constant 0 : index
    %37 = vector.load %arg7[%c0_18, %c0_19] : memref<1x32xf32, #tpu.memory_space<vmem>>, vector<1x32xf32>
    %38 = vector.broadcast %37 : vector<1x32xf32> to vector<16x32xf32>
    %39 = arith.addf %36, %38 : vector<16x32xf32>
    %40 = arith.addf %0, %39 : vector<16x32xf32>
    %c0_20 = arith.constant 0 : index
    %c0_21 = arith.constant 0 : index
    %41 = vector.load %arg8[%c0_20, %c0_21] : memref<1x32xf32, #tpu.memory_space<vmem>>, vector<1x32xf32>
    %c0_22 = arith.constant 0 : index
    %c0_23 = arith.constant 0 : index
    %42 = vector.load %arg9[%c0_22, %c0_23] : memref<1x32xf32, #tpu.memory_space<vmem>>, vector<1x32xf32>
    %cst_24 = arith.constant dense<0.000000e+00> : vector<16xf32>
    %43 = vector.multi_reduction <add>, %40, %cst_24 [1] : vector<16x32xf32> to vector<16xf32>
    %44 = vector.shape_cast %43 : vector<16xf32> to vector<16x1xf32>
    %cst_25 = arith.constant 3.200000e+01 : f32
    %45 = vector.broadcast %cst_25 : f32 to vector<16x1xf32>
    %46 = arith.divf %44, %45 : vector<16x1xf32>
    %47 = vector.broadcast %46 : vector<16x1xf32> to vector<16x32xf32>
    %48 = arith.subf %40, %47 : vector<16x32xf32>
    %49 = arith.mulf %48, %48 : vector<16x32xf32>
    %cst_26 = arith.constant dense<0.000000e+00> : vector<16xf32>
    %50 = vector.multi_reduction <add>, %49, %cst_26 [1] : vector<16x32xf32> to vector<16xf32>
    %51 = vector.shape_cast %50 : vector<16xf32> to vector<16x1xf32>
    %cst_27 = arith.constant 0.0322580636 : f32
    %52 = vector.broadcast %cst_27 : f32 to vector<16x1xf32>
    %53 = arith.mulf %51, %52 : vector<16x1xf32>
    %54 = math.sqrt %53 : vector<16x1xf32>
    %cst_28 = arith.constant 9.99999997E-7 : f32
    %55 = vector.broadcast %cst_28 : f32 to vector<16x1xf32>
    %56 = arith.addf %54, %55 : vector<16x1xf32>
    %57 = vector.broadcast %46 : vector<16x1xf32> to vector<16x32xf32>
    %58 = arith.subf %40, %57 : vector<16x32xf32>
    %59 = vector.broadcast %41 : vector<1x32xf32> to vector<16x32xf32>
    %60 = arith.mulf %59, %58 : vector<16x32xf32>
    %61 = vector.broadcast %56 : vector<16x1xf32> to vector<16x32xf32>
    %62 = arith.divf %60, %61 : vector<16x32xf32>
    %63 = vector.broadcast %42 : vector<1x32xf32> to vector<16x32xf32>
    %64 = arith.addf %62, %63 : vector<16x32xf32>
    %c0_29 = arith.constant 0 : index
    %c0_30 = arith.constant 0 : index
    %65 = vector.load %arg10[%c0_29, %c0_30] : memref<16x32xf32, #tpu.memory_space<vmem>>, vector<16x32xf32>
    tpu.vector_store %arg10[%c0_29, %c0_30], %64 {strides = array<i32>} : memref<16x32xf32, #tpu.memory_space<vmem>>, vector<16x32xf32>,
    return
  }
  func.func @transform_0(%arg0: i32) -> (i32, i32) {
    %c0_i32 = arith.constant 0 : i32
    %c0_i32_0 = arith.constant 0 : i32
    return %arg0, %c0_i32 : i32, i32
  }
  func.func @transform_1(%arg0: i32) -> (i32, i32) {
    %c0_i32 = arith.constant 0 : i32
    %c0_i32_0 = arith.constant 0 : i32
    %c0_i32_1 = arith.constant 0 : i32
    return %c0_i32, %c0_i32_0 : i32, i32
  }
  func.func @transform_2(%arg0: i32) -> (i32, i32) {
    %c0_i32 = arith.constant 0 : i32
    %c0_i32_0 = arith.constant 0 : i32
    %c0_i32_1 = arith.constant 0 : i32
    return %c0_i32, %c0_i32_0 : i32, i32
  }
  func.func @transform_3(%arg0: i32) -> (i32, i32) {
    %c0_i32 = arith.constant 0 : i32
    %c0_i32_0 = arith.constant 0 : i32
    %c0_i32_1 = arith.constant 0 : i32
    return %c0_i32, %c0_i32_0 : i32, i32
  }
  func.func @transform_4(%arg0: i32) -> (i32, i32) {
    %c0_i32 = arith.constant 0 : i32
    %c0_i32_0 = arith.constant 0 : i32
    %c0_i32_1 = arith.constant 0 : i32
    return %c0_i32, %c0_i32_0 : i32, i32
  }
  func.func @transform_5(%arg0: i32) -> (i32, i32) {
    %c0_i32 = arith.constant 0 : i32
    %c0_i32_0 = arith.constant 0 : i32
    %c0_i32_1 = arith.constant 0 : i32
    return %c0_i32, %c0_i32_0 : i32, i32
  }
  func.func @transform_6(%arg0: i32) -> (i32, i32) {
    %c0_i32 = arith.constant 0 : i32
    %c0_i32_0 = arith.constant 0 : i32
    %c0_i32_1 = arith.constant 0 : i32
    return %c0_i32, %c0_i32_0 : i32, i32
  }
  func.func @transform_7(%arg0: i32) -> (i32, i32) {
    %c0_i32 = arith.constant 0 : i32
    %c0_i32_0 = arith.constant 0 : i32
    %c0_i32_1 = arith.constant 0 : i32
    return %c0_i32, %c0_i32_0 : i32, i32
  }
  func.func @transform_8(%arg0: i32) -> (i32, i32) {
    %c0_i32 = arith.constant 0 : i32
    %c0_i32_0 = arith.constant 0 : i32
    %c0_i32_1 = arith.constant 0 : i32
    return %c0_i32, %c0_i32_0 : i32, i32
  }
  func.func @transform_9(%arg0: i32) -> (i32, i32) {
    %c0_i32 = arith.constant 0 : i32
    %c0_i32_0 = arith.constant 0 : i32
    return %arg0, %c0_i32 : i32, i32
  }
}

</mosaic_0001>

<llo_original>
// kernel: encoder_forward.5
$region0: #{encoder_forward.5}
  #allocation0 [shape = 'u32[]', space=smem, size = 0x4, offset = 0x4, fixed_abs, tag = 'smem constant byte address 0x4 - core index']
  #allocation1 [shape = 'u32[144,128]{1,0:T(1,128)}', space=vmem, size = 0x12000, scoped, tag = 'internal scratch']
  %s0 = inlined_call_operand.hbm [shape: f32[16,32], index: 0, kind: input, shape index: {}]
  %s1 = inlined_call_operand.hbm [shape: f32[1,32], index: 1, kind: input, shape index: {}]
  %s2 = inlined_call_operand.hbm [shape: f32[1,32], index: 2, kind: input, shape index: {}]
  %s3 = inlined_call_operand.hbm [shape: bf16[32,64], index: 3, kind: input, shape index: {}]
  %s4 = inlined_call_operand.hbm [shape: f32[1,64], index: 4, kind: input, shape index: {}]
  %s5 = inlined_call_operand.hbm [shape: bf16[64,32], index: 5, kind: input, shape index: {}]
  %s6 = inlined_call_operand.hbm [shape: f32[1,32], index: 6, kind: input, shape index: {}]
  %s7 = inlined_call_operand.hbm [shape: f32[16,32], index: 7, kind: output, shape index: {}]
  %s8 = sld [smem:[#allocation0]]
  $region66: #{encoder_forward.5} parent=0
    _
  %s10 = ssub.s32 1, %s8
  %s11 = scalar_select 0, %s10, %s8
  $region1: #{encoder_forward.5} parent=0
    #allocation2 [shape = 'u8[8192]{0}', space=vmem, size = 0x2000, scoped, tag = 'input window, operand 0, single buffered']
    #allocation3 [shape = 's32[1]{0}', space=sflag, size = 0x4, scoped, tag = 'scoped memory for encoder_forward.5']
    #allocation4 [shape = 's32[1]{0}', space=sflag, size = 0x4, scoped, tag = 'scoped memory for encoder_forward.5']
    #allocation5 [shape = 'u8[512]{0}', space=vmem, size = 0x400, scoped, tag = 'input window, operand 1, single buffered']
    #allocation6 [shape = 's32[1]{0}', space=sflag, size = 0x4, scoped, tag = 'scoped memory for encoder_forward.5']
    #allocation7 [shape = 'u8[512]{0}', space=vmem, size = 0x400, scoped, tag = 'input window, operand 2, single buffered']
    #allocation8 [shape = 'u8[8192]{0}', space=vmem, size = 0x2000, scoped, tag = 'input window, operand 3, single buffered']
    #allocation9 [shape = 's32[1]{0}', space=sflag, size = 0x4, scoped, tag = 'scoped memory for encoder_forward.5']
    #allocation10 [shape = 'u8[512]{0}', space=vmem, size = 0x400, scoped, tag = 'input window, operand 4, single buffered']
    #allocation11 [shape = 'u8[16384]{0}', space=vmem, size = 0x4000, scoped, tag = 'input window, operand 5, single buffered']
    #allocation12 [shape = 's32[1]{0}', space=sflag, size = 0x4, scoped, tag = 'scoped memory for encoder_forward.5']
    #allocation13 [shape = 'u8[512]{0}', space=vmem, size = 0x400, scoped, tag = 'input window, operand 6, single buffered']
    #allocation14 [shape = 'u8[8192]{0}', space=vmem, size = 0x2000, scoped, tag = 'output window, operand 0, single buffered']
    %12 = vsyncpa [#allocation3], 0
    %13 = vsyncpa [#allocation6], 0
    %14 = vsyncpa [#allocation9], 0
    %15 = vsyncpa [#allocation12], 0
    %16 = vsyncpa [#allocation4], 0
    // Predicated region
    $region2: #{encoder_forward.5} parent=1 // pred_check
      _
    $region3: #{encoder_forward.5} parent=1 // pred_check_branch
      %18 = sbr.rel (0) target = $region5
    $region4: #{encoder_forward.5} parent=1 // pred_region
      %s20 = ssub.s32 256, 256
      %21 = vsyncadd [#allocation3], %s20
      %s22 = sshll.u32 [#allocation2], 4
      %s23 = int_to_ptr.vmem [resolvable:$true] %s22
      %28 = dma.hbm_to_vmem [thread:$0]  %s0, 256, %s23, [#allocation3], 128, 128, 8
    $region5: #{encoder_forward.5} parent=1 // pred_fallthru
      _
    // Predicated region
    $region6: #{encoder_forward.5} parent=1 // pred_check
      _
    $region7: #{encoder_forward.5} parent=1 // pred_check_branch
      %30 = sbr.rel (0) target = $region9
    $region8: #{encoder_forward.5} parent=1 // pred_region
      %s32 = ssub.s32 16, 16
      %33 = vsyncadd [#allocation6], %s32
      %s35 = sshll.u32 [#allocation5], 4
      %s36 = int_to_ptr.vmem [resolvable:$true] %s35
      %38 = dma.hbm_to_vmem [thread:$0]  %s1, 16, %s36, [#allocation6]
    $region9: #{encoder_forward.5} parent=1 // pred_fallthru
      _
    // Predicated region
    $region10: #{encoder_forward.5} parent=1 // pred_check
      _
    $region11: #{encoder_forward.5} parent=1 // pred_check_branch
      %40 = sbr.rel (0) target = $region13
    $region12: #{encoder_forward.5} parent=1 // pred_region
      %s42 = ssub.s32 16, 16
      %43 = vsyncadd [#allocation6], %s42
      %s45 = sshll.u32 [#allocation7], 4
      %s46 = int_to_ptr.vmem [resolvable:$true] %s45
      %48 = dma.hbm_to_vmem [thread:$0]  %s2, 16, %s46, [#allocation6]
    $region13: #{encoder_forward.5} parent=1 // pred_fallthru
      _
    // Predicated region
    $region14: #{encoder_forward.5} parent=1 // pred_check
      _
    $region15: #{encoder_forward.5} parent=1 // pred_check_branch
      %50 = sbr.rel (0) target = $region17
    $region16: #{encoder_forward.5} parent=1 // pred_region
      %s52 = ssub.s32 256, 256
      %53 = vsyncadd [#allocation9], %s52
      %s54 = sshll.u32 [#allocation8], 4
      %s55 = int_to_ptr.vmem [resolvable:$true] %s54
      %60 = dma.hbm_to_vmem [thread:$0]  %s3, 256, %s55, [#allocation9], 64, 64, 4
    $region17: #{encoder_forward.5} parent=1 // pred_fallthru
      _
    // Predicated region
    $region18: #{encoder_forward.5} parent=1 // pred_check
      _
    $region19: #{encoder_forward.5} parent=1 // pred_check_branch
      %62 = sbr.rel (0) target = $region21
    $region20: #{encoder_forward.5} parent=1 // pred_region
      %s64 = ssub.s32 16, 16
      %65 = vsyncadd [#allocation9], %s64
      %s67 = sshll.u32 [#allocation10], 4
      %s68 = int_to_ptr.vmem [resolvable:$true] %s67
      %70 = dma.hbm_to_vmem [thread:$0]  %s4, 16, %s68, [#allocation9]
    $region21: #{encoder_forward.5} parent=1 // pred_fallthru
      _
    // Predicated region
    $region22: #{encoder_forward.5} parent=1 // pred_check
      _
    $region23: #{encoder_forward.5} parent=1 // pred_check_branch
      %72 = sbr.rel (0) target = $region25
    $region24: #{encoder_forward.5} parent=1 // pred_region
      %s74 = ssub.s32 512, 512
      %75 = vsyncadd [#allocation12], %s74
      %s76 = sshll.u32 [#allocation11], 4
      %s77 = int_to_ptr.vmem [resolvable:$true] %s76
      %82 = dma.hbm_to_vmem [thread:$0]  %s5, 512, %s77, [#allocation12], 64, 64, 4
    $region25: #{encoder_forward.5} parent=1 // pred_fallthru
      _
    // Predicated region
    $region26: #{encoder_forward.5} parent=1 // pred_check
      _
    $region27: #{encoder_forward.5} parent=1 // pred_check_branch
      %84 = sbr.rel (0) target = $region29
    $region28: #{encoder_forward.5} parent=1 // pred_region
      %s86 = ssub.s32 16, 16
      %87 = vsyncadd [#allocation12], %s86
      %s89 = sshll.u32 [#allocation13], 4
      %s90 = int_to_ptr.vmem [resolvable:$true] %s89
      %92 = dma.hbm_to_vmem [thread:$0]  %s6, 16, %s90, [#allocation12]
    $region29: #{encoder_forward.5} parent=1 // pred_fallthru
      _
    // Predicated region
    $region30: #{encoder_forward.5} parent=1 // pred_check
      _
    $region31: #{encoder_forward.5} parent=1 // pred_check_branch
      %94 = sbr.rel (0) target = $region33
    $region32: #{encoder_forward.5} parent=1 // pred_region
      %95 = dma.done [#allocation3], 256
    $region33: #{encoder_forward.5} parent=1 // pred_fallthru
      _
    // Predicated region
    $region34: #{encoder_forward.5} parent=1 // pred_check
      _
    $region35: #{encoder_forward.5} parent=1 // pred_check_branch
      %97 = sbr.rel (0) target = $region37
    $region36: #{encoder_forward.5} parent=1 // pred_region
      %98 = dma.done [#allocation6], 16
    $region37: #{encoder_forward.5} parent=1 // pred_fallthru
      _
    // Predicated region
    $region38: #{encoder_forward.5} parent=1 // pred_check
      _
    $region39: #{encoder_forward.5} parent=1 // pred_check_branch
      %100 = sbr.rel (0) target = $region41
    $region40: #{encoder_forward.5} parent=1 // pred_region
      %101 = dma.done [#allocation6], 16
    $region41: #{encoder_forward.5} parent=1 // pred_fallthru
      _
    // Predicated region
    $region42: #{encoder_forward.5} parent=1 // pred_check
      _
    $region43: #{encoder_forward.5} parent=1 // pred_check_branch
      %103 = sbr.rel (0) target = $region45
    $region44: #{encoder_forward.5} parent=1 // pred_region
      %104 = dma.done [#allocation9], 256
    $region45: #{encoder_forward.5} parent=1 // pred_fallthru
      _
    // Predicated region
    $region46: #{encoder_forward.5} parent=1 // pred_check
      _
    $region47: #{encoder_forward.5} parent=1 // pred_check_branch
      %106 = sbr.rel (0) target = $region49
    $region48: #{encoder_forward.5} parent=1 // pred_region
      %107 = dma.done [#allocation9], 16
    $region49: #{encoder_forward.5} parent=1 // pred_fallthru
      _
    // Predicated region
    $region50: #{encoder_forward.5} parent=1 // pred_check
      _
    $region51: #{encoder_forward.5} parent=1 // pred_check_branch
      %109 = sbr.rel (0) target = $region53
    $region52: #{encoder_forward.5} parent=1 // pred_region
      %110 = dma.done [#allocation12], 512
    $region53: #{encoder_forward.5} parent=1 // pred_fallthru
      _
    // Predicated region
    $region54: #{encoder_forward.5} parent=1 // pred_check
      _
    $region55: #{encoder_forward.5} parent=1 // pred_check_branch
      %112 = sbr.rel (0) target = $region57
    $region56: #{encoder_forward.5} parent=1 // pred_region
      %113 = dma.done [#allocation12], 16
    $region57: #{encoder_forward.5} parent=1 // pred_fallthru
      _
    %v115 = vld [vmem:[#allocation2] sm:$0xff]
    %v116 = vld [vmem:[#allocation2 + $0x8] sm:$0xff]
    %v117 = vld [vmem:[#allocation5] sm:$0x1]
    %v118 = vld [vmem:[#allocation7] sm:$0x1]
    %vm119 = vcmask 261120
    %v120 = vsel %vm119, %v115, 0.0
    %121 = vadd.xlane.f32.xlu0 %v120
    %v122 = vpop.xlane.xlu0 %121
    %v123 = vsel %vm119, %v116, 0.0
    %124 = vadd.xlane.f32.xlu0 %v123
    %v125 = vpop.xlane.xlu0 %124
    %v126 = vrcp.pop 32.0
    %v127 = vmul.f32 %v122, %v126
    %v128 = vmul.f32 %v125, %v126
    %v129 = vsub.f32 %v115, %v127
    %v130 = vsub.f32 %v116, %v128
    %v131 = vmul.f32 %v129, %v129
    %v132 = vmul.f32 %v130, %v130
    %v133 = vsel %vm119, %v131, 0.0
    %134 = vadd.xlane.f32.xlu0 %v133
    %v135 = vpop.xlane.xlu0 %134
    %v136 = vsel %vm119, %v132, 0.0
    %137 = vadd.xlane.f32.xlu0 %v136
    %v138 = vpop.xlane.xlu0 %137
    %v139 = vmul.f32 %v135, 0.032258064
    %v140 = vmul.f32 %v138, 0.032258064
    %v141 = vrsqrt.pop %v139
    %v142 = vmul.f32 %v139, %v141
    %vm143 = vcmp.eq.f32.partialorder %v139, inf
    %v144 = vsel %vm143, %v139, %v142
    %vm145 = vcmp.eq.f32.partialorder %v139, 0.0
    %v146 = vand.u32 %v139, 2147483648
    %v147 = vsel %vm145, %v146, %v144
    %v148 = vrsqrt.pop %v140
    %v149 = vmul.f32 %v140, %v148
    %vm150 = vcmp.eq.f32.partialorder %v140, inf
    %v151 = vsel %vm150, %v140, %v149
    %vm152 = vcmp.eq.f32.partialorder %v140, 0.0
    %v153 = vand.u32 %v140, 2147483648
    %v154 = vsel %vm152, %v153, %v151
    %v155 = vadd.f32 %v147, 1e-06
    %v156 = vadd.f32 %v154, 1e-06
    %v158 = vlaneseq
    %v159 = vshrl.u32 %v158, 7
    %v160 = vsub.s32 0, %v159
    %v161 = vrot.slane %v117, %v160
    %v163 = vmul.f32 %v161, %v129
    %v164 = vmul.f32 %v161, %v130
    %v165 = vrcp.pop %v155
    %v166 = vrcp.pop %v156
    %v167 = vmul.f32 %v163, %v165
    %v168 = vmul.f32 %v164, %v166
    %v170 = vlaneseq
    %v171 = vshrl.u32 %v170, 7
    %v172 = vsub.s32 0, %v171
    %v173 = vrot.slane %v118, %v172
    %v175 = vadd.f32 %v167, %v173
    %v176 = vadd.f32 %v168, %v173
    %v177 = vpack.c.bf16 %v176, %v175
    %v178 = vld [vmem:[#allocation8] sm:$0xf]
    %v179 = vld [vmem:[#allocation8 + $0x4] sm:$0xf]
    %v180 = vld [vmem:[#allocation8 + $0x8] sm:$0xf]
    %v181 = vld [vmem:[#allocation8 + $0xc] sm:$0xf]
    %v182 = vld [vmem:[#allocation10] sm:$0x1]
    %v184 = vlaneseq
    %v185 = vshrl.u32 %v184, 7
    %v186 = vsub.s32 0, %v185
    %v187 = vrot.slane %v182, %v186
    %v193 = vunpack.c.l.b16 %v178
    %v194 = vunpack.c.l.b16 %v179
    %v195 = vunpack.c.l.b16 %v180
    %v196 = vunpack.c.l.b16 %v181
    %v197 = vpack.c.b16 %v194, %v193
    %v198 = vpack.c.b16 %v196, %v195
    %v202 = vsel %vm119, %v177, 0
    %204 = vmatprep.subr.bf16.mxu0 0
    %205 = vmatpush1.bf16.msra.mxu0 %v197
    %206 = vmatprep.subr.bf16.mxu0 0
    %207 = vmatpush1.bf16.msra.mxu0 %v198
    %208 = vmatprep.subr.bf16.mxu0 0
    %209 = vmatpush1.bf16.msra.mxu0 0
    %210 = vmatprep.subr.bf16.mxu0 0
    %211 = vmatpush1.bf16.msra.mxu0 0
    %212 = vmatprep.subr.bf16.mxu0 0
    %213 = vmatpush1.bf16.msra.mxu0 0
    %214 = vmatprep.subr.bf16.mxu0 0
    %215 = vmatpush1.bf16.msra.mxu0 0
    %216 = vmatprep.subr.bf16.mxu0 0
    %217 = vmatpush1.bf16.msra.mxu0 0
    %218 = vmatprep.subr.bf16.mxu0 0
    %219 = vmatpush1.bf16.msra.mxu0 0
    %220 = vmatprep.subr.bf16.mxu0 0
    %221 = vmatpush1.bf16.msra.mxu0 0
    %222 = vmatprep.subr.bf16.mxu0 0
    %223 = vmatpush1.bf16.msra.mxu0 0
    %224 = vmatprep.subr.bf16.mxu0 0
    %225 = vmatpush1.bf16.msra.mxu0 0
    %226 = vmatprep.subr.bf16.mxu0 0
    %227 = vmatpush1.bf16.msra.mxu0 0
    %228 = vmatprep.subr.bf16.mxu0 0
    %229 = vmatpush1.bf16.msra.mxu0 0
    %230 = vmatprep.subr.bf16.mxu0 0
    %231 = vmatpush1.bf16.msra.mxu0 0
    %232 = vmatprep.subr.bf16.mxu0 0
    %233 = vmatpush1.bf16.msra.mxu0 0
    %234 = vmatprep.subr.bf16.mxu0 0
    %235 = vmatpush1.bf16.msra.mxu0 0
    %236 = vmatprep.mubr.bf16.mxu0 0
    %237 = vmatmul.mubr.bf16.gmra.mrb[0].mxu0 %v202
    %v238 = vpop.f32.mrb[0].mxu0
    %v239 = vadd.f32 %v187, %v238
    %v240 = vpop.f32.mrb[0].mxu0
    %v241 = vpop.f32.mrb[0].mxu0
    %v242 = vadd.f32 %v187, %v241
    %v243 = vpop.f32.mrb[0].mxu0
    %244 = vdwg.mxu0
    %v245 = vmax.f32 %v239, 0.0
    %v246 = vmax.f32 %v242, 0.0
    %v247 = vpack.c.bf16 %v246, %v245
    %v248 = vld [vmem:[#allocation11] sm:$0xf]
    %v249 = vld [vmem:[#allocation11 + $0x4] sm:$0xf]
    %v250 = vld [vmem:[#allocation11 + $0x8] sm:$0xf]
    %v251 = vld [vmem:[#allocation11 + $0xc] sm:$0xf]
    %v252 = vld [vmem:[#allocation11 + $0x10] sm:$0xf]
    %v253 = vld [vmem:[#allocation11 + $0x14] sm:$0xf]
    %v254 = vld [vmem:[#allocation11 + $0x18] sm:$0xf]
    %v255 = vld [vmem:[#allocation11 + $0x1c] sm:$0xf]
    %v256 = vld [vmem:[#allocation13] sm:$0x1]
    %v258 = vlaneseq
    %v259 = vshrl.u32 %v258, 7
    %v260 = vsub.s32 0, %v259
    %v261 = vrot.slane %v256, %v260
    %v271 = vunpack.c.l.b16 %v248
    %v272 = vunpack.c.l.b16 %v249
    %v273 = vunpack.c.l.b16 %v250
    %v274 = vunpack.c.l.b16 %v251
    %v275 = vunpack.c.l.b16 %v252
    %v276 = vunpack.c.l.b16 %v253
    %v277 = vunpack.c.l.b16 %v254
    %v278 = vunpack.c.l.b16 %v255
    %v279 = vpack.c.b16 %v272, %v271
    %v280 = vpack.c.b16 %v274, %v273
    %v281 = vpack.c.b16 %v276, %v275
    %v282 = vpack.c.b16 %v278, %v277
    %vm287 = vcmask 523264
    %v289 = vsel %vm287, %v247, 0
    %291 = vmatprep.subr.bf16.mxu0 0
    %292 = vmatpush1.bf16.msra.mxu0 %v279
    %293 = vmatprep.subr.bf16.mxu0 0
    %294 = vmatpush1.bf16.msra.mxu0 %v280
    %295 = vmatprep.subr.bf16.mxu0 0
    %296 = vmatpush1.bf16.msra.mxu0 %v281
    %297 = vmatprep.subr.bf16.mxu0 0
    %298 = vmatpush1.bf16.msra.mxu0 %v282
    %299 = vmatprep.subr.bf16.mxu0 0
    %300 = vmatpush1.bf16.msra.mxu0 0
    %301 = vmatprep.subr.bf16.mxu0 0
    %302 = vmatpush1.bf16.msra.mxu0 0
    %303 = vmatprep.subr.bf16.mxu0 0
    %304 = vmatpush1.bf16.msra.mxu0 0
    %305 = vmatprep.subr.bf16.mxu0 0
    %306 = vmatpush1.bf16.msra.mxu0 0
    %307 = vmatprep.subr.bf16.mxu0 0
    %308 = vmatpush1.bf16.msra.mxu0 0
    %309 = vmatprep.subr.bf16.mxu0 0
    %310 = vmatpush1.bf16.msra.mxu0 0
    %311 = vmatprep.subr.bf16.mxu0 0
    %312 = vmatpush1.bf16.msra.mxu0 0
    %313 = vmatprep.subr.bf16.mxu0 0
    %314 = vmatpush1.bf16.msra.mxu0 0
    %315 = vmatprep.subr.bf16.mxu0 0
    %316 = vmatpush1.bf16.msra.mxu0 0
    %317 = vmatprep.subr.bf16.mxu0 0
    %318 = vmatpush1.bf16.msra.mxu0 0
    %319 = vmatprep.subr.bf16.mxu0 0
    %320 = vmatpush1.bf16.msra.mxu0 0
    %321 = vmatprep.subr.bf16.mxu0 0
    %322 = vmatpush1.bf16.msra.mxu0 0
    %323 = vmatprep.mubr.bf16.mxu0 0
    %324 = vmatmul.mubr.bf16.gmra.mrb[0].mxu0 %v289
    %v325 = vpop.f32.mrb[0].mxu0
    %v326 = vadd.f32 %v261, %v325
    %v327 = vpop.f32.mrb[0].mxu0
    %v328 = vpop.f32.mrb[0].mxu0
    %v329 = vadd.f32 %v261, %v328
    %v330 = vpop.f32.mrb[0].mxu0
    %331 = vdwg.mxu0
    %v332 = vadd.f32 %v115, %v326
    %v333 = vadd.f32 %v116, %v329
    %334 = vst.msk [vmem:[#allocation14] sm:$0xff] %vm119, %v332
    %335 = vst.msk [vmem:[#allocation14 + $0x8] sm:$0xff] %vm119, %v333
    // Predicated region
    $region58: #{encoder_forward.5} parent=1 // pred_check
      _
    $region59: #{encoder_forward.5} parent=1 // pred_check_branch
      %337 = sbr.rel (0) target = $region61
    $region60: #{encoder_forward.5} parent=1 // pred_region
      %s339 = ssub.s32 256, 256
      %340 = vsyncadd [#allocation4], %s339
      %s341 = sshll.u32 [#allocation14], 4
      %s342 = int_to_ptr.vmem [resolvable:$true] %s341
      %347 = dma.vmem_to_hbm [thread:$0]  %s342, 256, %s7, [#allocation4], 128, 128, 8
    $region61: #{encoder_forward.5} parent=1 // pred_fallthru
      _
    // Predicated region
    $region62: #{encoder_forward.5} parent=1 // pred_check
      _
    $region63: #{encoder_forward.5} parent=1 // pred_check_branch
      %349 = sbr.rel (0) target = $region65
    $region64: #{encoder_forward.5} parent=1 // pred_region
      %350 = dma.done [#allocation4], 256
    $region65: #{encoder_forward.5} parent=1 // pred_fallthru
      _
    %351 = vsyncpa [#allocation3], 1
    %352 = vsyncpa [#allocation6], 1
    %353 = vsyncpa [#allocation9], 1
    %354 = vsyncpa [#allocation12], 1
    %355 = vsyncpa [#allocation4], 1

// kernel: encoder_forward.7
$region0: #{encoder_forward.7}
  #allocation0 [shape = 'u32[]', space=smem, size = 0x4, offset = 0x4, fixed_abs, tag = 'smem constant byte address 0x4 - core index']
  #allocation1 [shape = 'u32[144,128]{1,0:T(1,128)}', space=vmem, size = 0x12000, scoped, tag = 'internal scratch']
  %s0 = inlined_call_operand.hbm [shape: f32[16,32], index: 0, kind: input, shape index: {}]
  %s1 = inlined_call_operand.hbm [shape: f32[1,32], index: 1, kind: input, shape index: {}]
  %s2 = inlined_call_operand.hbm [shape: f32[1,32], index: 2, kind: input, shape index: {}]
  %s3 = inlined_call_operand.hbm [shape: bf16[32,64], index: 3, kind: input, shape index: {}]
  %s4 = inlined_call_operand.hbm [shape: f32[1,64], index: 4, kind: input, shape index: {}]
  %s5 = inlined_call_operand.hbm [shape: bf16[64,32], index: 5, kind: input, shape index: {}]
  %s6 = inlined_call_operand.hbm [shape: f32[1,32], index: 6, kind: input, shape index: {}]
  %s7 = inlined_call_operand.hbm [shape: f32[1,32], index: 7, kind: input, shape index: {}]
  %s8 = inlined_call_operand.hbm [shape: f32[1,32], index: 8, kind: input, shape index: {}]
  %s9 = inlined_call_operand.hbm [shape: f32[16,32], index: 9, kind: output, shape index: {}]
  %s10 = sld [smem:[#allocation0]]
  $region82: #{encoder_forward.7} parent=0
    _
  %s12 = ssub.s32 1, %s10
  %s13 = scalar_select 0, %s12, %s10
  $region1: #{encoder_forward.7} parent=0
    #allocation2 [shape = 'u8[8192]{0}', space=vmem, size = 0x2000, scoped, tag = 'input window, operand 0, single buffered']
    #allocation3 [shape = 's32[1]{0}', space=sflag, size = 0x4, scoped, tag = 'scoped memory for encoder_forward.7']
    #allocation4 [shape = 's32[1]{0}', space=sflag, size = 0x4, scoped, tag = 'scoped memory for encoder_forward.7']
    #allocation5 [shape = 'u8[512]{0}', space=vmem, size = 0x400, scoped, tag = 'input window, operand 1, single buffered']
    #allocation6 [shape = 's32[1]{0}', space=sflag, size = 0x4, scoped, tag = 'scoped memory for encoder_forward.7']
    #allocation7 [shape = 'u8[512]{0}', space=vmem, size = 0x400, scoped, tag = 'input window, operand 2, single buffered']
    #allocation8 [shape = 'u8[8192]{0}', space=vmem, size = 0x2000, scoped, tag = 'input window, operand 3, single buffered']
    #allocation9 [shape = 's32[1]{0}', space=sflag, size = 0x4, scoped, tag = 'scoped memory for encoder_forward.7']
    #allocation10 [shape = 'u8[512]{0}', space=vmem, size = 0x400, scoped, tag = 'input window, operand 4, single buffered']
    #allocation11 [shape = 'u8[16384]{0}', space=vmem, size = 0x4000, scoped, tag = 'input window, operand 5, single buffered']
    #allocation12 [shape = 's32[1]{0}', space=sflag, size = 0x4, scoped, tag = 'scoped memory for encoder_forward.7']
    #allocation13 [shape = 'u8[512]{0}', space=vmem, size = 0x400, scoped, tag = 'input window, operand 6, single buffered']
    #allocation14 [shape = 'u8[512]{0}', space=vmem, size = 0x400, scoped, tag = 'input window, operand 7, single buffered']
    #allocation15 [shape = 's32[1]{0}', space=sflag, size = 0x4, scoped, tag = 'scoped memory for encoder_forward.7']
    #allocation16 [shape = 'u8[512]{0}', space=vmem, size = 0x400, scoped, tag = 'input window, operand 8, single buffered']
    #allocation17 [shape = 'u8[8192]{0}', space=vmem, size = 0x2000, scoped, tag = 'output window, operand 0, single buffered']
    %14 = vsyncpa [#allocation3], 0
    %15 = vsyncpa [#allocation6], 0
    %16 = vsyncpa [#allocation9], 0
    %17 = vsyncpa [#allocation12], 0
    %18 = vsyncpa [#allocation15], 0
    %19 = vsyncpa [#allocation4], 0
    // Predicated region
    $region2: #{encoder_forward.7} parent=1 // pred_check
      _
    $region3: #{encoder_forward.7} parent=1 // pred_check_branch
      %21 = sbr.rel (0) target = $region5
    $region4: #{encoder_forward.7} parent=1 // pred_region
      %s23 = ssub.s32 256, 256
      %24 = vsyncadd [#allocation3], %s23
      %s25 = sshll.u32 [#allocation2], 4
      %s26 = int_to_ptr.vmem [resolvable:$true] %s25
      %31 = dma.hbm_to_vmem [thread:$0]  %s0, 256, %s26, [#allocation3], 128, 128, 8
    $region5: #{encoder_forward.7} parent=1 // pred_fallthru
      _
    // Predicated region
    $region6: #{encoder_forward.7} parent=1 // pred_check
      _
    $region7: #{encoder_forward.7} parent=1 // pred_check_branch
      %33 = sbr.rel (0) target = $region9
    $region8: #{encoder_forward.7} parent=1 // pred_region
      %s35 = ssub.s32 16, 16
      %36 = vsyncadd [#allocation6], %s35
      %s38 = sshll.u32 [#allocation5], 4
      %s39 = int_to_ptr.vmem [resolvable:$true] %s38
      %41 = dma.hbm_to_vmem [thread:$0]  %s1, 16, %s39, [#allocation6]
    $region9: #{encoder_forward.7} parent=1 // pred_fallthru
      _
    // Predicated region
    $region10: #{encoder_forward.7} parent=1 // pred_check
      _
    $region11: #{encoder_forward.7} parent=1 // pred_check_branch
      %43 = sbr.rel (0) target = $region13
    $region12: #{encoder_forward.7} parent=1 // pred_region
      %s45 = ssub.s32 16, 16
      %46 = vsyncadd [#allocation6], %s45
      %s48 = sshll.u32 [#allocation7], 4
      %s49 = int_to_ptr.vmem [resolvable:$true] %s48
      %51 = dma.hbm_to_vmem [thread:$0]  %s2, 16, %s49, [#allocation6]
    $region13: #{encoder_forward.7} parent=1 // pred_fallthru
      _
    // Predicated region
    $region14: #{encoder_forward.7} parent=1 // pred_check
      _
    $region15: #{encoder_forward.7} parent=1 // pred_check_branch
      %53 = sbr.rel (0) target = $region17
    $region16: #{encoder_forward.7} parent=1 // pred_region
      %s55 = ssub.s32 256, 256
      %56 = vsyncadd [#allocation9], %s55
      %s57 = sshll.u32 [#allocation8], 4
      %s58 = int_to_ptr.vmem [resolvable:$true] %s57
      %63 = dma.hbm_to_vmem [thread:$0]  %s3, 256, %s58, [#allocation9], 64, 64, 4
    $region17: #{encoder_forward.7} parent=1 // pred_fallthru
      _
    // Predicated region
    $region18: #{encoder_forward.7} parent=1 // pred_check
      _
    $region19: #{encoder_forward.7} parent=1 // pred_check_branch
      %65 = sbr.rel (0) target = $region21
    $region20: #{encoder_forward.7} parent=1 // pred_region
      %s67 = ssub.s32 16, 16
      %68 = vsyncadd [#allocation9], %s67
      %s70 = sshll.u32 [#allocation10], 4
      %s71 = int_to_ptr.vmem [resolvable:$true] %s70
      %73 = dma.hbm_to_vmem [thread:$0]  %s4, 16, %s71, [#allocation9]
    $region21: #{encoder_forward.7} parent=1 // pred_fallthru
      _
    // Predicated region
    $region22: #{encoder_forward.7} parent=1 // pred_check
      _
    $region23: #{encoder_forward.7} parent=1 // pred_check_branch
      %75 = sbr.rel (0) target = $region25
    $region24: #{encoder_forward.7} parent=1 // pred_region
      %s77 = ssub.s32 512, 512
      %78 = vsyncadd [#allocation12], %s77
      %s79 = sshll.u32 [#allocation11], 4
      %s80 = int_to_ptr.vmem [resolvable:$true] %s79
      %85 = dma.hbm_to_vmem [thread:$0]  %s5, 512, %s80, [#allocation12], 64, 64, 4
    $region25: #{encoder_forward.7} parent=1 // pred_fallthru
      _
    // Predicated region
    $region26: #{encoder_forward.7} parent=1 // pred_check
      _
    $region27: #{encoder_forward.7} parent=1 // pred_check_branch
      %87 = sbr.rel (0) target = $region29
    $region28: #{encoder_forward.7} parent=1 // pred_region
      %s89 = ssub.s32 16, 16
      %90 = vsyncadd [#allocation12], %s89
      %s92 = sshll.u32 [#allocation13], 4
      %s93 = int_to_ptr.vmem [resolvable:$true] %s92
      %95 = dma.hbm_to_vmem [thread:$0]  %s6, 16, %s93, [#allocation12]
    $region29: #{encoder_forward.7} parent=1 // pred_fallthru
      _
    // Predicated region
    $region30: #{encoder_forward.7} parent=1 // pred_check
      _
    $region31: #{encoder_forward.7} parent=1 // pred_check_branch
      %97 = sbr.rel (0) target = $region33
    $region32: #{encoder_forward.7} parent=1 // pred_region
      %s99 = ssub.s32 16, 16
      %100 = vsyncadd [#allocation15], %s99
      %s102 = sshll.u32 [#allocation14], 4
      %s103 = int_to_ptr.vmem [resolvable:$true] %s102
      %105 = dma.hbm_to_vmem [thread:$0]  %s7, 16, %s103, [#allocation15]
    $region33: #{encoder_forward.7} parent=1 // pred_fallthru
      _
    // Predicated region
    $region34: #{encoder_forward.7} parent=1 // pred_check
      _
    $region35: #{encoder_forward.7} parent=1 // pred_check_branch
      %107 = sbr.rel (0) target = $region37
    $region36: #{encoder_forward.7} parent=1 // pred_region
      %s109 = ssub.s32 16, 16
      %110 = vsyncadd [#allocation15], %s109
      %s112 = sshll.u32 [#allocation16], 4
      %s113 = int_to_ptr.vmem [resolvable:$true] %s112
      %115 = dma.hbm_to_vmem [thread:$0]  %s8, 16, %s113, [#allocation15]
    $region37: #{encoder_forward.7} parent=1 // pred_fallthru
      _
    // Predicated region
    $region38: #{encoder_forward.7} parent=1 // pred_check
      _
    $region39: #{encoder_forward.7} parent=1 // pred_check_branch
      %117 = sbr.rel (0) target = $region41
    $region40: #{encoder_forward.7} parent=1 // pred_region
      %118 = dma.done [#allocation3], 256
    $region41: #{encoder_forward.7} parent=1 // pred_fallthru
      _
    // Predicated region
    $region42: #{encoder_forward.7} parent=1 // pred_check
      _
    $region43: #{encoder_forward.7} parent=1 // pred_check_branch
      %120 = sbr.rel (0) target = $region45
    $region44: #{encoder_forward.7} parent=1 // pred_region
      %121 = dma.done [#allocation6], 16
    $region45: #{encoder_forward.7} parent=1 // pred_fallthru
      _
    // Predicated region
    $region46: #{encoder_forward.7} parent=1 // pred_check
      _
    $region47: #{encoder_forward.7} parent=1 // pred_check_branch
      %123 = sbr.rel (0) target = $region49
    $region48: #{encoder_forward.7} parent=1 // pred_region
      %124 = dma.done [#allocation6], 16
    $region49: #{encoder_forward.7} parent=1 // pred_fallthru
      _
    // Predicated region
    $region50: #{encoder_forward.7} parent=1 // pred_check
      _
    $region51: #{encoder_forward.7} parent=1 // pred_check_branch
      %126 = sbr.rel (0) target = $region53
    $region52: #{encoder_forward.7} parent=1 // pred_region
      %127 = dma.done [#allocation9], 256
    $region53: #{encoder_forward.7} parent=1 // pred_fallthru
      _
    // Predicated region
    $region54: #{encoder_forward.7} parent=1 // pred_check
      _
    $region55: #{encoder_forward.7} parent=1 // pred_check_branch
      %129 = sbr.rel (0) target = $region57
    $region56: #{encoder_forward.7} parent=1 // pred_region
      %130 = dma.done [#allocation9], 16
    $region57: #{encoder_forward.7} parent=1 // pred_fallthru
      _
    // Predicated region
    $region58: #{encoder_forward.7} parent=1 // pred_check
      _
    $region59: #{encoder_forward.7} parent=1 // pred_check_branch
      %132 = sbr.rel (0) target = $region61
    $region60: #{encoder_forward.7} parent=1 // pred_region
      %133 = dma.done [#allocation12], 512
    $region61: #{encoder_forward.7} parent=1 // pred_fallthru
      _
    // Predicated region
    $region62: #{encoder_forward.7} parent=1 // pred_check
      _
    $region63: #{encoder_forward.7} parent=1 // pred_check_branch
      %135 = sbr.rel (0) target = $region65
    $region64: #{encoder_forward.7} parent=1 // pred_region
      %136 = dma.done [#allocation12], 16
    $region65: #{encoder_forward.7} parent=1 // pred_fallthru
      _
    // Predicated region
    $region66: #{encoder_forward.7} parent=1 // pred_check
      _
    $region67: #{encoder_forward.7} parent=1 // pred_check_branch
      %138 = sbr.rel (0) target = $region69
    $region68: #{encoder_forward.7} parent=1 // pred_region
      %139 = dma.done [#allocation15], 16
    $region69: #{encoder_forward.7} parent=1 // pred_fallthru
      _
    // Predicated region
    $region70: #{encoder_forward.7} parent=1 // pred_check
      _
    $region71: #{encoder_forward.7} parent=1 // pred_check_branch
      %141 = sbr.rel (0) target = $region73
    $region72: #{encoder_forward.7} parent=1 // pred_region
      %142 = dma.done [#allocation15], 16
    $region73: #{encoder_forward.7} parent=1 // pred_fallthru
      _
    %v144 = vld [vmem:[#allocation2] sm:$0xff]
    %v145 = vld [vmem:[#allocation2 + $0x8] sm:$0xff]
    %v146 = vld [vmem:[#allocation5] sm:$0x1]
    %v147 = vld [vmem:[#allocation7] sm:$0x1]
    %vm148 = vcmask 261120
    %v149 = vsel %vm148, %v144, 0.0
    %150 = vadd.xlane.f32.xlu0 %v149
    %v151 = vpop.xlane.xlu0 %150
    %v152 = vsel %vm148, %v145, 0.0
    %153 = vadd.xlane.f32.xlu0 %v152
    %v154 = vpop.xlane.xlu0 %153
    %v155 = vrcp.pop 32.0
    %v156 = vmul.f32 %v151, %v155
    %v157 = vmul.f32 %v154, %v155
    %v158 = vsub.f32 %v144, %v156
    %v159 = vsub.f32 %v145, %v157
    %v160 = vmul.f32 %v158, %v158
    %v161 = vmul.f32 %v159, %v159
    %v162 = vsel %vm148, %v160, 0.0
    %163 = vadd.xlane.f32.xlu0 %v162
    %v164 = vpop.xlane.xlu0 %163
    %v165 = vsel %vm148, %v161, 0.0
    %166 = vadd.xlane.f32.xlu0 %v165
    %v167 = vpop.xlane.xlu0 %166
    %v168 = vmul.f32 %v164, 0.032258064
    %v169 = vmul.f32 %v167, 0.032258064
    %v170 = vrsqrt.pop %v168
    %v171 = vmul.f32 %v168, %v170
    %vm172 = vcmp.eq.f32.partialorder %v168, inf
    %v173 = vsel %vm172, %v168, %v171
    %vm174 = vcmp.eq.f32.partialorder %v168, 0.0
    %v175 = vand.u32 %v168, 2147483648
    %v176 = vsel %vm174, %v175, %v173
    %v177 = vrsqrt.pop %v169
    %v178 = vmul.f32 %v169, %v177
    %vm179 = vcmp.eq.f32.partialorder %v169, inf
    %v180 = vsel %vm179, %v169, %v178
    %vm181 = vcmp.eq.f32.partialorder %v169, 0.0
    %v182 = vand.u32 %v169, 2147483648
    %v183 = vsel %vm181, %v182, %v180
    %v184 = vadd.f32 %v176, 1e-06
    %v185 = vadd.f32 %v183, 1e-06
    %v187 = vlaneseq
    %v188 = vshrl.u32 %v187, 7
    %v189 = vsub.s32 0, %v188
    %v190 = vrot.slane %v146, %v189
    %v192 = vmul.f32 %v190, %v158
    %v193 = vmul.f32 %v190, %v159
    %v194 = vrcp.pop %v184
    %v195 = vrcp.pop %v185
    %v196 = vmul.f32 %v192, %v194
    %v197 = vmul.f32 %v193, %v195
    %v199 = vlaneseq
    %v200 = vshrl.u32 %v199, 7
    %v201 = vsub.s32 0, %v200
    %v202 = vrot.slane %v147, %v201
    %v204 = vadd.f32 %v196, %v202
    %v205 = vadd.f32 %v197, %v202
    %v206 = vpack.c.bf16 %v205, %v204
    %v207 = vld [vmem:[#allocation8] sm:$0xf]
    %v208 = vld [vmem:[#allocation8 + $0x4] sm:$0xf]
    %v209 = vld [vmem:[#allocation8 + $0x8] sm:$0xf]
    %v210 = vld [vmem:[#allocation8 + $0xc] sm:$0xf]
    %v211 = vld [vmem:[#allocation10] sm:$0x1]
    %v213 = vlaneseq
    %v214 = vshrl.u32 %v213, 7
    %v215 = vsub.s32 0, %v214
    %v216 = vrot.slane %v211, %v215
    %v222 = vunpack.c.l.b16 %v207
    %v223 = vunpack.c.l.b16 %v208
    %v224 = vunpack.c.l.b16 %v209
    %v225 = vunpack.c.l.b16 %v210
    %v226 = vpack.c.b16 %v223, %v222
    %v227 = vpack.c.b16 %v225, %v224
    %v231 = vsel %vm148, %v206, 0
    %233 = vmatprep.subr.bf16.mxu0 0
    %234 = vmatpush1.bf16.msra.mxu0 %v226
    %235 = vmatprep.subr.bf16.mxu0 0
    %236 = vmatpush1.bf16.msra.mxu0 %v227
    %237 = vmatprep.subr.bf16.mxu0 0
    %238 = vmatpush1.bf16.msra.mxu0 0
    %239 = vmatprep.subr.bf16.mxu0 0
    %240 = vmatpush1.bf16.msra.mxu0 0
    %241 = vmatprep.subr.bf16.mxu0 0
    %242 = vmatpush1.bf16.msra.mxu0 0
    %243 = vmatprep.subr.bf16.mxu0 0
    %244 = vmatpush1.bf16.msra.mxu0 0
    %245 = vmatprep.subr.bf16.mxu0 0
    %246 = vmatpush1.bf16.msra.mxu0 0
    %247 = vmatprep.subr.bf16.mxu0 0
    %248 = vmatpush1.bf16.msra.mxu0 0
    %249 = vmatprep.subr.bf16.mxu0 0
    %250 = vmatpush1.bf16.msra.mxu0 0
    %251 = vmatprep.subr.bf16.mxu0 0
    %252 = vmatpush1.bf16.msra.mxu0 0
    %253 = vmatprep.subr.bf16.mxu0 0
    %254 = vmatpush1.bf16.msra.mxu0 0
    %255 = vmatprep.subr.bf16.mxu0 0
    %256 = vmatpush1.bf16.msra.mxu0 0
    %257 = vmatprep.subr.bf16.mxu0 0
    %258 = vmatpush1.bf16.msra.mxu0 0
    %259 = vmatprep.subr.bf16.mxu0 0
    %260 = vmatpush1.bf16.msra.mxu0 0
    %261 = vmatprep.subr.bf16.mxu0 0
    %262 = vmatpush1.bf16.msra.mxu0 0
    %263 = vmatprep.subr.bf16.mxu0 0
    %264 = vmatpush1.bf16.msra.mxu0 0
    %265 = vmatprep.mubr.bf16.mxu0 0
    %266 = vmatmul.mubr.bf16.gmra.mrb[0].mxu0 %v231
    %v267 = vpop.f32.mrb[0].mxu0
    %v268 = vadd.f32 %v216, %v267
    %v269 = vpop.f32.mrb[0].mxu0
    %v270 = vpop.f32.mrb[0].mxu0
    %v271 = vadd.f32 %v216, %v270
    %v272 = vpop.f32.mrb[0].mxu0
    %273 = vdwg.mxu0
    %v274 = vmax.f32 %v268, 0.0
    %v275 = vmax.f32 %v271, 0.0
    %v276 = vpack.c.bf16 %v275, %v274
    %v277 = vld [vmem:[#allocation11] sm:$0xf]
    %v278 = vld [vmem:[#allocation11 + $0x4] sm:$0xf]
    %v279 = vld [vmem:[#allocation11 + $0x8] sm:$0xf]
    %v280 = vld [vmem:[#allocation11 + $0xc] sm:$0xf]
    %v281 = vld [vmem:[#allocation11 + $0x10] sm:$0xf]
    %v282 = vld [vmem:[#allocation11 + $0x14] sm:$0xf]
    %v283 = vld [vmem:[#allocation11 + $0x18] sm:$0xf]
    %v284 = vld [vmem:[#allocation11 + $0x1c] sm:$0xf]
    %v285 = vld [vmem:[#allocation13] sm:$0x1]
    %v287 = vlaneseq
    %v288 = vshrl.u32 %v287, 7
    %v289 = vsub.s32 0, %v288
    %v290 = vrot.slane %v285, %v289
    %v300 = vunpack.c.l.b16 %v277
    %v301 = vunpack.c.l.b16 %v278
    %v302 = vunpack.c.l.b16 %v279
    %v303 = vunpack.c.l.b16 %v280
    %v304 = vunpack.c.l.b16 %v281
    %v305 = vunpack.c.l.b16 %v282
    %v306 = vunpack.c.l.b16 %v283
    %v307 = vunpack.c.l.b16 %v284
    %v308 = vpack.c.b16 %v301, %v300
    %v309 = vpack.c.b16 %v303, %v302
    %v310 = vpack.c.b16 %v305, %v304
    %v311 = vpack.c.b16 %v307, %v306
    %vm316 = vcmask 523264
    %v318 = vsel %vm316, %v276, 0
    %320 = vmatprep.subr.bf16.mxu0 0
    %321 = vmatpush1.bf16.msra.mxu0 %v308
    %322 = vmatprep.subr.bf16.mxu0 0
    %323 = vmatpush1.bf16.msra.mxu0 %v309
    %324 = vmatprep.subr.bf16.mxu0 0
    %325 = vmatpush1.bf16.msra.mxu0 %v310
    %326 = vmatprep.subr.bf16.mxu0 0
    %327 = vmatpush1.bf16.msra.mxu0 %v311
    %328 = vmatprep.subr.bf16.mxu0 0
    %329 = vmatpush1.bf16.msra.mxu0 0
    %330 = vmatprep.subr.bf16.mxu0 0
    %331 = vmatpush1.bf16.msra.mxu0 0
    %332 = vmatprep.subr.bf16.mxu0 0
    %333 = vmatpush1.bf16.msra.mxu0 0
    %334 = vmatprep.subr.bf16.mxu0 0
    %335 = vmatpush1.bf16.msra.mxu0 0
    %336 = vmatprep.subr.bf16.mxu0 0
    %337 = vmatpush1.bf16.msra.mxu0 0
    %338 = vmatprep.subr.bf16.mxu0 0
    %339 = vmatpush1.bf16.msra.mxu0 0
    %340 = vmatprep.subr.bf16.mxu0 0
    %341 = vmatpush1.bf16.msra.mxu0 0
    %342 = vmatprep.subr.bf16.mxu0 0
    %343 = vmatpush1.bf16.msra.mxu0 0
    %344 = vmatprep.subr.bf16.mxu0 0
    %345 = vmatpush1.bf16.msra.mxu0 0
    %346 = vmatprep.subr.bf16.mxu0 0
    %347 = vmatpush1.bf16.msra.mxu0 0
    %348 = vmatprep.subr.bf16.mxu0 0
    %349 = vmatpush1.bf16.msra.mxu0 0
    %350 = vmatprep.subr.bf16.mxu0 0
    %351 = vmatpush1.bf16.msra.mxu0 0
    %352 = vmatprep.mubr.bf16.mxu0 0
    %353 = vmatmul.mubr.bf16.gmra.mrb[0].mxu0 %v318
    %v354 = vpop.f32.mrb[0].mxu0
    %v355 = vadd.f32 %v290, %v354
    %v356 = vpop.f32.mrb[0].mxu0
    %v357 = vpop.f32.mrb[0].mxu0
    %v358 = vadd.f32 %v290, %v357
    %v359 = vpop.f32.mrb[0].mxu0
    %360 = vdwg.mxu0
    %v361 = vadd.f32 %v144, %v355
    %v362 = vadd.f32 %v145, %v358
    %v363 = vld [vmem:[#allocation14] sm:$0x1]
    %v364 = vld [vmem:[#allocation16] sm:$0x1]
    %v365 = vsel %vm148, %v361, 0.0
    %366 = vadd.xlane.f32.xlu0 %v365
    %v367 = vpop.xlane.xlu0 %366
    %v368 = vsel %vm148, %v362, 0.0
    %369 = vadd.xlane.f32.xlu0 %v368
    %v370 = vpop.xlane.xlu0 %369
    %v371 = vmul.f32 %v367, %v155
    %v372 = vmul.f32 %v370, %v155
    %v373 = vsub.f32 %v361, %v371
    %v374 = vsub.f32 %v362, %v372
    %v375 = vmul.f32 %v373, %v373
    %v376 = vmul.f32 %v374, %v374
    %v377 = vsel %vm148, %v375, 0.0
    %378 = vadd.xlane.f32.xlu0 %v377
    %v379 = vpop.xlane.xlu0 %378
    %v380 = vsel %vm148, %v376, 0.0
    %381 = vadd.xlane.f32.xlu0 %v380
    %v382 = vpop.xlane.xlu0 %381
    %v383 = vmul.f32 %v379, 0.032258064
    %v384 = vmul.f32 %v382, 0.032258064
    %v385 = vrsqrt.pop %v383
    %v386 = vmul.f32 %v383, %v385
    %vm387 = vcmp.eq.f32.partialorder %v383, inf
    %v388 = vsel %vm387, %v383, %v386
    %vm389 = vcmp.eq.f32.partialorder %v383, 0.0
    %v390 = vand.u32 %v383, 2147483648
    %v391 = vsel %vm389, %v390, %v388
    %v392 = vrsqrt.pop %v384
    %v393 = vmul.f32 %v384, %v392
    %vm394 = vcmp.eq.f32.partialorder %v384, inf
    %v395 = vsel %vm394, %v384, %v393
    %vm396 = vcmp.eq.f32.partialorder %v384, 0.0
    %v397 = vand.u32 %v384, 2147483648
    %v398 = vsel %vm396, %v397, %v395
    %v399 = vadd.f32 %v391, 1e-06
    %v400 = vadd.f32 %v398, 1e-06
    %v402 = vlaneseq
    %v403 = vshrl.u32 %v402, 7
    %v404 = vsub.s32 0, %v403
    %v405 = vrot.slane %v363, %v404
    %v407 = vmul.f32 %v405, %v373
    %v408 = vmul.f32 %v405, %v374
    %v409 = vrcp.pop %v399
    %v410 = vmul.f32 %v407, %v409
    %v411 = vrcp.pop %v400
    %v412 = vmul.f32 %v408, %v411
    %v414 = vlaneseq
    %v415 = vshrl.u32 %v414, 7
    %v416 = vsub.s32 0, %v415
    %v417 = vrot.slane %v364, %v416
    %v419 = vadd.f32 %v410, %v417
    %v420 = vadd.f32 %v412, %v417
    %421 = vst.msk [vmem:[#allocation17] sm:$0xff] %vm148, %v419
    %422 = vst.msk [vmem:[#allocation17 + $0x8] sm:$0xff] %vm148, %v420
    // Predicated region
    $region74: #{encoder_forward.7} parent=1 // pred_check
      _
    $region75: #{encoder_forward.7} parent=1 // pred_check_branch
      %424 = sbr.rel (0) target = $region77
    $region76: #{encoder_forward.7} parent=1 // pred_region
      %s426 = ssub.s32 256, 256
      %427 = vsyncadd [#allocation4], %s426
      %s428 = sshll.u32 [#allocation17], 4
      %s429 = int_to_ptr.vmem [resolvable:$true] %s428
      %434 = dma.vmem_to_hbm [thread:$0]  %s429, 256, %s9, [#allocation4], 128, 128, 8
    $region77: #{encoder_forward.7} parent=1 // pred_fallthru
      _
    // Predicated region
    $region78: #{encoder_forward.7} parent=1 // pred_check
      _
    $region79: #{encoder_forward.7} parent=1 // pred_check_branch
      %436 = sbr.rel (0) target = $region81
    $region80: #{encoder_forward.7} parent=1 // pred_region
      %437 = dma.done [#allocation4], 256
    $region81: #{encoder_forward.7} parent=1 // pred_fallthru
      _
    %438 = vsyncpa [#allocation3], 1
    %439 = vsyncpa [#allocation6], 1
    %440 = vsyncpa [#allocation9], 1
    %441 = vsyncpa [#allocation12], 1
    %442 = vsyncpa [#allocation15], 1
    %443 = vsyncpa [#allocation4], 1

// kernel: encoder_forward.4
$region0: #{encoder_forward.4}
  #allocation0 [shape = 'u32[]', space=smem, size = 0x4, offset = 0x4, fixed_abs, tag = 'smem constant byte address 0x4 - core index']
  #allocation1 [shape = 'u32[144,128]{1,0:T(1,128)}', space=vmem, size = 0x12000, scoped, tag = 'internal scratch']
  #allocation2 [shape = 'bf16[8,64]{1,0:T(8,128)(2,1)}', space=vmem, size = 0x800, scoped, tag = 'scratch operand']
  #allocation3 [shape = 'f32[8,32]{1,0:T(8,128)}', space=vmem, size = 0x1000, scoped, tag = 'scratch operand']
  %s0 = inlined_call_operand.hbm [shape: f32[2,8,32], index: 0, kind: input, shape index: {}]
  %s1 = inlined_call_operand.hbm [shape: f32[2,1,8], index: 1, kind: input, shape index: {}]
  %s2 = inlined_call_operand.hbm [shape: f32[1,32], index: 2, kind: input, shape index: {}]
  %s3 = inlined_call_operand.hbm [shape: f32[1,32], index: 3, kind: input, shape index: {}]
  %s4 = inlined_call_operand.hbm [shape: bf16[32,32], index: 4, kind: input, shape index: {}]
  %s5 = inlined_call_operand.hbm [shape: f32[1,32], index: 5, kind: input, shape index: {}]
  %s6 = inlined_call_operand.hbm [shape: bf16[32,64], index: 6, kind: input, shape index: {}]
  %s7 = inlined_call_operand.hbm [shape: f32[1,64], index: 7, kind: input, shape index: {}]
  %s8 = inlined_call_operand.hbm [shape: bf16[32,32], index: 8, kind: input, shape index: {}]
  %s9 = inlined_call_operand.hbm [shape: f32[1,32], index: 9, kind: input, shape index: {}]
  %s10 = inlined_call_operand.hbm [shape: f32[2,8,32], index: 10, kind: output, shape index: {}]
  %s11 = sld [smem:[#allocation0]]
  $region117: #{encoder_forward.4} parent=0
    _
  %s13 = ssub.s32 1, %s11
  %s14 = scalar_select 0, %s13, %s11
  $region1: #{encoder_forward.4} parent=0
    #allocation4 [shape = 'u8[8192]{0}', space=vmem, size = 0x2000, scoped, tag = 'input window, operand 0']
    #allocation5 [shape = 's32[2]{0}', space=sflag, size = 0x8, scoped, tag = 'scoped memory for encoder_forward.4']
    #allocation6 [shape = 's32[2]{0}', space=sflag, size = 0x8, scoped, tag = 'scoped memory for encoder_forward.4']
    #allocation7 [shape = 'u8[1024]{0}', space=vmem, size = 0x400, scoped, tag = 'input window, operand 1']
    #allocation8 [shape = 's32[2]{0}', space=sflag, size = 0x8, scoped, tag = 'scoped memory for encoder_forward.4']
    #allocation9 [shape = 'u8[512]{0}', space=vmem, size = 0x400, scoped, tag = 'input window, operand 2, single buffered']
    #allocation10 [shape = 'u8[512]{0}', space=vmem, size = 0x400, scoped, tag = 'input window, operand 3, single buffered']
    #allocation11 [shape = 's32[1]{0}', space=sflag, size = 0x4, scoped, tag = 'scoped memory for encoder_forward.4']
    #allocation12 [shape = 'u8[8192]{0}', space=vmem, size = 0x2000, scoped, tag = 'input window, operand 4, single buffered']
    #allocation13 [shape = 'u8[512]{0}', space=vmem, size = 0x400, scoped, tag = 'input window, operand 5, single buffered']
    #allocation14 [shape = 's32[1]{0}', space=sflag, size = 0x4, scoped, tag = 'scoped memory for encoder_forward.4']
    #allocation15 [shape = 'u8[8192]{0}', space=vmem, size = 0x2000, scoped, tag = 'input window, operand 6, single buffered']
    #allocation16 [shape = 'u8[512]{0}', space=vmem, size = 0x400, scoped, tag = 'input window, operand 7, single buffered']
    #allocation17 [shape = 's32[1]{0}', space=sflag, size = 0x4, scoped, tag = 'scoped memory for encoder_forward.4']
    #allocation18 [shape = 'u8[8192]{0}', space=vmem, size = 0x2000, scoped, tag = 'input window, operand 8, single buffered']
    #allocation19 [shape = 'u8[512]{0}', space=vmem, size = 0x400, scoped, tag = 'input window, operand 9, single buffered']
    #allocation20 [shape = 's32[1]{0}', space=sflag, size = 0x4, scoped, tag = 'scoped memory for encoder_forward.4']
    #allocation21 [shape = 'u8[8192]{0}', space=vmem, size = 0x2000, scoped, tag = 'output window, operand 0']
    %15 = vsyncpa [#allocation5], 0
    %s16 = scalar_lea.sflag [#allocation5], 1
    %17 = vsyncpa %s16, 0
    %18 = vsyncpa [#allocation8], 0
    %s19 = scalar_lea.sflag [#allocation8], 1
    %20 = vsyncpa %s19, 0
    %21 = vsyncpa [#allocation11], 0
    %22 = vsyncpa [#allocation14], 0
    %23 = vsyncpa [#allocation17], 0
    %24 = vsyncpa [#allocation20], 0
    %25 = vsyncpa [#allocation6], 0
    %s26 = scalar_lea.sflag [#allocation6], 1
    %27 = vsyncpa %s26, 0
    loop: start=0, step=1, limit=4
    $region2: #{encoder_forward.4} parent=1 // loop_pre_header
      _
    $region3: #{encoder_forward.4} parent=1 // loop_header
      %s29 = sphi 0, %s33
      %p30 = scmp.ge.s32.totalorder %s29, 4
      %s36 = sphi 0, %s48
      %s37 = sphi 0, %s44
      %s38 = sphi 0, %s36
      %s39 = sphi 0, %s37
      %s40 = sphi 0, %s38
      %s41 = sphi 0, %s39
      %s51 = sphi 0, %s53
      %s54 = sphi 0, %s51
      %s55 = sphi 0, %s54
      %s71 = sphi 0, %s55
      %s77 = sphi 0, %s79
      %s80 = sphi 0, %s77
      %s81 = sphi 0, %s80
      %s97 = sphi 0, %s81
      %s101 = sphi 0, %s101
      %s103 = sphi 0, %s101
      %s104 = sphi 0, %s103
      %s118 = sphi 0, %s104
      %s122 = sphi 0, %s122
      %s124 = sphi 0, %s122
      %s125 = sphi 0, %s124
      %s139 = sphi 0, %s125
      %s143 = sphi 0, %s143
      %s145 = sphi 0, %s143
      %s146 = sphi 0, %s145
      %s160 = sphi 0, %s146
      %s164 = sphi 0, %s164
      %s166 = sphi 0, %s164
      %s167 = sphi 0, %s166
      %s181 = sphi 0, %s167
      %s185 = sphi 0, %s185
      %s187 = sphi 0, %s185
      %s188 = sphi 0, %s187
      %s202 = sphi 0, %s188
      %s206 = sphi 0, %s206
      %s208 = sphi 0, %s206
      %s209 = sphi 0, %s208
      %s223 = sphi 0, %s209
      %s227 = sphi 0, %s227
      %s229 = sphi 0, %s227
      %s230 = sphi 0, %s229
      %s244 = sphi 0, %s230
      %s248 = sphi 0, %s248
      %s250 = sphi 0, %s248
      %s251 = sphi 0, %s250
      %s265 = sphi 0, %s251
      %s273 = sphi 0, %s275
      %s276 = sphi 0, %s273
      %s277 = sphi 0, %s276
      %s293 = sphi 0, %s277
    $region4: #{encoder_forward.4} parent=1 // loop_header_branch
      %32 = sbr.rel (%p30) target = $region8
    $region5: #{encoder_forward.4} parent=1 // loop_body
      %s34 = ssub.s32 %s29, 1
      %s35 = ssub.s32 %s29, 2
      %s42 = sadd.s32 1, %s37
      %p43 = scmp.ge.s32.totalorder %s42, 1
      %s44 = scalar_select %p43, 0, %s42
      %s45 = sadd.s32 1, %s36
      %s46 = scalar_select %p43, %s45, %s36
      %p47 = scmp.ge.s32.totalorder %s46, 2
      %s48 = scalar_select %p47, 0, %s46
      %s49 = ssub.s32 %s36, %s48
      %p50 = scmp.eq.s32.totalorder %s49, 0
      %s52 = sadd.s32 %s51, 1
      %s53 = scalar_select %p50, %s51, %s52
      %p56 = pneg %p50
      %p57 = scmp.eq.s32.totalorder %s29, 1
      %p58 = por %p56, %p57
      %p59 = scmp.ne.s32.totalorder %s51, %s54
      %p60 = scmp.eq.s32.totalorder %s29, 0
      %p61 = por %p59, %p60
      %p62 = scmp.ne.s32.totalorder %s51, %s54
      %p63 = scmp.eq.s32.totalorder %s34, 1
      %p64 = por %p62, %p63
      %p65 = scmp.ne.s32.totalorder %s54, %s55
      %p66 = scmp.eq.s32.totalorder %s34, 0
      %p67 = por %p65, %p66
      %p68 = scmp.ne.s32.totalorder %s54, %s55
      %p69 = scmp.eq.s32.totalorder %s35, 1
      %p70 = por %p68, %p69
      %p72 = scmp.ne.s32.totalorder %s55, %s71
      %p73 = scmp.eq.s32.totalorder %s35, 0
      %p74 = por %p72, %p73
      %s75 = ssub.s32 %s36, %s48
      %p76 = scmp.eq.s32.totalorder %s75, 0
      %s78 = sadd.s32 %s77, 1
      %s79 = scalar_select %p76, %s77, %s78
      %p82 = pneg %p76
      %p83 = scmp.eq.s32.totalorder %s29, 1
      %p84 = por %p82, %p83
      %p85 = scmp.ne.s32.totalorder %s77, %s80
      %p86 = scmp.eq.s32.totalorder %s29, 0
      %p87 = por %p85, %p86
      %p88 = scmp.ne.s32.totalorder %s77, %s80
      %p89 = scmp.eq.s32.totalorder %s34, 1
      %p90 = por %p88, %p89
      %p91 = scmp.ne.s32.totalorder %s80, %s81
      %p92 = scmp.eq.s32.totalorder %s34, 0
      %p93 = por %p91, %p92
      %p94 = scmp.ne.s32.totalorder %s80, %s81
      %p95 = scmp.eq.s32.totalorder %s35, 1
      %p96 = por %p94, %p95
      %p98 = scmp.ne.s32.totalorder %s81, %s97
      %p99 = scmp.eq.s32.totalorder %s35, 0
      %p100 = por %p98, %p99
      %s102 = sadd.s32 %s101, 1
      %p105 = scmp.eq.s32.totalorder %s29, 1
      %p106 = scmp.ne.s32.totalorder %s101, %s103
      %p107 = scmp.eq.s32.totalorder %s29, 0
      %p108 = por %p106, %p107
      %p109 = scmp.ne.s32.totalorder %s101, %s103
      %p110 = scmp.eq.s32.totalorder %s34, 1
      %p111 = por %p109, %p110
      %p112 = scmp.ne.s32.totalorder %s103, %s104
      %p113 = scmp.eq.s32.totalorder %s34, 0
      %p114 = por %p112, %p113
      %p115 = scmp.ne.s32.totalorder %s103, %s104
      %p116 = scmp.eq.s32.totalorder %s35, 1
      %p117 = por %p115, %p116
      %p119 = scmp.ne.s32.totalorder %s104, %s118
      %p120 = scmp.eq.s32.totalorder %s35, 0
      %p121 = por %p119, %p120
      %s123 = sadd.s32 %s122, 1
      %p126 = scmp.eq.s32.totalorder %s29, 1
      %p127 = scmp.ne.s32.totalorder %s122, %s124
      %p128 = scmp.eq.s32.totalorder %s29, 0
      %p129 = por %p127, %p128
      %p130 = scmp.ne.s32.totalorder %s122, %s124
      %p131 = scmp.eq.s32.totalorder %s34, 1
      %p132 = por %p130, %p131
      %p133 = scmp.ne.s32.totalorder %s124, %s125
      %p134 = scmp.eq.s32.totalorder %s34, 0
      %p135 = por %p133, %p134
      %p136 = scmp.ne.s32.totalorder %s124, %s125
      %p137 = scmp.eq.s32.totalorder %s35, 1
      %p138 = por %p136, %p137
      %p140 = scmp.ne.s32.totalorder %s125, %s139
      %p141 = scmp.eq.s32.totalorder %s35, 0
      %p142 = por %p140, %p141
      %s144 = sadd.s32 %s143, 1
      %p147 = scmp.eq.s32.totalorder %s29, 1
      %p148 = scmp.ne.s32.totalorder %s143, %s145
      %p149 = scmp.eq.s32.totalorder %s29, 0
      %p150 = por %p148, %p149
      %p151 = scmp.ne.s32.totalorder %s143, %s145
      %p152 = scmp.eq.s32.totalorder %s34, 1
      %p153 = por %p151, %p152
      %p154 = scmp.ne.s32.totalorder %s145, %s146
      %p155 = scmp.eq.s32.totalorder %s34, 0
      %p156 = por %p154, %p155
      %p157 = scmp.ne.s32.totalorder %s145, %s146
      %p158 = scmp.eq.s32.totalorder %s35, 1
      %p159 = por %p157, %p158
      %p161 = scmp.ne.s32.totalorder %s146, %s160
      %p162 = scmp.eq.s32.totalorder %s35, 0
      %p163 = por %p161, %p162
      %s165 = sadd.s32 %s164, 1
      %p168 = scmp.eq.s32.totalorder %s29, 1
      %p169 = scmp.ne.s32.totalorder %s164, %s166
      %p170 = scmp.eq.s32.totalorder %s29, 0
      %p171 = por %p169, %p170
      %p172 = scmp.ne.s32.totalorder %s164, %s166
      %p173 = scmp.eq.s32.totalorder %s34, 1
      %p174 = por %p172, %p173
      %p175 = scmp.ne.s32.totalorder %s166, %s167
      %p176 = scmp.eq.s32.totalorder %s34, 0
      %p177 = por %p175, %p176
      %p178 = scmp.ne.s32.totalorder %s166, %s167
      %p179 = scmp.eq.s32.totalorder %s35, 1
      %p180 = por %p178, %p179
      %p182 = scmp.ne.s32.totalorder %s167, %s181
      %p183 = scmp.eq.s32.totalorder %s35, 0
      %p184 = por %p182, %p183
      %s186 = sadd.s32 %s185, 1
      %p189 = scmp.eq.s32.totalorder %s29, 1
      %p190 = scmp.ne.s32.totalorder %s185, %s187
      %p191 = scmp.eq.s32.totalorder %s29, 0
      %p192 = por %p190, %p191
      %p193 = scmp.ne.s32.totalorder %s185, %s187
      %p194 = scmp.eq.s32.totalorder %s34, 1
      %p195 = por %p193, %p194
      %p196 = scmp.ne.s32.totalorder %s187, %s188
      %p197 = scmp.eq.s32.totalorder %s34, 0
      %p198 = por %p196, %p197
      %p199 = scmp.ne.s32.totalorder %s187, %s188
      %p200 = scmp.eq.s32.totalorder %s35, 1
      %p201 = por %p199, %p200
      %p203 = scmp.ne.s32.totalorder %s188, %s202
      %p204 = scmp.eq.s32.totalorder %s35, 0
      %p205 = por %p203, %p204
      %s207 = sadd.s32 %s206, 1
      %p210 = scmp.eq.s32.totalorder %s29, 1
      %p211 = scmp.ne.s32.totalorder %s206, %s208
      %p212 = scmp.eq.s32.totalorder %s29, 0
      %p213 = por %p211, %p212
      %p214 = scmp.ne.s32.totalorder %s206, %s208
      %p215 = scmp.eq.s32.totalorder %s34, 1
      %p216 = por %p214, %p215
      %p217 = scmp.ne.s32.totalorder %s208, %s209
      %p218 = scmp.eq.s32.totalorder %s34, 0
      %p219 = por %p217, %p218
      %p220 = scmp.ne.s32.totalorder %s208, %s209
      %p221 = scmp.eq.s32.totalorder %s35, 1
      %p222 = por %p220, %p221
      %p224 = scmp.ne.s32.totalorder %s209, %s223
      %p225 = scmp.eq.s32.totalorder %s35, 0
      %p226 = por %p224, %p225
      %s228 = sadd.s32 %s227, 1
      %p231 = scmp.eq.s32.totalorder %s29, 1
      %p232 = scmp.ne.s32.totalorder %s227, %s229
      %p233 = scmp.eq.s32.totalorder %s29, 0
      %p234 = por %p232, %p233
      %p235 = scmp.ne.s32.totalorder %s227, %s229
      %p236 = scmp.eq.s32.totalorder %s34, 1
      %p237 = por %p235, %p236
      %p238 = scmp.ne.s32.totalorder %s229, %s230
      %p239 = scmp.eq.s32.totalorder %s34, 0
      %p240 = por %p238, %p239
      %p241 = scmp.ne.s32.totalorder %s229, %s230
      %p242 = scmp.eq.s32.totalorder %s35, 1
      %p243 = por %p241, %p242
      %p245 = scmp.ne.s32.totalorder %s230, %s244
      %p246 = scmp.eq.s32.totalorder %s35, 0
      %p247 = por %p245, %p246
      %s249 = sadd.s32 %s248, 1
      %p252 = scmp.eq.s32.totalorder %s29, 1
      %p253 = scmp.ne.s32.totalorder %s248, %s250
      %p254 = scmp.eq.s32.totalorder %s29, 0
      %p255 = por %p253, %p254
      %p256 = scmp.ne.s32.totalorder %s248, %s250
      %p257 = scmp.eq.s32.totalorder %s34, 1
      %p258 = por %p256, %p257
      %p259 = scmp.ne.s32.totalorder %s250, %s251
      %p260 = scmp.eq.s32.totalorder %s34, 0
      %p261 = por %p259, %p260
      %p262 = scmp.ne.s32.totalorder %s250, %s251
      %p263 = scmp.eq.s32.totalorder %s35, 1
      %p264 = por %p262, %p263
      %p266 = scmp.ne.s32.totalorder %s251, %s265
      %p267 = scmp.eq.s32.totalorder %s35, 0
      %p268 = por %p266, %p267
      %s269 = ssub.s32 %s36, %s48
      %s270 = ssub.s32 %s37, %s44
      %s271 = sor.u32 %s269, %s270
      %p272 = scmp.eq.s32.totalorder %s271, 0
      %s274 = sadd.s32 %s273, 1
      %s275 = scalar_select %p272, %s273, %s274
      %p278 = pneg %p272
      %p279 = scmp.eq.s32.totalorder %s29, 1
      %p280 = por %p278, %p279
      %p281 = scmp.ne.s32.totalorder %s273, %s276
      %p282 = scmp.eq.s32.totalorder %s29, 0
      %p283 = por %p281, %p282
      %p284 = scmp.ne.s32.totalorder %s273, %s276
      %p285 = scmp.eq.s32.totalorder %s34, 1
      %p286 = por %p284, %p285
      %p287 = scmp.ne.s32.totalorder %s276, %s277
      %p288 = scmp.eq.s32.totalorder %s34, 0
      %p289 = por %p287, %p288
      %p290 = scmp.ne.s32.totalorder %s276, %s277
      %p291 = scmp.eq.s32.totalorder %s35, 1
      %p292 = por %p290, %p291
      %p294 = scmp.ne.s32.totalorder %s277, %s293
      %p295 = scmp.eq.s32.totalorder %s35, 0
      %p296 = por %p294, %p295
      %p297 = scmp.le.s32.totalorder 1, %s29
      %p298 = scmp.lt.s32.totalorder %s29, 3
      %p299 = pnand %p297, %p298
      %p300 = pneg %p299
      // Predicated region
      $region9: #{encoder_forward.4} parent=5 // pred_check
        _
      $region10: #{encoder_forward.4} parent=5 // pred_check_branch
        %302 = sbr.rel (%p299) target = $region12
      $region11: #{encoder_forward.4} parent=5 // pred_region
        %s303 = ssub.s32 %s29, 1
        // Predicated region
        $region13: #{encoder_forward.4} parent=11 // pred_check
          %p304 = pneg %p114
        $region14: #{encoder_forward.4} parent=11 // pred_check_branch
          %306 = sbr.rel (%p304) target = $region16
        $region15: #{encoder_forward.4} parent=11 // pred_region
          %s308 = ssub.s32 16, 16
          %309 = vsyncadd [#allocation8], %s308
          %s311 = sshll.u32 [#allocation9], 4
          %s312 = int_to_ptr.vmem [resolvable:$true] %s311
          %314 = dma.hbm_to_vmem [thread:$0]  %s2, 16, %s312, [#allocation8]
        $region16: #{encoder_forward.4} parent=11 // pred_fallthru
          _
        // Predicated region
        $region17: #{encoder_forward.4} parent=11 // pred_check
          %p315 = pneg %p135
        $region18: #{encoder_forward.4} parent=11 // pred_check_branch
          %317 = sbr.rel (%p315) target = $region20
        $region19: #{encoder_forward.4} parent=11 // pred_region
          %s319 = ssub.s32 16, 16
          %320 = vsyncadd [#allocation11], %s319
          %s322 = sshll.u32 [#allocation10], 4
          %s323 = int_to_ptr.vmem [resolvable:$true] %s322
          %325 = dma.hbm_to_vmem [thread:$0]  %s3, 16, %s323, [#allocation11]
        $region20: #{encoder_forward.4} parent=11 // pred_fallthru
          _
        // Predicated region
        $region21: #{encoder_forward.4} parent=11 // pred_check
          %p326 = pneg %p156
        $region22: #{encoder_forward.4} parent=11 // pred_check_branch
          %328 = sbr.rel (%p326) target = $region24
        $region23: #{encoder_forward.4} parent=11 // pred_region
          %s330 = ssub.s32 256, 256
          %331 = vsyncadd [#allocation11], %s330
          %s332 = sshll.u32 [#allocation12], 4
          %s333 = int_to_ptr.vmem [resolvable:$true] %s332
          %338 = dma.hbm_to_vmem [thread:$0]  %s4, 256, %s333, [#allocation11], 64, 64, 4
        $region24: #{encoder_forward.4} parent=11 // pred_fallthru
          _
        // Predicated region
        $region25: #{encoder_forward.4} parent=11 // pred_check
          %p339 = pneg %p177
        $region26: #{encoder_forward.4} parent=11 // pred_check_branch
          %341 = sbr.rel (%p339) target = $region28
        $region27: #{encoder_forward.4} parent=11 // pred_region
          %s343 = ssub.s32 16, 16
          %344 = vsyncadd [#allocation14], %s343
          %s346 = sshll.u32 [#allocation13], 4
          %s347 = int_to_ptr.vmem [resolvable:$true] %s346
          %349 = dma.hbm_to_vmem [thread:$0]  %s5, 16, %s347, [#allocation14]
        $region28: #{encoder_forward.4} parent=11 // pred_fallthru
          _
        // Predicated region
        $region29: #{encoder_forward.4} parent=11 // pred_check
          %p350 = pneg %p198
        $region30: #{encoder_forward.4} parent=11 // pred_check_branch
          %352 = sbr.rel (%p350) target = $region32
        $region31: #{encoder_forward.4} parent=11 // pred_region
          %s354 = ssub.s32 256, 256
          %355 = vsyncadd [#allocation14], %s354
          %s356 = sshll.u32 [#allocation15], 4
          %s357 = int_to_ptr.vmem [resolvable:$true] %s356
          %362 = dma.hbm_to_vmem [thread:$0]  %s6, 256, %s357, [#allocation14], 64, 64, 4
        $region32: #{encoder_forward.4} parent=11 // pred_fallthru
          _
        // Predicated region
        $region33: #{encoder_forward.4} parent=11 // pred_check
          %p363 = pneg %p219
        $region34: #{encoder_forward.4} parent=11 // pred_check_branch
          %365 = sbr.rel (%p363) target = $region36
        $region35: #{encoder_forward.4} parent=11 // pred_region
          %s367 = ssub.s32 16, 16
          %368 = vsyncadd [#allocation17], %s367
          %s370 = sshll.u32 [#allocation16], 4
          %s371 = int_to_ptr.vmem [resolvable:$true] %s370
          %373 = dma.hbm_to_vmem [thread:$0]  %s7, 16, %s371, [#allocation17]
        $region36: #{encoder_forward.4} parent=11 // pred_fallthru
          _
        // Predicated region
        $region37: #{encoder_forward.4} parent=11 // pred_check
          %p374 = pneg %p240
        $region38: #{encoder_forward.4} parent=11 // pred_check_branch
          %376 = sbr.rel (%p374) target = $region40
        $region39: #{encoder_forward.4} parent=11 // pred_region
          %s378 = ssub.s32 256, 256
          %379 = vsyncadd [#allocation17], %s378
          %s380 = sshll.u32 [#allocation18], 4
          %s381 = int_to_ptr.vmem [resolvable:$true] %s380
          %386 = dma.hbm_to_vmem [thread:$0]  %s8, 256, %s381, [#allocation17], 64, 64, 4
        $region40: #{encoder_forward.4} parent=11 // pred_fallthru
          _
        // Predicated region
        $region41: #{encoder_forward.4} parent=11 // pred_check
          %p387 = pneg %p261
        $region42: #{encoder_forward.4} parent=11 // pred_check_branch
          %389 = sbr.rel (%p387) target = $region44
        $region43: #{encoder_forward.4} parent=11 // pred_region
          %s391 = ssub.s32 16, 16
          %392 = vsyncadd [#allocation20], %s391
          %s394 = sshll.u32 [#allocation19], 4
          %s395 = int_to_ptr.vmem [resolvable:$true] %s394
          %397 = dma.hbm_to_vmem [thread:$0]  %s9, 16, %s395, [#allocation20]
        $region44: #{encoder_forward.4} parent=11 // pred_fallthru
          _
      $region12: #{encoder_forward.4} parent=5 // pred_fallthru
        _
      %p398 = scmp.lt.s32.totalorder %s29, 2
      // Predicated region
      $region45: #{encoder_forward.4} parent=5 // pred_check
        %p399 = pneg %p398
      $region46: #{encoder_forward.4} parent=5 // pred_check_branch
        %401 = sbr.rel (%p399) target = $region48
      $region47: #{encoder_forward.4} parent=5 // pred_region
        // Predicated region
        $region49: #{encoder_forward.4} parent=47 // pred_check
          %p402 = pneg %p61
        $region50: #{encoder_forward.4} parent=47 // pred_check_branch
          %404 = sbr.rel (%p402) target = $region52
        $region51: #{encoder_forward.4} parent=47 // pred_region
          %s405 = sand.u32 %s51, 1
          %s406 = scalar_lea.sflag [#allocation5], %s405
          %s407 = sand.u32 %s51, 1
          %s408 = smul.addr %s407, 8
          %s409 = scalar_lea.vmem [#allocation4], %s408
          %s411 = ssub.s32 128, 128
          %412 = vsyncadd %s406, %s411
          %s413 = smul.addr %s36, 128
          %s414 = scalar_lea.hbm %s0, %s413
          %s416 = sshll.u32 %s409, 4
          %s417 = int_to_ptr.vmem [resolvable:$true] %s416
          %419 = dma.hbm_to_vmem [thread:$0]  %s414, 128, %s417, %s406
        $region52: #{encoder_forward.4} parent=47 // pred_fallthru
          _
        // Predicated region
        $region53: #{encoder_forward.4} parent=47 // pred_check
          %p420 = pneg %p87
        $region54: #{encoder_forward.4} parent=47 // pred_check_branch
          %422 = sbr.rel (%p420) target = $region56
        $region55: #{encoder_forward.4} parent=47 // pred_region
          %s423 = sand.u32 %s29, 1
          %s424 = scalar_lea.sflag [#allocation8], %s423
          %s425 = sand.u32 %s77, 1
          %s426 = scalar_lea.vmem [#allocation7], %s425
          %s428 = ssub.s32 16, 16
          %429 = vsyncadd %s424, %s428
          %s430 = smul.addr %s36, 16
          %s431 = scalar_lea.hbm %s1, %s430
          %s433 = sshll.u32 %s426, 4
          %s434 = int_to_ptr.vmem [resolvable:$true] %s433
          %436 = dma.hbm_to_vmem [thread:$0]  %s431, 16, %s434, %s424
        $region56: #{encoder_forward.4} parent=47 // pred_fallthru
          _
      $region48: #{encoder_forward.4} parent=5 // pred_fallthru
        _
      %p437 = scmp.le.s32.totalorder 1, %s29
      %p438 = scmp.lt.s32.totalorder %s29, 3
      %p439 = pnand %p437, %p438
      %p440 = pneg %p439
      // Predicated region
      $region57: #{encoder_forward.4} parent=5 // pred_check
        _
      $region58: #{encoder_forward.4} parent=5 // pred_check_branch
        %442 = sbr.rel (%p439) target = $region60
      $region59: #{encoder_forward.4} parent=5 // pred_region
        %s443 = ssub.s32 %s29, 1
        %s444 = sand.u32 %s54, 1
        %s445 = scalar_lea.sflag [#allocation5], %s444
        %s446 = sand.u32 %s54, 1
        %s447 = smul.addr %s446, 8
        %s448 = scalar_lea.vmem [#allocation4], %s447
        // Predicated region
        $region61: #{encoder_forward.4} parent=59 // pred_check
          %p449 = pneg %p67
        $region62: #{encoder_forward.4} parent=59 // pred_check_branch
          %451 = sbr.rel (%p449) target = $region64
        $region63: #{encoder_forward.4} parent=59 // pred_region
          %452 = dma.done %s445, 128
        $region64: #{encoder_forward.4} parent=59 // pred_fallthru
          _
        %s453 = sand.u32 %s34, 1
        %s454 = scalar_lea.sflag [#allocation8], %s453
        %s455 = sand.u32 %s80, 1
        %s456 = scalar_lea.vmem [#allocation7], %s455
        // Predicated region
        $region65: #{encoder_forward.4} parent=59 // pred_check
          %p457 = pneg %p93
        $region66: #{encoder_forward.4} parent=59 // pred_check_branch
          %459 = sbr.rel (%p457) target = $region68
        $region67: #{encoder_forward.4} parent=59 // pred_region
          %460 = dma.done %s454, 16
        $region68: #{encoder_forward.4} parent=59 // pred_fallthru
          _
        // Predicated region
        $region69: #{encoder_forward.4} parent=59 // pred_check
          %p461 = pneg %p114
        $region70: #{encoder_forward.4} parent=59 // pred_check_branch
          %463 = sbr.rel (%p461) target = $region72
        $region71: #{encoder_forward.4} parent=59 // pred_region
          %464 = dma.done [#allocation8], 16
        $region72: #{encoder_forward.4} parent=59 // pred_fallthru
          _
        // Predicated region
        $region73: #{encoder_forward.4} parent=59 // pred_check
          %p465 = pneg %p135
        $region74: #{encoder_forward.4} parent=59 // pred_check_branch
          %467 = sbr.rel (%p465) target = $region76
        $region75: #{encoder_forward.4} parent=59 // pred_region
          %468 = dma.done [#allocation11], 16
        $region76: #{encoder_forward.4} parent=59 // pred_fallthru
          _
        // Predicated region
        $region77: #{encoder_forward.4} parent=59 // pred_check
          %p469 = pneg %p156
        $region78: #{encoder_forward.4} parent=59 // pred_check_branch
          %471 = sbr.rel (%p469) target = $region80
        $region79: #{encoder_forward.4} parent=59 // pred_region
          %472 = dma.done [#allocation11], 256
        $region80: #{encoder_forward.4} parent=59 // pred_fallthru
          _
        // Predicated region
        $region81: #{encoder_forward.4} parent=59 // pred_check
          %p473 = pneg %p177
        $region82: #{encoder_forward.4} parent=59 // pred_check_branch
          %475 = sbr.rel (%p473) target = $region84
        $region83: #{encoder_forward.4} parent=59 // pred_region
          %476 = dma.done [#allocation14], 16
        $region84: #{encoder_forward.4} parent=59 // pred_fallthru
          _
        // Predicated region
        $region85: #{encoder_forward.4} parent=59 // pred_check
          %p477 = pneg %p198
        $region86: #{encoder_forward.4} parent=59 // pred_check_branch
          %479 = sbr.rel (%p477) target = $region88
        $region87: #{encoder_forward.4} parent=59 // pred_region
          %480 = dma.done [#allocation14], 256
        $region88: #{encoder_forward.4} parent=59 // pred_fallthru
          _
        // Predicated region
        $region89: #{encoder_forward.4} parent=59 // pred_check
          %p481 = pneg %p219
        $region90: #{encoder_forward.4} parent=59 // pred_check_branch
          %483 = sbr.rel (%p481) target = $region92
        $region91: #{encoder_forward.4} parent=59 // pred_region
          %484 = dma.done [#allocation17], 16
        $region92: #{encoder_forward.4} parent=59 // pred_fallthru
          _
        // Predicated region
        $region93: #{encoder_forward.4} parent=59 // pred_check
          %p485 = pneg %p240
        $region94: #{encoder_forward.4} parent=59 // pred_check_branch
          %487 = sbr.rel (%p485) target = $region96
        $region95: #{encoder_forward.4} parent=59 // pred_region
          %488 = dma.done [#allocation17], 256
        $region96: #{encoder_forward.4} parent=59 // pred_fallthru
          _
        // Predicated region
        $region97: #{encoder_forward.4} parent=59 // pred_check
          %p489 = pneg %p261
        $region98: #{encoder_forward.4} parent=59 // pred_check_branch
          %491 = sbr.rel (%p489) target = $region100
        $region99: #{encoder_forward.4} parent=59 // pred_region
          %492 = dma.done [#allocation20], 16
        $region100: #{encoder_forward.4} parent=59 // pred_fallthru
          _
        %s493 = sand.u32 %s54, 1
        %s494 = scalar_lea.sflag [#allocation5], %s493
        %s495 = sand.u32 %s54, 1
        %s496 = smul.addr %s495, 8
        %s497 = scalar_lea.vmem [#allocation4], %s496
        %p498 = pneg %p67
        %p499 = pneg %p64
        %s500 = sand.u32 %s34, 1
        %s501 = scalar_lea.sflag [#allocation8], %s500
        %s502 = sand.u32 %s80, 1
        %s503 = scalar_lea.vmem [#allocation7], %s502
        %p504 = pneg %p93
        %p505 = pneg %p90
        %p506 = pneg %p114
        %p507 = pneg %p111
        %p508 = pneg %p135
        %p509 = pneg %p132
        %p510 = pneg %p156
        %p511 = pneg %p153
        %p512 = pneg %p177
        %p513 = pneg %p174
        %p514 = pneg %p198
        %p515 = pneg %p195
        %p516 = pneg %p219
        %p517 = pneg %p216
        %p518 = pneg %p240
        %p519 = pneg %p237
        %p520 = pneg %p261
        %p521 = pneg %p258
        %p522 = pneg %p289
        %p523 = pneg %p286
        %s524 = sand.u32 %s276, 1
        %s525 = scalar_lea.sflag [#allocation6], %s524
        %s526 = sand.u32 %s276, 1
        %s527 = smul.addr %s526, 8
        %s528 = scalar_lea.vmem [#allocation21], %s527
        %p530 = scmp.eq.s32.totalorder %s39, 0
        // Predicated region
        $region101: #{encoder_forward.4} parent=59 // pred_check
          %p531 = pneg %p530
        $region102: #{encoder_forward.4} parent=59 // pred_check_branch
          %533 = sbr.rel (%p531) target = $region104
        $region103: #{encoder_forward.4} parent=59 // pred_region
          %v534 = vld [vmem:[%s448] sm:$0xff]
          %v535 = vld [vmem:[#allocation9] sm:$0x1]
          %v536 = vld [vmem:[#allocation10] sm:$0x1]
          %vm537 = vcmask 261120
          %v538 = vsel %vm537, %v534, 0.0
          %539 = vadd.xlane.f32.xlu0 %v538
          %v540 = vpop.xlane.xlu0 %539
          %v541 = vrcp.pop 32.0
          %v542 = vmul.f32 %v540, %v541
          %v543 = vsub.f32 %v534, %v542
          %v544 = vmul.f32 %v543, %v543
          %v545 = vsel %vm537, %v544, 0.0
          %546 = vadd.xlane.f32.xlu0 %v545
          %v547 = vpop.xlane.xlu0 %546
          %v548 = vmul.f32 %v547, 0.032258064
          %v549 = vrsqrt.pop %v548
          %v550 = vmul.f32 %v548, %v549
          %vm551 = vcmp.eq.f32.partialorder %v548, inf
          %v552 = vsel %vm551, %v548, %v550
          %vm553 = vcmp.eq.f32.partialorder %v548, 0.0
          %v554 = vand.u32 %v548, 2147483648
          %v555 = vsel %vm553, %v554, %v552
          %v556 = vadd.f32 %v555, 1e-06
          %v558 = vlaneseq
          %v559 = vshrl.u32 %v558, 7
          %v560 = vsub.s32 0, %v559
          %v561 = vrot.slane %v535, %v560
          %v563 = vmul.f32 %v561, %v543
          %v564 = vrcp.pop %v556
          %v565 = vmul.f32 %v563, %v564
          %v567 = vlaneseq
          %v568 = vshrl.u32 %v567, 7
          %v569 = vsub.s32 0, %v568
          %v570 = vrot.slane %v536, %v569
          %v572 = vadd.f32 %v565, %v570
          %v573 = vpack.c.bf16 %v572, %v572
          %v574 = vld [vmem:[#allocation15] sm:$0xf]
          %v575 = vld [vmem:[#allocation15 + $0x4] sm:$0xf]
          %v576 = vld [vmem:[#allocation15 + $0x8] sm:$0xf]
          %v577 = vld [vmem:[#allocation15 + $0xc] sm:$0xf]
          %v578 = vld [vmem:[#allocation16] sm:$0x1]
          %v580 = vlaneseq
          %v581 = vshrl.u32 %v580, 7
          %v582 = vsub.s32 0, %v581
          %v583 = vrot.slane %v578, %v582
          %v589 = vunpack.c.l.b16 %v574
          %v590 = vunpack.c.l.b16 %v575
          %v591 = vunpack.c.l.b16 %v576
          %v592 = vunpack.c.l.b16 %v577
          %v593 = vpack.c.b16 %v590, %v589
          %v594 = vpack.c.b16 %v592, %v591
          %v598 = vsel %vm537, %v573, 0
          %600 = vmatprep.subr.bf16.mxu0 0
          %601 = vmatpush1.bf16.msra.mxu0 %v593
          %602 = vmatprep.subr.bf16.mxu0 0
          %603 = vmatpush1.bf16.msra.mxu0 %v594
          %604 = vmatprep.subr.bf16.mxu0 0
          %605 = vmatpush1.bf16.msra.mxu0 0
          %606 = vmatprep.subr.bf16.mxu0 0
          %607 = vmatpush1.bf16.msra.mxu0 0
          %608 = vmatprep.subr.bf16.mxu0 0
          %609 = vmatpush1.bf16.msra.mxu0 0
          %610 = vmatprep.subr.bf16.mxu0 0
          %611 = vmatpush1.bf16.msra.mxu0 0
          %612 = vmatprep.subr.bf16.mxu0 0
          %613 = vmatpush1.bf16.msra.mxu0 0
          %614 = vmatprep.subr.bf16.mxu0 0
          %615 = vmatpush1.bf16.msra.mxu0 0
          %616 = vmatprep.subr.bf16.mxu0 0
          %617 = vmatpush1.bf16.msra.mxu0 0
          %618 = vmatprep.subr.bf16.mxu0 0
          %619 = vmatpush1.bf16.msra.mxu0 0
          %620 = vmatprep.subr.bf16.mxu0 0
          %621 = vmatpush1.bf16.msra.mxu0 0
          %622 = vmatprep.subr.bf16.mxu0 0
          %623 = vmatpush1.bf16.msra.mxu0 0
          %624 = vmatprep.subr.bf16.mxu0 0
          %625 = vmatpush1.bf16.msra.mxu0 0
          %626 = vmatprep.subr.bf16.mxu0 0
          %627 = vmatpush1.bf16.msra.mxu0 0
          %628 = vmatprep.subr.bf16.mxu0 0
          %629 = vmatpush1.bf16.msra.mxu0 0
          %630 = vmatprep.subr.bf16.mxu0 0
          %631 = vmatpush1.bf16.msra.mxu0 0
          %632 = vmatprep.mubr.bf16.mxu0 0
          %633 = vmatmul.mubr.bf16.gmra.mrb[0].mxu0 %v598
          %v634 = vpop.f32.mrb[0].mxu0
          %v635 = vadd.f32 %v583, %v634
          %v636 = vpop.f32.mrb[0].mxu0
          %v637 = vpop.f32.mrb[0].mxu0
          %v638 = vpop.f32.mrb[0].mxu0
          %639 = vdwg.mxu0
          %v640 = vpack.c.bf16 %v635, %v635
          %vm641 = vcmask 519168
          %642 = vst.msk [vmem:[#allocation2] sm:$0xf] %vm641, %v640
        $region104: #{encoder_forward.4} parent=59 // pred_fallthru
          _
        %s643 = smul.u32 %s39, 8
        %s644 = scalar_lea.vmem %s448, %s643 [#allocation4]
        %v645 = vld [vmem:[%s644] sm:$0xff]
        %v646 = vld [vmem:[#allocation9] sm:$0x1]
        %v647 = vld [vmem:[#allocation10] sm:$0x1]
        %vm648 = vcmask 261120
        %v649 = vsel %vm648, %v645, 0.0
        %650 = vadd.xlane.f32.xlu0 %v649
        %v651 = vpop.xlane.xlu0 %650
        %v652 = vrcp.pop 32.0
        %v653 = vmul.f32 %v651, %v652
        %v654 = vsub.f32 %v645, %v653
        %v655 = vmul.f32 %v654, %v654
        %v656 = vsel %vm648, %v655, 0.0
        %657 = vadd.xlane.f32.xlu0 %v656
        %v658 = vpop.xlane.xlu0 %657
        %v659 = vmul.f32 %v658, 0.032258064
        %v660 = vrsqrt.pop %v659
        %v661 = vmul.f32 %v659, %v660
        %vm662 = vcmp.eq.f32.partialorder %v659, inf
        %v663 = vsel %vm662, %v659, %v661
        %vm664 = vcmp.eq.f32.partialorder %v659, 0.0
        %v665 = vand.u32 %v659, 2147483648
        %v666 = vsel %vm664, %v665, %v663
        %v667 = vadd.f32 %v666, 1e-06
        %v669 = vlaneseq
        %v670 = vshrl.u32 %v669, 7
        %v671 = vsub.s32 0, %v670
        %v672 = vrot.slane %v646, %v671
        %v674 = vmul.f32 %v672, %v654
        %v675 = vrcp.pop %v667
        %v676 = vmul.f32 %v674, %v675
        %v678 = vlaneseq
        %v679 = vshrl.u32 %v678, 7
        %v680 = vsub.s32 0, %v679
        %v681 = vrot.slane %v647, %v680
        %v683 = vadd.f32 %v676, %v681
        %v684 = vpack.c.bf16 %v683, %v683
        %v685 = vld [vmem:[#allocation12] sm:$0xf]
        %v686 = vld [vmem:[#allocation12 + $0x4] sm:$0xf]
        %v687 = vld [vmem:[#allocation12 + $0x8] sm:$0xf]
        %v688 = vld [vmem:[#allocation12 + $0xc] sm:$0xf]
        %v689 = vld [vmem:[#allocation13] sm:$0x1]
        %v691 = vlaneseq
        %v692 = vshrl.u32 %v691, 7
        %v693 = vsub.s32 0, %v692
        %v694 = vrot.slane %v689, %v693
        %v700 = vunpack.c.l.b16 %v685
        %v701 = vunpack.c.l.b16 %v686
        %v702 = vunpack.c.l.b16 %v687
        %v703 = vunpack.c.l.b16 %v688
        %v704 = vpack.c.b16 %v701, %v700
        %v705 = vpack.c.b16 %v703, %v702
        %v709 = vsel %vm648, %v684, 0
        %711 = vmatprep.subr.bf16.mxu0 0
        %712 = vmatpush1.bf16.msra.mxu0 %v704
        %713 = vmatprep.subr.bf16.mxu0 0
        %714 = vmatpush1.bf16.msra.mxu0 %v705
        %715 = vmatprep.subr.bf16.mxu0 0
        %716 = vmatpush1.bf16.msra.mxu0 0
        %717 = vmatprep.subr.bf16.mxu0 0
        %718 = vmatpush1.bf16.msra.mxu0 0
        %719 = vmatprep.subr.bf16.mxu0 0
        %720 = vmatpush1.bf16.msra.mxu0 0
        %721 = vmatprep.subr.bf16.mxu0 0
        %722 = vmatpush1.bf16.msra.mxu0 0
        %723 = vmatprep.subr.bf16.mxu0 0
        %724 = vmatpush1.bf16.msra.mxu0 0
        %725 = vmatprep.subr.bf16.mxu0 0
        %726 = vmatpush1.bf16.msra.mxu0 0
        %727 = vmatprep.subr.bf16.mxu0 0
        %728 = vmatpush1.bf16.msra.mxu0 0
        %729 = vmatprep.subr.bf16.mxu0 0
        %730 = vmatpush1.bf16.msra.mxu0 0
        %731 = vmatprep.subr.bf16.mxu0 0
        %732 = vmatpush1.bf16.msra.mxu0 0
        %733 = vmatprep.subr.bf16.mxu0 0
        %734 = vmatpush1.bf16.msra.mxu0 0
        %735 = vmatprep.subr.bf16.mxu0 0
        %736 = vmatpush1.bf16.msra.mxu0 0
        %737 = vmatprep.subr.bf16.mxu0 0
        %738 = vmatpush1.bf16.msra.mxu0 0
        %739 = vmatprep.subr.bf16.mxu0 0
        %740 = vmatpush1.bf16.msra.mxu0 0
        %741 = vmatprep.subr.bf16.mxu0 0
        %742 = vmatpush1.bf16.msra.mxu0 0
        %743 = vmatprep.mubr.bf16.mxu0 0
        %744 = vmatmul.mubr.bf16.gmra.mrb[0].mxu0 %v709
        %v745 = vpop.f32.mrb[0].mxu0
        %v746 = vadd.f32 %v694, %v745
        %v747 = vpop.f32.mrb[0].mxu0
        %v748 = vpop.f32.mrb[0].mxu0
        %v749 = vpop.f32.mrb[0].mxu0
        %750 = vdwg.mxu0
        %v751 = vpack.c.bf16 %v746, %v746
        %v752 = vld [vmem:[%s456] sm:$0x1]
        %v753 = vld [vmem:[#allocation2] sm:$0xf]
        %v755 = vlaneseq
        %v756 = vshrl.u32 %v755, 7
        %v757 = vsub.s32 0, %v756
        %v758 = vrot.slane %v752, %v757
        %vm760 = vcmask 64512
        %v762 = vsel %vm760, %v751, 0
        %v765 = vsel %vm760, %v753, 0
        %767 = vmatprep.subr.bf16.mxu0 0
        %768 = vmatpush1.bf16.xpose.msra.mxu0 %v765
        %769 = vmatprep.subr.bf16.mxu0 0
        %770 = vmatpush1.bf16.xpose.msra.mxu0 0
        %771 = vmatprep.subr.bf16.mxu0 0
        %772 = vmatpush1.bf16.xpose.msra.mxu0 0
        %773 = vmatprep.subr.bf16.mxu0 0
        %774 = vmatpush1.bf16.xpose.msra.mxu0 0
        %775 = vmatprep.subr.bf16.mxu0 0
        %776 = vmatpush1.bf16.xpose.msra.mxu0 0
        %777 = vmatprep.subr.bf16.mxu0 0
        %778 = vmatpush1.bf16.xpose.msra.mxu0 0
        %779 = vmatprep.subr.bf16.mxu0 0
        %780 = vmatpush1.bf16.xpose.msra.mxu0 0
        %781 = vmatprep.subr.bf16.mxu0 0
        %782 = vmatpush1.bf16.xpose.msra.mxu0 0
        %783 = vmatprep.subr.bf16.mxu0 0
        %784 = vmatpush1.bf16.xpose.msra.mxu0 0
        %785 = vmatprep.subr.bf16.mxu0 0
        %786 = vmatpush1.bf16.xpose.msra.mxu0 0
        %787 = vmatprep.subr.bf16.mxu0 0
        %788 = vmatpush1.bf16.xpose.msra.mxu0 0
        %789 = vmatprep.subr.bf16.mxu0 0
        %790 = vmatpush1.bf16.xpose.msra.mxu0 0
        %791 = vmatprep.subr.bf16.mxu0 0
        %792 = vmatpush1.bf16.xpose.msra.mxu0 0
        %793 = vmatprep.subr.bf16.mxu0 0
        %794 = vmatpush1.bf16.xpose.msra.mxu0 0
        %795 = vmatprep.subr.bf16.mxu0 0
        %796 = vmatpush1.bf16.xpose.msra.mxu0 0
        %797 = vmatprep.subr.bf16.mxu0 0
        %798 = vmatpush1.bf16.xpose.msra.mxu0 0
        %799 = vmatprep.mubr.bf16.mxu0 0
        %800 = vmatmul.mubr.bf16.gmra.mrb[0].mxu0 %v762
        %v801 = vpop.f32.mrb[0].mxu0
        %v802 = vadd.f32 %v758, %v801
        %v803 = vpop.f32.mrb[0].mxu0
        %v804 = vpop.f32.mrb[0].mxu0
        %v805 = vpop.f32.mrb[0].mxu0
        %806 = vdwg.mxu0
        %v807 = vsel %vm760, %v802, -inf
        %808 = vmax.xlane.f32.xlu0 %v807
        %v809 = vpop.xlane.xlu0 %808
        %v810 = vsub.f32 %v802, %v809
        %v811 = vmul.f32 %v810, 1.442695
        %v812 = vpow.pop %v811
        %v813 = vsel %vm760, %v812, 0.0
        %814 = vadd.xlane.f32.xlu0 %v813
        %v815 = vpop.xlane.xlu0 %814
        %v816 = vrcp.pop %v815
        %v817 = vmul.f32 %v812, %v816
        %v818 = vpack.c.bf16 %v817, %v817
        %v820 = vunpack.c.l.b16 %v753
        %v821 = vpack.c.b16 %v820, %v820
        %822 = vrot.lane.b32.xlu0 %v821, 96
        %v823 = vpop.permute.xlu0 %822
        %v825 = vsel %vm760, %v818, 0
        %vm827 = vcmask 1043456
        %v829 = vsel %vm827, %v823, 0
        %831 = vmatprep.subr.bf16.mxu0 0
        %832 = vmatpush1.bf16.msra.mxu0 %v829
        %833 = vmatprep.subr.bf16.mxu0 0
        %834 = vmatpush1.bf16.msra.mxu0 0
        %835 = vmatprep.subr.bf16.mxu0 0
        %836 = vmatpush1.bf16.msra.mxu0 0
        %837 = vmatprep.subr.bf16.mxu0 0
        %838 = vmatpush1.bf16.msra.mxu0 0
        %839 = vmatprep.subr.bf16.mxu0 0
        %840 = vmatpush1.bf16.msra.mxu0 0
        %841 = vmatprep.subr.bf16.mxu0 0
        %842 = vmatpush1.bf16.msra.mxu0 0
        %843 = vmatprep.subr.bf16.mxu0 0
        %844 = vmatpush1.bf16.msra.mxu0 0
        %845 = vmatprep.subr.bf16.mxu0 0
        %846 = vmatpush1.bf16.msra.mxu0 0
        %847 = vmatprep.subr.bf16.mxu0 0
        %848 = vmatpush1.bf16.msra.mxu0 0
        %849 = vmatprep.subr.bf16.mxu0 0
        %850 = vmatpush1.bf16.msra.mxu0 0
        %851 = vmatprep.subr.bf16.mxu0 0
        %852 = vmatpush1.bf16.msra.mxu0 0
        %853 = vmatprep.subr.bf16.mxu0 0
        %854 = vmatpush1.bf16.msra.mxu0 0
        %855 = vmatprep.subr.bf16.mxu0 0
        %856 = vmatpush1.bf16.msra.mxu0 0
        %857 = vmatprep.subr.bf16.mxu0 0
        %858 = vmatpush1.bf16.msra.mxu0 0
        %859 = vmatprep.subr.bf16.mxu0 0
        %860 = vmatpush1.bf16.msra.mxu0 0
        %861 = vmatprep.subr.bf16.mxu0 0
        %862 = vmatpush1.bf16.msra.mxu0 0
        %863 = vmatprep.mubr.bf16.mxu0 0
        %864 = vmatmul.mubr.bf16.gmra.mrb[0].mxu0 %v825
        %v865 = vpop.f32.mrb[0].mxu0
        %v866 = vadd.f32 0.0, %v865
        %v867 = vpop.f32.mrb[0].mxu0
        %v868 = vpop.f32.mrb[0].mxu0
        %v869 = vpop.f32.mrb[0].mxu0
        %870 = vdwg.mxu0
        %871 = vst.msk [vmem:[#allocation3] sm:$0xff] %vm760, %v866
        %v872 = vld [vmem:[#allocation2] sm:$0xf]
        %874 = vrot.lane.b32.xlu0 %v751, 120
        %v875 = vpop.permute.xlu0 %874
        %v877 = vunpack.c.l.b16 %v872
        %v878 = vpack.c.b16 %v877, %v877
        %879 = vrot.lane.b32.xlu0 %v878, 120
        %v880 = vpop.permute.xlu0 %879
        %v882 = vsel %vm760, %v875, 0
        %v885 = vsel %vm760, %v880, 0
        %887 = vmatprep.subr.bf16.mxu0 0
        %888 = vmatpush1.bf16.xpose.msra.mxu0 %v885
        %889 = vmatprep.subr.bf16.mxu0 0
        %890 = vmatpush1.bf16.xpose.msra.mxu0 0
        %891 = vmatprep.subr.bf16.mxu0 0
        %892 = vmatpush1.bf16.xpose.msra.mxu0 0
        %893 = vmatprep.subr.bf16.mxu0 0
        %894 = vmatpush1.bf16.xpose.msra.mxu0 0
        %895 = vmatprep.subr.bf16.mxu0 0
        %896 = vmatpush1.bf16.xpose.msra.mxu0 0
        %897 = vmatprep.subr.bf16.mxu0 0
        %898 = vmatpush1.bf16.xpose.msra.mxu0 0
        %899 = vmatprep.subr.bf16.mxu0 0
        %900 = vmatpush1.bf16.xpose.msra.mxu0 0
        %901 = vmatprep.subr.bf16.mxu0 0
        %902 = vmatpush1.bf16.xpose.msra.mxu0 0
        %903 = vmatprep.subr.bf16.mxu0 0
        %904 = vmatpush1.bf16.xpose.msra.mxu0 0
        %905 = vmatprep.subr.bf16.mxu0 0
        %906 = vmatpush1.bf16.xpose.msra.mxu0 0
        %907 = vmatprep.subr.bf16.mxu0 0
        %908 = vmatpush1.bf16.xpose.msra.mxu0 0
        %909 = vmatprep.subr.bf16.mxu0 0
        %910 = vmatpush1.bf16.xpose.msra.mxu0 0
        %911 = vmatprep.subr.bf16.mxu0 0
        %912 = vmatpush1.bf16.xpose.msra.mxu0 0
        %913 = vmatprep.subr.bf16.mxu0 0
        %914 = vmatpush1.bf16.xpose.msra.mxu0 0
        %915 = vmatprep.subr.bf16.mxu0 0
        %916 = vmatpush1.bf16.xpose.msra.mxu0 0
        %917 = vmatprep.subr.bf16.mxu0 0
        %918 = vmatpush1.bf16.xpose.msra.mxu0 0
        %919 = vmatprep.mubr.bf16.mxu0 0
        %920 = vmatmul.mubr.bf16.gmra.mrb[0].mxu0 %v882
        %v921 = vpop.f32.mrb[0].mxu0
        %v922 = vadd.f32 %v758, %v921
        %v923 = vpop.f32.mrb[0].mxu0
        %v924 = vpop.f32.mrb[0].mxu0
        %v925 = vpop.f32.mrb[0].mxu0
        %926 = vdwg.mxu0
        %v927 = vsel %vm760, %v922, -inf
        %928 = vmax.xlane.f32.xlu0 %v927
        %v929 = vpop.xlane.xlu0 %928
        %v930 = vsub.f32 %v922, %v929
        %v931 = vmul.f32 %v930, 1.442695
        %v932 = vpow.pop %v931
        %v933 = vsel %vm760, %v932, 0.0
        %934 = vadd.xlane.f32.xlu0 %v933
        %v935 = vpop.xlane.xlu0 %934
        %v936 = vrcp.pop %v935
        %v937 = vmul.f32 %v932, %v936
        %v938 = vpack.c.bf16 %v937, %v937
        %939 = vrot.lane.b32.xlu0 %v878, 88
        %v940 = vpop.permute.xlu0 %939
        %v942 = vsel %vm760, %v938, 0
        %v945 = vsel %vm827, %v940, 0
        %947 = vmatprep.subr.bf16.mxu0 0
        %948 = vmatpush1.bf16.msra.mxu0 %v945
        %949 = vmatprep.subr.bf16.mxu0 0
        %950 = vmatpush1.bf16.msra.mxu0 0
        %951 = vmatprep.subr.bf16.mxu0 0
        %952 = vmatpush1.bf16.msra.mxu0 0
        %953 = vmatprep.subr.bf16.mxu0 0
        %954 = vmatpush1.bf16.msra.mxu0 0
        %955 = vmatprep.subr.bf16.mxu0 0
        %956 = vmatpush1.bf16.msra.mxu0 0
        %957 = vmatprep.subr.bf16.mxu0 0
        %958 = vmatpush1.bf16.msra.mxu0 0
        %959 = vmatprep.subr.bf16.mxu0 0
        %960 = vmatpush1.bf16.msra.mxu0 0
        %961 = vmatprep.subr.bf16.mxu0 0
        %962 = vmatpush1.bf16.msra.mxu0 0
        %963 = vmatprep.subr.bf16.mxu0 0
        %964 = vmatpush1.bf16.msra.mxu0 0
        %965 = vmatprep.subr.bf16.mxu0 0
        %966 = vmatpush1.bf16.msra.mxu0 0
        %967 = vmatprep.subr.bf16.mxu0 0
        %968 = vmatpush1.bf16.msra.mxu0 0
        %969 = vmatprep.subr.bf16.mxu0 0
        %970 = vmatpush1.bf16.msra.mxu0 0
        %971 = vmatprep.subr.bf16.mxu0 0
        %972 = vmatpush1.bf16.msra.mxu0 0
        %973 = vmatprep.subr.bf16.mxu0 0
        %974 = vmatpush1.bf16.msra.mxu0 0
        %975 = vmatprep.subr.bf16.mxu0 0
        %976 = vmatpush1.bf16.msra.mxu0 0
        %977 = vmatprep.subr.bf16.mxu0 0
        %978 = vmatpush1.bf16.msra.mxu0 0
        %979 = vmatprep.mubr.bf16.mxu0 0
        %980 = vmatmul.mubr.bf16.gmra.mrb[0].mxu0 %v942
        %v981 = vpop.f32.mrb[0].mxu0
        %v982 = vadd.f32 0.0, %v981
        %v983 = vpop.f32.mrb[0].mxu0
        %v984 = vpop.f32.mrb[0].mxu0
        %v985 = vpop.f32.mrb[0].mxu0
        %986 = vdwg.mxu0
        %988 = vrot.lane.b32.xlu0 %v982, 8
        %v989 = vpop.permute.xlu0 %988
        %vm991 = vcmask 130112
        %992 = vst.msk [vmem:[#allocation3] sm:$0xff] %vm991, %v989
        %v993 = vld [vmem:[#allocation2] sm:$0xf]
        %994 = vrot.lane.b32.xlu0 %v751, 112
        %v995 = vpop.permute.xlu0 %994
        %v997 = vunpack.c.l.b16 %v993
        %v998 = vpack.c.b16 %v997, %v997
        %999 = vrot.lane.b32.xlu0 %v998, 112
        %v1000 = vpop.permute.xlu0 %999
        %v1002 = vsel %vm760, %v995, 0
        %v1005 = vsel %vm760, %v1000, 0
        %1007 = vmatprep.subr.bf16.mxu0 0
        %1008 = vmatpush1.bf16.xpose.msra.mxu0 %v1005
        %1009 = vmatprep.subr.bf16.mxu0 0
        %1010 = vmatpush1.bf16.xpose.msra.mxu0 0
        %1011 = vmatprep.subr.bf16.mxu0 0
        %1012 = vmatpush1.bf16.xpose.msra.mxu0 0
        %1013 = vmatprep.subr.bf16.mxu0 0
        %1014 = vmatpush1.bf16.xpose.msra.mxu0 0
        %1015 = vmatprep.subr.bf16.mxu0 0
        %1016 = vmatpush1.bf16.xpose.msra.mxu0 0
        %1017 = vmatprep.subr.bf16.mxu0 0
        %1018 = vmatpush1.bf16.xpose.msra.mxu0 0
        %1019 = vmatprep.subr.bf16.mxu0 0
        %1020 = vmatpush1.bf16.xpose.msra.mxu0 0
        %1021 = vmatprep.subr.bf16.mxu0 0
        %1022 = vmatpush1.bf16.xpose.msra.mxu0 0
        %1023 = vmatprep.subr.bf16.mxu0 0
        %1024 = vmatpush1.bf16.xpose.msra.mxu0 0
        %1025 = vmatprep.subr.bf16.mxu0 0
        %1026 = vmatpush1.bf16.xpose.msra.mxu0 0
        %1027 = vmatprep.subr.bf16.mxu0 0
        %1028 = vmatpush1.bf16.xpose.msra.mxu0 0
        %1029 = vmatprep.subr.bf16.mxu0 0
        %1030 = vmatpush1.bf16.xpose.msra.mxu0 0
        %1031 = vmatprep.subr.bf16.mxu0 0
        %1032 = vmatpush1.bf16.xpose.msra.mxu0 0
        %1033 = vmatprep.subr.bf16.mxu0 0
        %1034 = vmatpush1.bf16.xpose.msra.mxu0 0
        %1035 = vmatprep.subr.bf16.mxu0 0
        %1036 = vmatpush1.bf16.xpose.msra.mxu0 0
        %1037 = vmatprep.subr.bf16.mxu0 0
        %1038 = vmatpush1.bf16.xpose.msra.mxu0 0
        %1039 = vmatprep.mubr.bf16.mxu0 0
        %1040 = vmatmul.mubr.bf16.gmra.mrb[0].mxu0 %v1002
        %v1041 = vpop.f32.mrb[0].mxu0
        %v1042 = vadd.f32 %v758, %v1041
        %v1043 = vpop.f32.mrb[0].mxu0
        %v1044 = vpop.f32.mrb[0].mxu0
        %v1045 = vpop.f32.mrb[0].mxu0
        %1046 = vdwg.mxu0
        %v1047 = vsel %vm760, %v1042, -inf
        %1048 = vmax.xlane.f32.xlu0 %v1047
        %v1049 = vpop.xlane.xlu0 %1048
        %v1050 = vsub.f32 %v1042, %v1049
        %v1051 = vmul.f32 %v1050, 1.442695
        %v1052 = vpow.pop %v1051
        %v1053 = vsel %vm760, %v1052, 0.0
        %1054 = vadd.xlane.f32.xlu0 %v1053
        %v1055 = vpop.xlane.xlu0 %1054
        %v1056 = vrcp.pop %v1055
        %v1057 = vmul.f32 %v1052, %v1056
        %v1058 = vpack.c.bf16 %v1057, %v1057
        %1059 = vrot.lane.b32.xlu0 %v998, 80
        %v1060 = vpop.permute.xlu0 %1059
        %v1062 = vsel %vm760, %v1058, 0
        %v1065 = vsel %vm827, %v1060, 0
        %1067 = vmatprep.subr.bf16.mxu0 0
        %1068 = vmatpush1.bf16.msra.mxu0 %v1065
        %1069 = vmatprep.subr.bf16.mxu0 0
        %1070 = vmatpush1.bf16.msra.mxu0 0
        %1071 = vmatprep.subr.bf16.mxu0 0
        %1072 = vmatpush1.bf16.msra.mxu0 0
        %1073 = vmatprep.subr.bf16.mxu0 0
        %1074 = vmatpush1.bf16.msra.mxu0 0
        %1075 = vmatprep.subr.bf16.mxu0 0
        %1076 = vmatpush1.bf16.msra.mxu0 0
        %1077 = vmatprep.subr.bf16.mxu0 0
        %1078 = vmatpush1.bf16.msra.mxu0 0
        %1079 = vmatprep.subr.bf16.mxu0 0
        %1080 = vmatpush1.bf16.msra.mxu0 0
        %1081 = vmatprep.subr.bf16.mxu0 0
        %1082 = vmatpush1.bf16.msra.mxu0 0
        %1083 = vmatprep.subr.bf16.mxu0 0
        %1084 = vmatpush1.bf16.msra.mxu0 0
        %1085 = vmatprep.subr.bf16.mxu0 0
        %1086 = vmatpush1.bf16.msra.mxu0 0
        %1087 = vmatprep.subr.bf16.mxu0 0
        %1088 = vmatpush1.bf16.msra.mxu0 0
        %1089 = vmatprep.subr.bf16.mxu0 0
        %1090 = vmatpush1.bf16.msra.mxu0 0
        %1091 = vmatprep.subr.bf16.mxu0 0
        %1092 = vmatpush1.bf16.msra.mxu0 0
        %1093 = vmatprep.subr.bf16.mxu0 0
        %1094 = vmatpush1.bf16.msra.mxu0 0
        %1095 = vmatprep.subr.bf16.mxu0 0
        %1096 = vmatpush1.bf16.msra.mxu0 0
        %1097 = vmatprep.subr.bf16.mxu0 0
        %1098 = vmatpush1.bf16.msra.mxu0 0
        %1099 = vmatprep.mubr.bf16.mxu0 0
        %1100 = vmatmul.mubr.bf16.gmra.mrb[0].mxu0 %v1062
        %v1101 = vpop.f32.mrb[0].mxu0
        %v1102 = vadd.f32 0.0, %v1101
        %v1103 = vpop.f32.mrb[0].mxu0
        %v1104 = vpop.f32.mrb[0].mxu0
        %v1105 = vpop.f32.mrb[0].mxu0
        %1106 = vdwg.mxu0
        %1108 = vrot.lane.b32.xlu0 %v1102, 16
        %v1109 = vpop.permute.xlu0 %1108
        %vm1111 = vcmask 195712
        %1112 = vst.msk [vmem:[#allocation3] sm:$0xff] %vm1111, %v1109
        %v1113 = vld [vmem:[#allocation2] sm:$0xf]
        %1114 = vrot.lane.b32.xlu0 %v751, 104
        %v1115 = vpop.permute.xlu0 %1114
        %v1117 = vunpack.c.l.b16 %v1113
        %v1118 = vpack.c.b16 %v1117, %v1117
        %1119 = vrot.lane.b32.xlu0 %v1118, 104
        %v1120 = vpop.permute.xlu0 %1119
        %v1122 = vsel %vm760, %v1115, 0
        %v1125 = vsel %vm760, %v1120, 0
        %1127 = vmatprep.subr.bf16.mxu0 0
        %1128 = vmatpush1.bf16.xpose.msra.mxu0 %v1125
        %1129 = vmatprep.subr.bf16.mxu0 0
        %1130 = vmatpush1.bf16.xpose.msra.mxu0 0
        %1131 = vmatprep.subr.bf16.mxu0 0
        %1132 = vmatpush1.bf16.xpose.msra.mxu0 0
        %1133 = vmatprep.subr.bf16.mxu0 0
        %1134 = vmatpush1.bf16.xpose.msra.mxu0 0
        %1135 = vmatprep.subr.bf16.mxu0 0
        %1136 = vmatpush1.bf16.xpose.msra.mxu0 0
        %1137 = vmatprep.subr.bf16.mxu0 0
        %1138 = vmatpush1.bf16.xpose.msra.mxu0 0
        %1139 = vmatprep.subr.bf16.mxu0 0
        %1140 = vmatpush1.bf16.xpose.msra.mxu0 0
        %1141 = vmatprep.subr.bf16.mxu0 0
        %1142 = vmatpush1.bf16.xpose.msra.mxu0 0
        %1143 = vmatprep.subr.bf16.mxu0 0
        %1144 = vmatpush1.bf16.xpose.msra.mxu0 0
        %1145 = vmatprep.subr.bf16.mxu0 0
        %1146 = vmatpush1.bf16.xpose.msra.mxu0 0
        %1147 = vmatprep.subr.bf16.mxu0 0
        %1148 = vmatpush1.bf16.xpose.msra.mxu0 0
        %1149 = vmatprep.subr.bf16.mxu0 0
        %1150 = vmatpush1.bf16.xpose.msra.mxu0 0
        %1151 = vmatprep.subr.bf16.mxu0 0
        %1152 = vmatpush1.bf16.xpose.msra.mxu0 0
        %1153 = vmatprep.subr.bf16.mxu0 0
        %1154 = vmatpush1.bf16.xpose.msra.mxu0 0
        %1155 = vmatprep.subr.bf16.mxu0 0
        %1156 = vmatpush1.bf16.xpose.msra.mxu0 0
        %1157 = vmatprep.subr.bf16.mxu0 0
        %1158 = vmatpush1.bf16.xpose.msra.mxu0 0
        %1159 = vmatprep.mubr.bf16.mxu0 0
        %1160 = vmatmul.mubr.bf16.gmra.mrb[0].mxu0 %v1122
        %v1161 = vpop.f32.mrb[0].mxu0
        %v1162 = vadd.f32 %v758, %v1161
        %v1163 = vpop.f32.mrb[0].mxu0
        %v1164 = vpop.f32.mrb[0].mxu0
        %v1165 = vpop.f32.mrb[0].mxu0
        %1166 = vdwg.mxu0
        %v1167 = vsel %vm760, %v1162, -inf
        %1168 = vmax.xlane.f32.xlu0 %v1167
        %v1169 = vpop.xlane.xlu0 %1168
        %v1170 = vsub.f32 %v1162, %v1169
        %v1171 = vmul.f32 %v1170, 1.442695
        %v1172 = vpow.pop %v1171
        %v1173 = vsel %vm760, %v1172, 0.0
        %1174 = vadd.xlane.f32.xlu0 %v1173
        %v1175 = vpop.xlane.xlu0 %1174
        %v1176 = vrcp.pop %v1175
        %v1177 = vmul.f32 %v1172, %v1176
        %v1178 = vpack.c.bf16 %v1177, %v1177
        %1179 = vrot.lane.b32.xlu0 %v1118, 72
        %v1180 = vpop.permute.xlu0 %1179
        %v1182 = vsel %vm760, %v1178, 0
        %v1185 = vsel %vm827, %v1180, 0
        %1187 = vmatprep.subr.bf16.mxu0 0
        %1188 = vmatpush1.bf16.msra.mxu0 %v1185
        %1189 = vmatprep.subr.bf16.mxu0 0
        %1190 = vmatpush1.bf16.msra.mxu0 0
        %1191 = vmatprep.subr.bf16.mxu0 0
        %1192 = vmatpush1.bf16.msra.mxu0 0
        %1193 = vmatprep.subr.bf16.mxu0 0
        %1194 = vmatpush1.bf16.msra.mxu0 0
        %1195 = vmatprep.subr.bf16.mxu0 0
        %1196 = vmatpush1.bf16.msra.mxu0 0
        %1197 = vmatprep.subr.bf16.mxu0 0
        %1198 = vmatpush1.bf16.msra.mxu0 0
        %1199 = vmatprep.subr.bf16.mxu0 0
        %1200 = vmatpush1.bf16.msra.mxu0 0
        %1201 = vmatprep.subr.bf16.mxu0 0
        %1202 = vmatpush1.bf16.msra.mxu0 0
        %1203 = vmatprep.subr.bf16.mxu0 0
        %1204 = vmatpush1.bf16.msra.mxu0 0
        %1205 = vmatprep.subr.bf16.mxu0 0
        %1206 = vmatpush1.bf16.msra.mxu0 0
        %1207 = vmatprep.subr.bf16.mxu0 0
        %1208 = vmatpush1.bf16.msra.mxu0 0
        %1209 = vmatprep.subr.bf16.mxu0 0
        %1210 = vmatpush1.bf16.msra.mxu0 0
        %1211 = vmatprep.subr.bf16.mxu0 0
        %1212 = vmatpush1.bf16.msra.mxu0 0
        %1213 = vmatprep.subr.bf16.mxu0 0
        %1214 = vmatpush1.bf16.msra.mxu0 0
        %1215 = vmatprep.subr.bf16.mxu0 0
        %1216 = vmatpush1.bf16.msra.mxu0 0
        %1217 = vmatprep.subr.bf16.mxu0 0
        %1218 = vmatpush1.bf16.msra.mxu0 0
        %1219 = vmatprep.mubr.bf16.mxu0 0
        %1220 = vmatmul.mubr.bf16.gmra.mrb[0].mxu0 %v1182
        %v1221 = vpop.f32.mrb[0].mxu0
        %v1222 = vadd.f32 0.0, %v1221
        %v1223 = vpop.f32.mrb[0].mxu0
        %v1224 = vpop.f32.mrb[0].mxu0
        %v1225 = vpop.f32.mrb[0].mxu0
        %1226 = vdwg.mxu0
        %1228 = vrot.lane.b32.xlu0 %v1222, 24
        %v1229 = vpop.permute.xlu0 %1228
        %vm1231 = vcmask 261312
        %1232 = vst.msk [vmem:[#allocation3] sm:$0xff] %vm1231, %v1229
        %v1233 = vld [vmem:[#allocation3] sm:$0xff]
        %v1234 = vpack.c.bf16 %v1233, %v1233
        %v1235 = vld [vmem:[#allocation18] sm:$0xf]
        %v1236 = vld [vmem:[#allocation18 + $0x4] sm:$0xf]
        %v1237 = vld [vmem:[#allocation18 + $0x8] sm:$0xf]
        %v1238 = vld [vmem:[#allocation18 + $0xc] sm:$0xf]
        %v1239 = vld [vmem:[#allocation19] sm:$0x1]
        %v1241 = vlaneseq
        %v1242 = vshrl.u32 %v1241, 7
        %v1243 = vsub.s32 0, %v1242
        %v1244 = vrot.slane %v1239, %v1243
        %v1250 = vunpack.c.l.b16 %v1235
        %v1251 = vunpack.c.l.b16 %v1236
        %v1252 = vunpack.c.l.b16 %v1237
        %v1253 = vunpack.c.l.b16 %v1238
        %v1254 = vpack.c.b16 %v1251, %v1250
        %v1255 = vpack.c.b16 %v1253, %v1252
        %v1259 = vsel %vm648, %v1234, 0
        %1261 = vmatprep.subr.bf16.mxu0 0
        %1262 = vmatpush1.bf16.msra.mxu0 %v1254
        %1263 = vmatprep.subr.bf16.mxu0 0
        %1264 = vmatpush1.bf16.msra.mxu0 %v1255
        %1265 = vmatprep.subr.bf16.mxu0 0
        %1266 = vmatpush1.bf16.msra.mxu0 0
        %1267 = vmatprep.subr.bf16.mxu0 0
        %1268 = vmatpush1.bf16.msra.mxu0 0
        %1269 = vmatprep.subr.bf16.mxu0 0
        %1270 = vmatpush1.bf16.msra.mxu0 0
        %1271 = vmatprep.subr.bf16.mxu0 0
        %1272 = vmatpush1.bf16.msra.mxu0 0
        %1273 = vmatprep.subr.bf16.mxu0 0
        %1274 = vmatpush1.bf16.msra.mxu0 0
        %1275 = vmatprep.subr.bf16.mxu0 0
        %1276 = vmatpush1.bf16.msra.mxu0 0
        %1277 = vmatprep.subr.bf16.mxu0 0
        %1278 = vmatpush1.bf16.msra.mxu0 0
        %1279 = vmatprep.subr.bf16.mxu0 0
        %1280 = vmatpush1.bf16.msra.mxu0 0
        %1281 = vmatprep.subr.bf16.mxu0 0
        %1282 = vmatpush1.bf16.msra.mxu0 0
        %1283 = vmatprep.subr.bf16.mxu0 0
        %1284 = vmatpush1.bf16.msra.mxu0 0
        %1285 = vmatprep.subr.bf16.mxu0 0
        %1286 = vmatpush1.bf16.msra.mxu0 0
        %1287 = vmatprep.subr.bf16.mxu0 0
        %1288 = vmatpush1.bf16.msra.mxu0 0
        %1289 = vmatprep.subr.bf16.mxu0 0
        %1290 = vmatpush1.bf16.msra.mxu0 0
        %1291 = vmatprep.subr.bf16.mxu0 0
        %1292 = vmatpush1.bf16.msra.mxu0 0
        %1293 = vmatprep.mubr.bf16.mxu0 0
        %1294 = vmatmul.mubr.bf16.gmra.mrb[0].mxu0 %v1259
        %v1295 = vpop.f32.mrb[0].mxu0
        %v1296 = vadd.f32 %v1244, %v1295
        %v1297 = vpop.f32.mrb[0].mxu0
        %v1298 = vpop.f32.mrb[0].mxu0
        %v1299 = vpop.f32.mrb[0].mxu0
        %1300 = vdwg.mxu0
        %v1301 = vadd.f32 %v645, %v1296
        %1302 = vst.msk [vmem:[%s528] sm:$0xff] %vm648, %v1301
        %s1303 = sand.u32 %s276, 1
        %s1304 = scalar_lea.sflag [#allocation6], %s1303
        %s1305 = sand.u32 %s276, 1
        %s1306 = smul.addr %s1305, 8
        %s1307 = scalar_lea.vmem [#allocation21], %s1306
        // Predicated region
        $region105: #{encoder_forward.4} parent=59 // pred_check
          %p1308 = pneg %p286
        $region106: #{encoder_forward.4} parent=59 // pred_check_branch
          %1310 = sbr.rel (%p1308) target = $region108
        $region107: #{encoder_forward.4} parent=59 // pred_region
          %s1312 = ssub.s32 128, 128
          %1313 = vsyncadd %s1304, %s1312
          %s1314 = sadd.s32 %s39, %s38
          %s1315 = smul.addr %s1314, 128
          %s1316 = scalar_lea.hbm %s10, %s1315
          %s1318 = sshll.u32 %s1307, 4
          %s1319 = int_to_ptr.vmem [resolvable:$true] %s1318
          %1321 = dma.vmem_to_hbm [thread:$0]  %s1319, 128, %s1316, %s1304
        $region108: #{encoder_forward.4} parent=59 // pred_fallthru
          _
      $region60: #{encoder_forward.4} parent=5 // pred_fallthru
        _
      %p1322 = scmp.le.s32.totalorder 2, %s29
      // Predicated region
      $region109: #{encoder_forward.4} parent=5 // pred_check
        %p1323 = pneg %p1322
      $region110: #{encoder_forward.4} parent=5 // pred_check_branch
        %1325 = sbr.rel (%p1323) target = $region112
      $region111: #{encoder_forward.4} parent=5 // pred_region
        %s1326 = ssub.s32 %s29, 2
        // Predicated region
        $region113: #{encoder_forward.4} parent=111 // pred_check
          %p1327 = pneg %p292
        $region114: #{encoder_forward.4} parent=111 // pred_check_branch
          %1329 = sbr.rel (%p1327) target = $region116
        $region115: #{encoder_forward.4} parent=111 // pred_region
          %s1330 = sand.u32 %s277, 1
          %s1331 = scalar_lea.sflag [#allocation6], %s1330
          %s1332 = sand.u32 %s277, 1
          %s1333 = smul.addr %s1332, 8
          %s1334 = scalar_lea.vmem [#allocation21], %s1333
          %1335 = dma.done %s1331, 128
        $region116: #{encoder_forward.4} parent=111 // pred_fallthru
          _
      $region112: #{encoder_forward.4} parent=5 // pred_fallthru
        _
    $region6: #{encoder_forward.4} parent=1 // loop_footer
      %s33 = sadd.s32 1, %s29
    $region7: #{encoder_forward.4} parent=1 // loop_footer_branch
      %28 = sbr.rel target = $region3
    $region8: #{encoder_forward.4} parent=1 // loop_exit
      _
    %1336 = vsyncpa [#allocation5], 1
    %s1337 = scalar_lea.sflag [#allocation5], 1
    %1338 = vsyncpa %s1337, 1
    %1339 = vsyncpa [#allocation8], 1
    %s1340 = scalar_lea.sflag [#allocation8], 1
    %1341 = vsyncpa %s1340, 1
    %1342 = vsyncpa [#allocation11], 1
    %1343 = vsyncpa [#allocation14], 1
    %1344 = vsyncpa [#allocation17], 1
    %1345 = vsyncpa [#allocation20], 1
    %1346 = vsyncpa [#allocation6], 1
    %s1347 = scalar_lea.sflag [#allocation6], 1
    %1348 = vsyncpa %s1347, 1

</llo_original>
